<compile_context>
chip_gen: v7x
topology: tpu7x:2x2x1
jax: 0.10.0
libtpu: 0.0.40
codegen_flags: <defaults>
</compile_context>

<pallas_src>
import functools

import jax
import jax.numpy as jnp
from jax import lax
from jax.experimental import pallas as pl
from jax.experimental.pallas import tpu as pltpu

D = 512          # embed dim (hard-coded `dim = 512` in preLoss.forward)
DH = D // 2      # attention hidden dim
K = 7            # n_embeds == n_head == num samples
KP = 8           # head dim padded to a sublane multiple (extra head sliced off)
VH_PAD = 128     # var-head hidden dim padded 64 -> 128 (zero-padded, math-identity)


# ---------------------------------------------------------------------------
# Kernel 1: fused (video+text) PIE-net + mean/var heads + gaussian "sampling"
# grid = (branch, batch_tile); one batch tile (bt samples) per step.
# ---------------------------------------------------------------------------
def _pie_prob_kernel(tok_ref, pooled_ref, eps_ref,
                     w1_ref, w2_ref,
                     fc_w_ref, fc_b_ref,
                     ln_g_ref, ln_b_ref,
                     fc1_w_ref, fc1_b_ref,
                     m1_w_ref, m1_b_ref, m2_w_ref, m2_b_ref, m3_w_ref, m3_b_ref,
                     v1_w_ref, v1_b_ref, v2_w_ref, v2_b_ref,
                     emb_ref, sig_ref):
    f32 = jnp.float32
    bf16 = jnp.bfloat16
    bt, L = tok_ref.shape[1], tok_ref.shape[2]

    x = tok_ref[0]                          # (bt, L, D)  bf16 (streamed as bf16)
    pooled = pooled_ref[0]                  # (bt, 1, D)  f32
    eps = eps_ref[0]                        # (bt, KP, D) f32

    # --- MultiHeadSelfAttention(n_head=K, d_in=D, d_hidden=DH), no mask --------------------
    x2 = x.reshape(bt * L, D)               # one big matmul over all tokens of the tile
    h = jnp.tanh(jnp.dot(x2, w1_ref[0], preferred_element_type=f32))            # (bt*L, DH)
    logits = jnp.dot(h.astype(bf16), w2_ref[0], preferred_element_type=f32)     # (bt*L, KP)
    logits = logits.reshape(bt, L, KP)
    logits = logits - jnp.max(logits, axis=1, keepdims=True)                    # softmax over seq
    e = jnp.exp(logits)
    attn = e / jnp.sum(e, axis=1, keepdims=True)                                # (bt, L, KP)
    # NOTE: fine at small L; for realistic L (>=128) restructure to a lane-dense contraction.
    residual = jnp.einsum('blk,bld->bkd', attn.astype(bf16), x,
                          preferred_element_type=f32)                           # (bt, KP, D)

    # --- PIENet: sigmoid(fc(residual)) residual, eps*pooled, LayerNorm, fc1 -----------------
    r2 = residual.reshape(bt * KP, D)
    r2 = jax.nn.sigmoid(jnp.dot(r2.astype(bf16), fc_w_ref[0],
                                preferred_element_type=f32) + fc_b_ref[0])
    out = (eps * pooled).reshape(bt * KP, D)                                     # eps * pooled
    y = out + r2
    mu = jnp.mean(y, axis=-1, keepdims=True)                                     # LayerNorm (f32)
    var = jnp.mean((y - mu) ** 2, axis=-1, keepdims=True)
    y = (y - mu) * lax.rsqrt(var + 1e-5) * ln_g_ref[0] + ln_b_ref[0]
    out = jnp.dot(y.astype(bf16), fc1_w_ref[0], preferred_element_type=f32) + fc1_b_ref[0]

    # --- mean head FCN_head(512, [256, 256], 512) -------------------------------------------
    hm = jnp.maximum(jnp.dot(out.astype(bf16), m1_w_ref[0],
                             preferred_element_type=f32) + m1_b_ref[0], 0.0)
    hm = jnp.maximum(jnp.dot(hm.astype(bf16), m2_w_ref[0],
                             preferred_element_type=f32) + m2_b_ref[0], 0.0)
    feat_mean = jnp.dot(hm.astype(bf16), m3_w_ref[0],
                        preferred_element_type=f32) + m3_b_ref[0]

    # --- var head FCN_head(512, [64->128 padded], 512) + safe softplus ----------------------
    hv = jnp.maximum(jnp.dot(out.astype(bf16), v1_w_ref[0],
                             preferred_element_type=f32) + v1_b_ref[0], 0.0)
    fv = jnp.dot(hv.astype(bf16), v2_w_ref[0], preferred_element_type=f32) + v2_b_ref[0]
    feat_var = jnp.maximum(fv, 0.0) + jnp.log1p(jnp.exp(-jnp.abs(fv)))           # softplus

    # sample_gaussian_tensors: mu / logsigma.clamp(min=1e-10)
    emb = feat_mean / jnp.maximum(feat_var, 1e-10)

    emb_ref[0] = emb.reshape(bt, KP, D)
    sig_ref[0] = feat_var.reshape(bt, KP, D)


def fused_probabilistic_branches(video_pooled, video_tokens, eps_v,
                                 text_pooled, text_tokens, eps_t,
                                 params_v, params_t, bt_max=32,
                                 vmem_limit_bytes=32 * 1024 * 1024):
    """Runs both PIE branches in one pallas_call.  Returns (emb_v, sig_v, emb_t, sig_t)."""
    B, L, _ = video_tokens.shape
    bt = min(B, bt_max)
    nb = (B + bt - 1) // bt
    bp = nb * bt
    bf16 = jnp.bfloat16

    def pad_batch(a):
        if bp == B:
            return a
        return jnp.pad(a, ((0, bp - B),) + ((0, 0),) * (a.ndim - 1))

    def pad_heads(e):                         # (B, K, D) -> (B, KP, D)
        return jnp.pad(e, ((0, 0), (0, KP - K), (0, 0)))

    # tokens are only ever bf16 matmul operands -> stream them as bf16 (halves DMA/VMEM)
    tokens = jnp.stack([pad_batch(video_tokens.astype(bf16)),
                        pad_batch(text_tokens.astype(bf16))])                        # (2,bp,L,D)
    pooled = jnp.stack([pad_batch(video_pooled.reshape(B, 1, D)),
                        pad_batch(text_pooled.reshape(B, 1, D))])                    # (2,bp,1,D)
    eps = jnp.stack([pad_batch(pad_heads(eps_v)), pad_batch(pad_heads(eps_t))])      # (2,bp,KP,D)

    params = [jnp.stack([pv, pt]) for pv, pt in zip(params_v, params_t)]
    # pad attention head dim 7 -> 8 (zero column) so in-kernel reshapes stay sublane-aligned
    params[1] = jnp.pad(params[1], ((0, 0), (0, 0), (0, KP - K)))

    in_specs = [
        pl.BlockSpec((1, bt, L, D), lambda r, b: (r, b, 0, 0)),    # tokens (bf16)
        pl.BlockSpec((1, bt, 1, D), lambda r, b: (r, b, 0, 0)),    # pooled (f32)
        pl.BlockSpec((1, bt, KP, D), lambda r, b: (r, b, 0, 0)),   # eps    (f32)
    ] + [pl.BlockSpec((1,) + p.shape[1:], lambda r, b: (r, 0, 0))  # params: depend on branch only
         for p in params]
    out_specs = [pl.BlockSpec((1, bt, KP, D), lambda r, b: (r, b, 0, 0))] * 2
    out_shape = [jax.ShapeDtypeStruct((2, bp, KP, D), jnp.float32)] * 2

    emb, sig = pl.pallas_call(
        _pie_prob_kernel,
        grid=(2, nb),                     # branch outermost: weights DMA'd once per branch
        in_specs=in_specs,
        out_specs=out_specs,
        out_shape=out_shape,
        compiler_params=pltpu.CompilerParams(
            dimension_semantics=("parallel", "parallel"),
            vmem_limit_bytes=vmem_limit_bytes),
    )(tokens, pooled, eps, *params)

    emb = emb[:, :B, :K]                  # drop padded batch rows and the padded 8th head
    sig = sig[:, :B, :K]
    return emb[0], sig[0], emb[1], sig[1]


# ---------------------------------------------------------------------------
# Kernel 2: MSE (vib) loss + both MIL-NCE losses, tiled over rows of the
# (7B x 7B) similarity matrices; bf16 V/T enter once, mask from precomputed
# int32 group ids.
# ---------------------------------------------------------------------------
def _loss_kernel(v_ref, t_ref, vfull_ref, tfull_ref, rowg_ref, colg_ref,
                 mse_ref, milv_ref, milt_ref, *, n_real):
    f32 = jnp.float32
    rt = v_ref.shape[0]
    npad = colg_ref.shape[1]
    row0 = pl.program_id(0) * rt

    v_blk = v_ref[...]                          # (rt, D) f32 row block
    t_blk = t_ref[...]

    # --- MSE partial (padded rows are zero in both V and T -> contribute 0) ----------------
    diff = v_blk - t_blk
    mse_ref[...] = jnp.broadcast_to(jnp.sum(diff * diff), (1, 1, 128))

    # --- block-diagonal positive mask kron(eye(B), ones(7,7)) from precomputed group ids ---
    col_ids = lax.broadcasted_iota(jnp.int32, (rt, npad), 1)
    col_valid = col_ids < n_real
    row_valid = (row0 + lax.broadcasted_iota(jnp.int32, (rt, 1), 0)) < n_real
    pos_mask = (rowg_ref[...] == colg_ref[...]) & col_valid & row_valid

    def mil_rows(a_blk, b_full_bf):
        # (rt, npad) slab of the similarity matrix, bf16 operands, f32 accumulate
        s = lax.dot_general(a_blk.astype(jnp.bfloat16), b_full_bf,
                            (((1,), (1,)), ((), ())),
                            preferred_element_type=f32)
        s_m = jnp.where(col_valid, s, -1e30)
        m = jnp.max(s_m, axis=1, keepdims=True)
        lse = m + jnp.log(jnp.sum(jnp.exp(s_m - m), axis=1, keepdims=True))
        pos = jnp.sum(jnp.where(pos_mask, s, 0.0), axis=1, keepdims=True)
        # -(log_softmax * mask).sum(1) / mask.sum(1)  with mask.sum(1) == 7
        row_loss = jnp.where(row_valid, lse - pos * (1.0 / K), 0.0)
        return jnp.sum(row_loss)

    milv_ref[...] = jnp.broadcast_to(mil_rows(v_blk, tfull_ref[...]), (1, 1, 128))
    milt_ref[...] = jnp.broadcast_to(mil_rows(t_blk, vfull_ref[...]), (1, 1, 128))


def loss_call(emb_v, emb_t, row_tile=256, vmem_limit_bytes=32 * 1024 * 1024):
    """emb_v, emb_t: (B, K, D) -> (vib_loss, MIL_loss) scalars."""
    b, k, d = emb_v.shape
    n = b * k
    npad = ((n + 127) // 128) * 128
    v = jnp.pad(emb_v.reshape(n, d), ((0, npad - n), (0, 0)))
    t = jnp.pad(emb_t.reshape(n, d), ((0, npad - n), (0, 0)))
    v_bf = v.astype(jnp.bfloat16)                 # matmul RHS, DMA'd once (constant index_map)
    t_bf = t.astype(jnp.bfloat16)
    grp = jnp.arange(npad, dtype=jnp.int32) // K  # group ids computed once outside the kernel
    row_grp = grp.reshape(npad, 1)
    col_grp = grp.reshape(1, npad)

    rt = min(row_tile, npad)
    if npad % rt:
        rt = 128
    nr = npad // rt

    kernel = functools.partial(_loss_kernel, n_real=n)
    mse_p, milv_p, milt_p = pl.pallas_call(
        kernel,
        grid=(nr,),
        in_specs=[pl.BlockSpec((rt, d), lambda r: (r, 0)),        # V row block (f32)
                  pl.BlockSpec((rt, d), lambda r: (r, 0)),        # T row block (f32)
                  pl.BlockSpec((npad, d), lambda r: (0, 0)),      # V full (bf16)
                  pl.BlockSpec((npad, d), lambda r: (0, 0)),      # T full (bf16)
                  pl.BlockSpec((rt, 1), lambda r: (r, 0)),        # row group ids (i32)
                  pl.BlockSpec((1, npad), lambda r: (0, 0))],     # col group ids (i32)
        out_specs=[pl.BlockSpec((1, 1, 128), lambda r: (r, 0, 0))] * 3,
        out_shape=[jax.ShapeDtypeStruct((nr, 1, 128), jnp.float32)] * 3,
        compiler_params=pltpu.CompilerParams(
            dimension_semantics=("parallel",),
            vmem_limit_bytes=vmem_limit_bytes),
    )(v, t, v_bf, t_bf, row_grp, col_grp)

    mse = jnp.sum(mse_p[:, 0, 0]) / (n * d)
    mil = (jnp.sum(milv_p[:, 0, 0]) + jnp.sum(milt_p[:, 0, 0])) / (2.0 * n)
    return mse, mil


# ---------------------------------------------------------------------------
# Deterministic parameter construction (synthetic; mirrors module __init__ shapes).
# Weights stored (in, out) so kernels compute x @ W (== torch x @ W^T); weights bf16,
# biases / LayerNorm params f32.  Var head zero-padded 64 -> 128 (math-identity).
# ---------------------------------------------------------------------------
def _glorot(key, shape):
    fan_in, fan_out = shape
    lim = (6.0 / (fan_in + fan_out)) ** 0.5
    return jax.random.uniform(key, shape, jnp.float32, -lim, lim)


def init_branch_params(key):
    ks = jax.random.split(key, 9)
    bf = lambda a: a.astype(jnp.bfloat16)
    z = lambda n: jnp.zeros((1, n), jnp.float32)
    v1w = bf(jnp.pad(_glorot(ks[7], (D, 64)), ((0, 0), (0, VH_PAD - 64))))
    v2w = bf(jnp.pad(_glorot(ks[8], (64, D)), ((0, VH_PAD - 64), (0, 0))))
    return [
        bf(_glorot(ks[0], (D, DH))),               # attention w_1 (no bias)
        bf(_glorot(ks[1], (DH, K))),               # attention w_2 (no bias)
        bf(_glorot(ks[2], (D, D))), z(D),          # PIENet fc (bias 0)
        jnp.ones((1, D), jnp.float32), z(D),       # LayerNorm gamma / beta
        bf(_glorot(ks[3], (D, D))), z(D),          # PIENet fc1
        bf(_glorot(ks[4], (D, 256))), z(256),      # mean head L0
        bf(_glorot(ks[5], (256, 256))), z(256),    # mean head L1
        bf(_glorot(ks[6], (256, D))), z(D),        # mean head L2
        v1w, z(VH_PAD),                            # var head L0 (padded to 128)
        v2w, z(D),                                 # var head L1
    ]


# ---------------------------------------------------------------------------
# Pure-JAX reference (mirrors the kernel's bf16-operand / f32-accumulate numerics)
# ---------------------------------------------------------------------------
def reference_branch(pooled, tokens, eps, params):
    (w1, w2, fc_w, fc_b, ln_g, ln_b, fc1_w, fc1_b,
     m1w, m1b, m2w, m2b, m3w, m3b, v1w, v1b, v2w, v2b) = params
    b, l, _ = tokens.shape
    k = eps.shape[1]

    def mm(a2, w):
        return jnp.dot(a2.astype(jnp.bfloat16), w.astype(jnp.bfloat16),
                       preferred_element_type=jnp.float32)

    h = jnp.tanh(mm(tokens.reshape(b * l, D), w1))
    attn = jax.nn.softmax(mm(h, w2).reshape(b, l, k), axis=1)
    residual = jnp.einsum('blk,bld->bkd', attn.astype(jnp.bfloat16),
                          tokens.astype(jnp.bfloat16),
                          preferred_element_type=jnp.float32)
    r2 = jax.nn.sigmoid(mm(residual.reshape(b * k, D), fc_w) + fc_b)
    out = (eps * pooled[:, None, :]).reshape(b * k, D)
    y = out + r2
    mu = jnp.mean(y, axis=-1, keepdims=True)
    var = jnp.mean((y - mu) ** 2, axis=-1, keepdims=True)
    y = (y - mu) * lax.rsqrt(var + 1e-5) * ln_g + ln_b
    out = mm(y, fc1_w) + fc1_b
    hm = jax.nn.relu(mm(out, m1w) + m1b)
    hm = jax.nn.relu(mm(hm, m2w) + m2b)
    feat_mean = mm(hm, m3w) + m3b
    hv = jax.nn.relu(mm(out, v1w) + v1b)
    fv = mm(hv, v2w) + v2b
    feat_var = jnp.maximum(fv, 0.0) + jnp.log1p(jnp.exp(-jnp.abs(fv)))
    emb = feat_mean / jnp.maximum(feat_var, 1e-10)
    return emb.reshape(b, k, D), feat_var.reshape(b, k, D)


def reference_losses(emb_v, emb_t):
    b, k, d = emb_v.shape
    n = b * k
    v = emb_v.reshape(n, d)
    t = emb_t.reshape(n, d)
    mse = jnp.mean((v - t) ** 2)
    mask = jnp.kron(jnp.eye(b, dtype=jnp.float32), jnp.ones((k, k), jnp.float32))

    def mil(a, bm):
        s = jnp.dot(a.astype(jnp.bfloat16), bm.astype(jnp.bfloat16).T,
                    preferred_element_type=jnp.float32)
        ls = jax.nn.log_softmax(s, axis=1)
        return jnp.mean(-(ls * mask).sum(1) / mask.sum(1))

    return mse, (mil(v, t) + mil(t, v)) / 2.0


# ---------------------------------------------------------------------------
if __name__ == "__main__":
    B, L = 2, 8
    key = jax.random.PRNGKey(0)
    k_in, k_pv, k_pt, k_ev, k_et = jax.random.split(key, 5)
    kv, kt, kvp, ktp = jax.random.split(k_in, 4)

    video_token = jax.random.normal(kv, (B, L, D), jnp.float32)
    text_token = jax.random.normal(kt, (B, L, D), jnp.float32)
    video_emb = jax.random.normal(kvp, (B, D), jnp.float32)
    text_emb = jax.random.normal(ktp, (B, D), jnp.float32)

    params_v = init_branch_params(k_pv)
    params_t = init_branch_params(k_pt)

    # PIENet's in-forward torch.randn eps, drawn deterministically and passed as input.
    eps_v = jax.random.normal(k_ev, (B, K, D), jnp.float32)
    eps_t = jax.random.normal(k_et, (B, K, D), jnp.float32)

    # Pallas forward
    emb_v, sig_v, emb_t, sig_t = fused_probabilistic_branches(
        video_emb, video_token, eps_v, text_emb, text_token, eps_t, params_v, params_t)
    vib_loss, mil_loss = loss_call(emb_v, emb_t)
    jax.block_until_ready((emb_v, sig_v, emb_t, sig_t, vib_loss, mil_loss))

    # --- correctness checks --------------------------------------------------------------
    # emb = feat_mean / clamp(feat_var, 1e-10) is ill-conditioned where feat_var is small, so
    # elementwise allclose on emb is not meaningful.  Check the well-conditioned quantities:
    # feat_var, the reconstructed feat_mean = emb * clamp(feat_var), and the loss kernel
    # against the reference loss formula evaluated on the SAME embeddings.
    ref_ev, ref_sv = reference_branch(video_emb, video_token, eps_v, params_v)
    ref_et, ref_st = reference_branch(text_emb, text_token, eps_t, params_t)

    def rel_err(a, b):
        a = a.astype(jnp.float32).ravel()
        b = b.astype(jnp.float32).ravel()
        return float(jnp.sqrt(jnp.sum((a - b) ** 2)) /
                     (jnp.sqrt(jnp.sum(b ** 2)) + 1e-12))

    clamp = lambda s: jnp.maximum(s, 1e-10)
    checks = {
        "finite": bool(jnp.all(jnp.isfinite(emb_v)) & jnp.all(jnp.isfinite(emb_t))
                       & jnp.all(jnp.isfinite(sig_v)) & jnp.all(jnp.isfinite(sig_t))
                       & jnp.isfinite(vib_loss) & jnp.isfinite(mil_loss)),
        "sig_v": rel_err(sig_v, ref_sv) < 5e-2,
        "sig_t": rel_err(sig_t, ref_st) < 5e-2,
        "mean_v": rel_err(emb_v * clamp(sig_v), ref_ev * clamp(ref_sv)) < 5e-2,
        "mean_t": rel_err(emb_t * clamp(sig_t), ref_et * clamp(ref_st)) < 5e-2,
    }

    # Loss kernel vs the reference loss formulas on the SAME (kernel-produced) embeddings.
    ref_vib, ref_mil = reference_losses(emb_v, emb_t)
    checks["vib"] = abs(float(vib_loss) - float(ref_vib)) <= 5e-3 + 2e-2 * abs(float(ref_vib))
    checks["mil"] = abs(float(mil_loss) - float(ref_mil)) <= 5e-3 + 2e-2 * abs(float(ref_mil))

    bad = [name for name, ok in checks.items() if not ok]
    if bad:
        raise AssertionError(
            f"failed checks {bad}: vib {float(vib_loss)} vs {float(ref_vib)}, "
            f"mil {float(mil_loss)} vs {float(ref_mil)}")
    print("KERNEL_OK")
</pallas_src>

<mosaic_0001>
module attributes {stable_mosaic.version = 11 : i64} {
  func.func @_pie_prob_kernel(%arg0: i32, %arg1: i32, %arg2: memref<1x2x8x512xbf16, #tpu.memory_space<vmem>>, %arg3: memref<1x2x1x512xf32, #tpu.memory_space<vmem>>, %arg4: memref<1x2x8x512xf32, #tpu.memory_space<vmem>>, %arg5: memref<1x512x256xbf16, #tpu.memory_space<vmem>>, %arg6: memref<1x256x8xbf16, #tpu.memory_space<vmem>>, %arg7: memref<1x512x512xbf16, #tpu.memory_space<vmem>>, %arg8: memref<1x1x512xf32, #tpu.memory_space<vmem>>, %arg9: memref<1x1x512xf32, #tpu.memory_space<vmem>>, %arg10: memref<1x1x512xf32, #tpu.memory_space<vmem>>, %arg11: memref<1x512x512xbf16, #tpu.memory_space<vmem>>, %arg12: memref<1x1x512xf32, #tpu.memory_space<vmem>>, %arg13: memref<1x512x256xbf16, #tpu.memory_space<vmem>>, %arg14: memref<1x1x256xf32, #tpu.memory_space<vmem>>, %arg15: memref<1x256x256xbf16, #tpu.memory_space<vmem>>, %arg16: memref<1x1x256xf32, #tpu.memory_space<vmem>>, %arg17: memref<1x256x512xbf16, #tpu.memory_space<vmem>>, %arg18: memref<1x1x512xf32, #tpu.memory_space<vmem>>, %arg19: memref<1x512x128xbf16, #tpu.memory_space<vmem>>, %arg20: memref<1x1x128xf32, #tpu.memory_space<vmem>>, %arg21: memref<1x128x512xbf16, #tpu.memory_space<vmem>>, %arg22: memref<1x1x512xf32, #tpu.memory_space<vmem>>, %arg23: memref<1x2x8x512xf32, #tpu.memory_space<vmem>>, %arg24: memref<1x2x8x512xf32, #tpu.memory_space<vmem>>) attributes {dimension_semantics = [#tpu.dimension_semantics<parallel>, #tpu.dimension_semantics<parallel>], iteration_bounds = array<i64: 2, 1>, scalar_prefetch = 0 : i64, scratch_operands = 0 : i64, tpu.core_type = #tpu.core_type<tc>, window_params = [{transform_indices = @transform_0, window_bounds = array<i64: 1, 2, 8, 512>}, {transform_indices = @transform_1, window_bounds = array<i64: 1, 2, 1, 512>}, {transform_indices = @transform_2, window_bounds = array<i64: 1, 2, 8, 512>}, {transform_indices = @transform_3, window_bounds = array<i64: 1, 512, 256>}, {transform_indices = @transform_4, window_bounds = array<i64: 1, 256, 8>}, {transform_indices = @transform_5, window_bounds = array<i64: 1, 512, 512>}, {transform_indices = @transform_6, window_bounds = array<i64: 1, 1, 512>}, {transform_indices = @transform_7, window_bounds = array<i64: 1, 1, 512>}, {transform_indices = @transform_8, window_bounds = array<i64: 1, 1, 512>}, {transform_indices = @transform_9, window_bounds = array<i64: 1, 512, 512>}, {transform_indices = @transform_10, window_bounds = array<i64: 1, 1, 512>}, {transform_indices = @transform_11, window_bounds = array<i64: 1, 512, 256>}, {transform_indices = @transform_12, window_bounds = array<i64: 1, 1, 256>}, {transform_indices = @transform_13, window_bounds = array<i64: 1, 256, 256>}, {transform_indices = @transform_14, window_bounds = array<i64: 1, 1, 256>}, {transform_indices = @transform_15, window_bounds = array<i64: 1, 256, 512>}, {transform_indices = @transform_16, window_bounds = array<i64: 1, 1, 512>}, {transform_indices = @transform_17, window_bounds = array<i64: 1, 512, 128>}, {transform_indices = @transform_18, window_bounds = array<i64: 1, 1, 128>}, {transform_indices = @transform_19, window_bounds = array<i64: 1, 128, 512>}, {transform_indices = @transform_20, window_bounds = array<i64: 1, 1, 512>}, {transform_indices = @transform_21, window_bounds = array<i64: 1, 2, 8, 512>}, {transform_indices = @transform_22, window_bounds = array<i64: 1, 2, 8, 512>}]} {
    %c0 = arith.constant 0 : index
    %c0_0 = arith.constant 0 : index
    %c0_1 = arith.constant 0 : index
    %c0_2 = arith.constant 0 : index
    %0 = vector.load %arg2[%c0, %c0_0, %c0_1, %c0_2] : memref<1x2x8x512xbf16, #tpu.memory_space<vmem>>, vector<1x2x8x512xbf16>
    %1 = vector.shape_cast %0 : vector<1x2x8x512xbf16> to vector<2x8x512xbf16>
    %c0_3 = arith.constant 0 : index
    %c0_4 = arith.constant 0 : index
    %c0_5 = arith.constant 0 : index
    %c0_6 = arith.constant 0 : index
    %2 = vector.load %arg3[%c0_3, %c0_4, %c0_5, %c0_6] : memref<1x2x1x512xf32, #tpu.memory_space<vmem>>, vector<1x2x1x512xf32>
    %3 = vector.shape_cast %2 : vector<1x2x1x512xf32> to vector<2x1x512xf32>
    %c0_7 = arith.constant 0 : index
    %c0_8 = arith.constant 0 : index
    %c0_9 = arith.constant 0 : index
    %c0_10 = arith.constant 0 : index
    %4 = vector.load %arg4[%c0_7, %c0_8, %c0_9, %c0_10] : memref<1x2x8x512xf32, #tpu.memory_space<vmem>>, vector<1x2x8x512xf32>
    %5 = vector.shape_cast %4 : vector<1x2x8x512xf32> to vector<2x8x512xf32>
    %6 = vector.shape_cast %1 : vector<2x8x512xbf16> to vector<16x512xbf16>
    %c0_11 = arith.constant 0 : index
    %c0_12 = arith.constant 0 : index
    %c0_13 = arith.constant 0 : index
    %7 = vector.load %arg5[%c0_11, %c0_12, %c0_13] : memref<1x512x256xbf16, #tpu.memory_space<vmem>>, vector<1x512x256xbf16>
    %8 = vector.shape_cast %7 : vector<1x512x256xbf16> to vector<512x256xbf16>
    %cst = arith.constant dense<0.000000e+00> : vector<16x256xf32>
    %9 = tpu.matmul %6, %8, %cst {dimension_numbers = #tpu.dot_dimension_numbers<[1], [0], [0], [1], [0, 0, 1, 1], [], []>} : vector<16x512xbf16>, vector<512x256xbf16>, vector<16x256xf32> -> vector<16x256xf32>
    %10 = math.tanh %9 : vector<16x256xf32>
    %11 = arith.truncf %10 : vector<16x256xf32> to vector<16x256xbf16>
    %c0_14 = arith.constant 0 : index
    %c0_15 = arith.constant 0 : index
    %c0_16 = arith.constant 0 : index
    %12 = vector.load %arg6[%c0_14, %c0_15, %c0_16] : memref<1x256x8xbf16, #tpu.memory_space<vmem>>, vector<1x256x8xbf16>
    %13 = vector.shape_cast %12 : vector<1x256x8xbf16> to vector<256x8xbf16>
    %cst_17 = arith.constant dense<0.000000e+00> : vector<16x8xf32>
    %14 = tpu.matmul %11, %13, %cst_17 {dimension_numbers = #tpu.dot_dimension_numbers<[1], [0], [0], [1], [0, 0, 1, 1], [], []>} : vector<16x256xbf16>, vector<256x8xbf16>, vector<16x8xf32> -> vector<16x8xf32>
    %15 = vector.shape_cast %14 : vector<16x8xf32> to vector<2x8x8xf32>
    %cst_18 = arith.constant dense<0xFF800000> : vector<2x8xf32>
    %16 = vector.multi_reduction <maximumf>, %15, %cst_18 [1] : vector<2x8x8xf32> to vector<2x8xf32>
    %17 = vector.shape_cast %16 : vector<2x8xf32> to vector<2x1x8xf32>
    %18 = vector.broadcast %17 : vector<2x1x8xf32> to vector<2x8x8xf32>
    %19 = arith.subf %15, %18 : vector<2x8x8xf32>
    %20 = math.exp %19 : vector<2x8x8xf32>
    %cst_19 = arith.constant dense<0.000000e+00> : vector<2x8xf32>
    %21 = vector.multi_reduction <add>, %20, %cst_19 [1] : vector<2x8x8xf32> to vector<2x8xf32>
    %22 = vector.shape_cast %21 : vector<2x8xf32> to vector<2x1x8xf32>
    %23 = vector.broadcast %22 : vector<2x1x8xf32> to vector<2x8x8xf32>
    %24 = arith.divf %20, %23 : vector<2x8x8xf32>
    %25 = arith.truncf %24 : vector<2x8x8xf32> to vector<2x8x8xbf16>
    "tpu.trace_start"() <{level = 10 : i32, message = "blk,bld->bkd"}> : () -> ()
    %cst_20 = arith.constant dense<0.000000e+00> : vector<2x8x512xf32>
    %26 = tpu.matmul %25, %1, %cst_20 {dimension_numbers = #tpu.dot_dimension_numbers<[1], [1], [2], [2], [0, 0, 0, 2, 1, 2], [0], [0]>} : vector<2x8x8xbf16>, vector<2x8x512xbf16>, vector<2x8x512xf32> -> vector<2x8x512xf32>
    "tpu.trace_stop"() : () -> ()
    %27 = vector.shape_cast %26 : vector<2x8x512xf32> to vector<16x512xf32>
    %28 = arith.truncf %27 : vector<16x512xf32> to vector<16x512xbf16>
    %c0_21 = arith.constant 0 : index
    %c0_22 = arith.constant 0 : index
    %c0_23 = arith.constant 0 : index
    %29 = vector.load %arg7[%c0_21, %c0_22, %c0_23] : memref<1x512x512xbf16, #tpu.memory_space<vmem>>, vector<1x512x512xbf16>
    %30 = vector.shape_cast %29 : vector<1x512x512xbf16> to vector<512x512xbf16>
    %cst_24 = arith.constant dense<0.000000e+00> : vector<16x512xf32>
    %31 = tpu.matmul %28, %30, %cst_24 {dimension_numbers = #tpu.dot_dimension_numbers<[1], [0], [0], [1], [0, 0, 1, 1], [], []>} : vector<16x512xbf16>, vector<512x512xbf16>, vector<16x512xf32> -> vector<16x512xf32>
    %c0_25 = arith.constant 0 : index
    %c0_26 = arith.constant 0 : index
    %c0_27 = arith.constant 0 : index
    %32 = vector.load %arg8[%c0_25, %c0_26, %c0_27] : memref<1x1x512xf32, #tpu.memory_space<vmem>>, vector<1x1x512xf32>
    %33 = vector.shape_cast %32 : vector<1x1x512xf32> to vector<1x512xf32>
    %34 = vector.broadcast %33 : vector<1x512xf32> to vector<16x512xf32>
    %35 = arith.addf %31, %34 : vector<16x512xf32>
    %36 = arith.negf %35 : vector<16x512xf32>
    %37 = math.exp %36 : vector<16x512xf32>
    %cst_28 = arith.constant 1.000000e+00 : f32
    %38 = vector.broadcast %cst_28 : f32 to vector<16x512xf32>
    %39 = arith.addf %38, %37 : vector<16x512xf32>
    %40 = arith.divf %38, %39 : vector<16x512xf32>
    %41 = vector.broadcast %3 : vector<2x1x512xf32> to vector<2x8x512xf32>
    %42 = arith.mulf %5, %41 : vector<2x8x512xf32>
    %43 = vector.shape_cast %42 : vector<2x8x512xf32> to vector<16x512xf32>
    %44 = arith.addf %43, %40 : vector<16x512xf32>
    %cst_29 = arith.constant dense<0.000000e+00> : vector<16xf32>
    %45 = vector.multi_reduction <add>, %44, %cst_29 [1] : vector<16x512xf32> to vector<16xf32>
    %46 = vector.shape_cast %45 : vector<16xf32> to vector<16x1xf32>
    %cst_30 = arith.constant 5.120000e+02 : f32
    %47 = vector.broadcast %cst_30 : f32 to vector<16x1xf32>
    %48 = arith.divf %46, %47 : vector<16x1xf32>
    %49 = vector.broadcast %48 : vector<16x1xf32> to vector<16x512xf32>
    %50 = arith.subf %44, %49 : vector<16x512xf32>
    %51 = arith.mulf %50, %50 : vector<16x512xf32>
    %cst_31 = arith.constant dense<0.000000e+00> : vector<16xf32>
    %52 = vector.multi_reduction <add>, %51, %cst_31 [1] : vector<16x512xf32> to vector<16xf32>
    %53 = vector.shape_cast %52 : vector<16xf32> to vector<16x1xf32>
    %cst_32 = arith.constant 5.120000e+02 : f32
    %54 = vector.broadcast %cst_32 : f32 to vector<16x1xf32>
    %55 = arith.divf %53, %54 : vector<16x1xf32>
    %56 = vector.broadcast %48 : vector<16x1xf32> to vector<16x512xf32>
    %57 = arith.subf %44, %56 : vector<16x512xf32>
    %cst_33 = arith.constant 9.99999974E-6 : f32
    %58 = vector.broadcast %cst_33 : f32 to vector<16x1xf32>
    %59 = arith.addf %55, %58 : vector<16x1xf32>
    %60 = math.rsqrt %59 : vector<16x1xf32>
    %61 = vector.broadcast %60 : vector<16x1xf32> to vector<16x512xf32>
    %62 = arith.mulf %57, %61 : vector<16x512xf32>
    %c0_34 = arith.constant 0 : index
    %c0_35 = arith.constant 0 : index
    %c0_36 = arith.constant 0 : index
    %63 = vector.load %arg9[%c0_34, %c0_35, %c0_36] : memref<1x1x512xf32, #tpu.memory_space<vmem>>, vector<1x1x512xf32>
    %64 = vector.shape_cast %63 : vector<1x1x512xf32> to vector<1x512xf32>
    %65 = vector.broadcast %64 : vector<1x512xf32> to vector<16x512xf32>
    %66 = arith.mulf %62, %65 : vector<16x512xf32>
    %c0_37 = arith.constant 0 : index
    %c0_38 = arith.constant 0 : index
    %c0_39 = arith.constant 0 : index
    %67 = vector.load %arg10[%c0_37, %c0_38, %c0_39] : memref<1x1x512xf32, #tpu.memory_space<vmem>>, vector<1x1x512xf32>
    %68 = vector.shape_cast %67 : vector<1x1x512xf32> to vector<1x512xf32>
    %69 = vector.broadcast %68 : vector<1x512xf32> to vector<16x512xf32>
    %70 = arith.addf %66, %69 : vector<16x512xf32>
    %71 = arith.truncf %70 : vector<16x512xf32> to vector<16x512xbf16>
    %c0_40 = arith.constant 0 : index
    %c0_41 = arith.constant 0 : index
    %c0_42 = arith.constant 0 : index
    %72 = vector.load %arg11[%c0_40, %c0_41, %c0_42] : memref<1x512x512xbf16, #tpu.memory_space<vmem>>, vector<1x512x512xbf16>
    %73 = vector.shape_cast %72 : vector<1x512x512xbf16> to vector<512x512xbf16>
    %cst_43 = arith.constant dense<0.000000e+00> : vector<16x512xf32>
    %74 = tpu.matmul %71, %73, %cst_43 {dimension_numbers = #tpu.dot_dimension_numbers<[1], [0], [0], [1], [0, 0, 1, 1], [], []>} : vector<16x512xbf16>, vector<512x512xbf16>, vector<16x512xf32> -> vector<16x512xf32>
    %c0_44 = arith.constant 0 : index
    %c0_45 = arith.constant 0 : index
    %c0_46 = arith.constant 0 : index
    %75 = vector.load %arg12[%c0_44, %c0_45, %c0_46] : memref<1x1x512xf32, #tpu.memory_space<vmem>>, vector<1x1x512xf32>
    %76 = vector.shape_cast %75 : vector<1x1x512xf32> to vector<1x512xf32>
    %77 = vector.broadcast %76 : vector<1x512xf32> to vector<16x512xf32>
    %78 = arith.addf %74, %77 : vector<16x512xf32>
    %79 = arith.truncf %78 : vector<16x512xf32> to vector<16x512xbf16>
    %c0_47 = arith.constant 0 : index
    %c0_48 = arith.constant 0 : index
    %c0_49 = arith.constant 0 : index
    %80 = vector.load %arg13[%c0_47, %c0_48, %c0_49] : memref<1x512x256xbf16, #tpu.memory_space<vmem>>, vector<1x512x256xbf16>
    %81 = vector.shape_cast %80 : vector<1x512x256xbf16> to vector<512x256xbf16>
    %cst_50 = arith.constant dense<0.000000e+00> : vector<16x256xf32>
    %82 = tpu.matmul %79, %81, %cst_50 {dimension_numbers = #tpu.dot_dimension_numbers<[1], [0], [0], [1], [0, 0, 1, 1], [], []>} : vector<16x512xbf16>, vector<512x256xbf16>, vector<16x256xf32> -> vector<16x256xf32>
    %c0_51 = arith.constant 0 : index
    %c0_52 = arith.constant 0 : index
    %c0_53 = arith.constant 0 : index
    %83 = vector.load %arg14[%c0_51, %c0_52, %c0_53] : memref<1x1x256xf32, #tpu.memory_space<vmem>>, vector<1x1x256xf32>
    %84 = vector.shape_cast %83 : vector<1x1x256xf32> to vector<1x256xf32>
    %85 = vector.broadcast %84 : vector<1x256xf32> to vector<16x256xf32>
    %86 = arith.addf %82, %85 : vector<16x256xf32>
    %cst_54 = arith.constant 0.000000e+00 : f32
    %87 = vector.broadcast %cst_54 : f32 to vector<16x256xf32>
    %88 = arith.maximumf %86, %87 : vector<16x256xf32>
    %89 = arith.truncf %88 : vector<16x256xf32> to vector<16x256xbf16>
    %c0_55 = arith.constant 0 : index
    %c0_56 = arith.constant 0 : index
    %c0_57 = arith.constant 0 : index
    %90 = vector.load %arg15[%c0_55, %c0_56, %c0_57] : memref<1x256x256xbf16, #tpu.memory_space<vmem>>, vector<1x256x256xbf16>
    %91 = vector.shape_cast %90 : vector<1x256x256xbf16> to vector<256x256xbf16>
    %cst_58 = arith.constant dense<0.000000e+00> : vector<16x256xf32>
    %92 = tpu.matmul %89, %91, %cst_58 {dimension_numbers = #tpu.dot_dimension_numbers<[1], [0], [0], [1], [0, 0, 1, 1], [], []>} : vector<16x256xbf16>, vector<256x256xbf16>, vector<16x256xf32> -> vector<16x256xf32>
    %c0_59 = arith.constant 0 : index
    %c0_60 = arith.constant 0 : index
    %c0_61 = arith.constant 0 : index
    %93 = vector.load %arg16[%c0_59, %c0_60, %c0_61] : memref<1x1x256xf32, #tpu.memory_space<vmem>>, vector<1x1x256xf32>
    %94 = vector.shape_cast %93 : vector<1x1x256xf32> to vector<1x256xf32>
    %95 = vector.broadcast %94 : vector<1x256xf32> to vector<16x256xf32>
    %96 = arith.addf %92, %95 : vector<16x256xf32>
    %cst_62 = arith.constant 0.000000e+00 : f32
    %97 = vector.broadcast %cst_62 : f32 to vector<16x256xf32>
    %98 = arith.maximumf %96, %97 : vector<16x256xf32>
    %99 = arith.truncf %98 : vector<16x256xf32> to vector<16x256xbf16>
    %c0_63 = arith.constant 0 : index
    %c0_64 = arith.constant 0 : index
    %c0_65 = arith.constant 0 : index
    %100 = vector.load %arg17[%c0_63, %c0_64, %c0_65] : memref<1x256x512xbf16, #tpu.memory_space<vmem>>, vector<1x256x512xbf16>
    %101 = vector.shape_cast %100 : vector<1x256x512xbf16> to vector<256x512xbf16>
    %cst_66 = arith.constant dense<0.000000e+00> : vector<16x512xf32>
    %102 = tpu.matmul %99, %101, %cst_66 {dimension_numbers = #tpu.dot_dimension_numbers<[1], [0], [0], [1], [0, 0, 1, 1], [], []>} : vector<16x256xbf16>, vector<256x512xbf16>, vector<16x512xf32> -> vector<16x512xf32>
    %c0_67 = arith.constant 0 : index
    %c0_68 = arith.constant 0 : index
    %c0_69 = arith.constant 0 : index
    %103 = vector.load %arg18[%c0_67, %c0_68, %c0_69] : memref<1x1x512xf32, #tpu.memory_space<vmem>>, vector<1x1x512xf32>
    %104 = vector.shape_cast %103 : vector<1x1x512xf32> to vector<1x512xf32>
    %105 = vector.broadcast %104 : vector<1x512xf32> to vector<16x512xf32>
    %106 = arith.addf %102, %105 : vector<16x512xf32>
    %107 = arith.truncf %78 : vector<16x512xf32> to vector<16x512xbf16>
    %c0_70 = arith.constant 0 : index
    %c0_71 = arith.constant 0 : index
    %c0_72 = arith.constant 0 : index
    %108 = vector.load %arg19[%c0_70, %c0_71, %c0_72] : memref<1x512x128xbf16, #tpu.memory_space<vmem>>, vector<1x512x128xbf16>
    %109 = vector.shape_cast %108 : vector<1x512x128xbf16> to vector<512x128xbf16>
    %cst_73 = arith.constant dense<0.000000e+00> : vector<16x128xf32>
    %110 = tpu.matmul %107, %109, %cst_73 {dimension_numbers = #tpu.dot_dimension_numbers<[1], [0], [0], [1], [0, 0, 1, 1], [], []>} : vector<16x512xbf16>, vector<512x128xbf16>, vector<16x128xf32> -> vector<16x128xf32>
    %c0_74 = arith.constant 0 : index
    %c0_75 = arith.constant 0 : index
    %c0_76 = arith.constant 0 : index
    %111 = vector.load %arg20[%c0_74, %c0_75, %c0_76] : memref<1x1x128xf32, #tpu.memory_space<vmem>>, vector<1x1x128xf32>
    %112 = vector.shape_cast %111 : vector<1x1x128xf32> to vector<1x128xf32>
    %113 = vector.broadcast %112 : vector<1x128xf32> to vector<16x128xf32>
    %114 = arith.addf %110, %113 : vector<16x128xf32>
    %cst_77 = arith.constant 0.000000e+00 : f32
    %115 = vector.broadcast %cst_77 : f32 to vector<16x128xf32>
    %116 = arith.maximumf %114, %115 : vector<16x128xf32>
    %117 = arith.truncf %116 : vector<16x128xf32> to vector<16x128xbf16>
    %c0_78 = arith.constant 0 : index
    %c0_79 = arith.constant 0 : index
    %c0_80 = arith.constant 0 : index
    %118 = vector.load %arg21[%c0_78, %c0_79, %c0_80] : memref<1x128x512xbf16, #tpu.memory_space<vmem>>, vector<1x128x512xbf16>
    %119 = vector.shape_cast %118 : vector<1x128x512xbf16> to vector<128x512xbf16>
    %cst_81 = arith.constant dense<0.000000e+00> : vector<16x512xf32>
    %120 = tpu.matmul %117, %119, %cst_81 {dimension_numbers = #tpu.dot_dimension_numbers<[1], [0], [0], [1], [0, 0, 1, 1], [], []>} : vector<16x128xbf16>, vector<128x512xbf16>, vector<16x512xf32> -> vector<16x512xf32>
    %c0_82 = arith.constant 0 : index
    %c0_83 = arith.constant 0 : index
    %c0_84 = arith.constant 0 : index
    %121 = vector.load %arg22[%c0_82, %c0_83, %c0_84] : memref<1x1x512xf32, #tpu.memory_space<vmem>>, vector<1x1x512xf32>
    %122 = vector.shape_cast %121 : vector<1x1x512xf32> to vector<1x512xf32>
    %123 = vector.broadcast %122 : vector<1x512xf32> to vector<16x512xf32>
    %124 = arith.addf %120, %123 : vector<16x512xf32>
    %cst_85 = arith.constant 0.000000e+00 : f32
    %125 = vector.broadcast %cst_85 : f32 to vector<16x512xf32>
    %126 = arith.maximumf %124, %125 : vector<16x512xf32>
    %127 = math.absf %124 : vector<16x512xf32>
    %cst_86 = arith.constant 0.000000e+00 : f32
    %128 = vector.broadcast %cst_86 : f32 to vector<16x512xf32>
    %129 = arith.subf %128, %127 : vector<16x512xf32>
    %130 = math.exp %129 : vector<16x512xf32>
    %131 = math.log1p %130 : vector<16x512xf32>
    %132 = arith.addf %126, %131 : vector<16x512xf32>
    %cst_87 = arith.constant 1.000000e-10 : f32
    %133 = vector.broadcast %cst_87 : f32 to vector<16x512xf32>
    %134 = arith.maximumf %132, %133 : vector<16x512xf32>
    %135 = arith.divf %106, %134 : vector<16x512xf32>
    %136 = vector.shape_cast %135 : vector<16x512xf32> to vector<2x8x512xf32>
    %c0_88 = arith.constant 0 : index
    %c0_89 = arith.constant 0 : index
    %c0_90 = arith.constant 0 : index
    %c0_91 = arith.constant 0 : index
    %137 = vector.load %arg23[%c0_88, %c0_89, %c0_90, %c0_91] : memref<1x2x8x512xf32, #tpu.memory_space<vmem>>, vector<1x2x8x512xf32>
    %138 = vector.shape_cast %137 : vector<1x2x8x512xf32> to vector<2x8x512xf32>
    %139 = vector.shape_cast %136 : vector<2x8x512xf32> to vector<1x2x8x512xf32>
    tpu.vector_store %arg23[%c0_88, %c0_89, %c0_90, %c0_91], %139 {strides = array<i32>} : memref<1x2x8x512xf32, #tpu.memory_space<vmem>>, vector<1x2x8x512xf32>,
    %140 = vector.shape_cast %132 : vector<16x512xf32> to vector<2x8x512xf32>
    %c0_92 = arith.constant 0 : index
    %c0_93 = arith.constant 0 : index
    %c0_94 = arith.constant 0 : index
    %c0_95 = arith.constant 0 : index
    %141 = vector.load %arg24[%c0_92, %c0_93, %c0_94, %c0_95] : memref<1x2x8x512xf32, #tpu.memory_space<vmem>>, vector<1x2x8x512xf32>
    %142 = vector.shape_cast %141 : vector<1x2x8x512xf32> to vector<2x8x512xf32>
    %143 = vector.shape_cast %140 : vector<2x8x512xf32> to vector<1x2x8x512xf32>
    tpu.vector_store %arg24[%c0_92, %c0_93, %c0_94, %c0_95], %143 {strides = array<i32>} : memref<1x2x8x512xf32, #tpu.memory_space<vmem>>, vector<1x2x8x512xf32>,
    return
  }
  func.func @transform_0(%arg0: i32, %arg1: i32) -> (i32, i32, i32, i32) {
    %c0_i32 = arith.constant 0 : i32
    %c0_i32_0 = arith.constant 0 : i32
    %c0_i32_1 = arith.constant 0 : i32
    return %arg0, %arg1, %c0_i32, %c0_i32_0 : i32, i32, i32, i32
  }
  func.func @transform_1(%arg0: i32, %arg1: i32) -> (i32, i32, i32, i32) {
    %c0_i32 = arith.constant 0 : i32
    %c0_i32_0 = arith.constant 0 : i32
    %c0_i32_1 = arith.constant 0 : i32
    return %arg0, %arg1, %c0_i32, %c0_i32_0 : i32, i32, i32, i32
  }
  func.func @transform_2(%arg0: i32, %arg1: i32) -> (i32, i32, i32, i32) {
    %c0_i32 = arith.constant 0 : i32
    %c0_i32_0 = arith.constant 0 : i32
    %c0_i32_1 = arith.constant 0 : i32
    return %arg0, %arg1, %c0_i32, %c0_i32_0 : i32, i32, i32, i32
  }
  func.func @transform_3(%arg0: i32, %arg1: i32) -> (i32, i32, i32) {
    %c0_i32 = arith.constant 0 : i32
    %c0_i32_0 = arith.constant 0 : i32
    %c0_i32_1 = arith.constant 0 : i32
    return %arg0, %c0_i32, %c0_i32_0 : i32, i32, i32
  }
  func.func @transform_4(%arg0: i32, %arg1: i32) -> (i32, i32, i32) {
    %c0_i32 = arith.constant 0 : i32
    %c0_i32_0 = arith.constant 0 : i32
    %c0_i32_1 = arith.constant 0 : i32
    return %arg0, %c0_i32, %c0_i32_0 : i32, i32, i32
  }
  func.func @transform_5(%arg0: i32, %arg1: i32) -> (i32, i32, i32) {
    %c0_i32 = arith.constant 0 : i32
    %c0_i32_0 = arith.constant 0 : i32
    %c0_i32_1 = arith.constant 0 : i32
    return %arg0, %c0_i32, %c0_i32_0 : i32, i32, i32
  }
  func.func @transform_6(%arg0: i32, %arg1: i32) -> (i32, i32, i32) {
    %c0_i32 = arith.constant 0 : i32
    %c0_i32_0 = arith.constant 0 : i32
    %c0_i32_1 = arith.constant 0 : i32
    return %arg0, %c0_i32, %c0_i32_0 : i32, i32, i32
  }
  func.func @transform_7(%arg0: i32, %arg1: i32) -> (i32, i32, i32) {
    %c0_i32 = arith.constant 0 : i32
    %c0_i32_0 = arith.constant 0 : i32
    %c0_i32_1 = arith.constant 0 : i32
    return %arg0, %c0_i32, %c0_i32_0 : i32, i32, i32
  }
  func.func @transform_8(%arg0: i32, %arg1: i32) -> (i32, i32, i32) {
    %c0_i32 = arith.constant 0 : i32
    %c0_i32_0 = arith.constant 0 : i32
    %c0_i32_1 = arith.constant 0 : i32
    return %arg0, %c0_i32, %c0_i32_0 : i32, i32, i32
  }
  func.func @transform_9(%arg0: i32, %arg1: i32) -> (i32, i32, i32) {
    %c0_i32 = arith.constant 0 : i32
    %c0_i32_0 = arith.constant 0 : i32
    %c0_i32_1 = arith.constant 0 : i32
    return %arg0, %c0_i32, %c0_i32_0 : i32, i32, i32
  }
  func.func @transform_10(%arg0: i32, %arg1: i32) -> (i32, i32, i32) {
    %c0_i32 = arith.constant 0 : i32
    %c0_i32_0 = arith.constant 0 : i32
    %c0_i32_1 = arith.constant 0 : i32
    return %arg0, %c0_i32, %c0_i32_0 : i32, i32, i32
  }
  func.func @transform_11(%arg0: i32, %arg1: i32) -> (i32, i32, i32) {
    %c0_i32 = arith.constant 0 : i32
    %c0_i32_0 = arith.constant 0 : i32
    %c0_i32_1 = arith.constant 0 : i32
    return %arg0, %c0_i32, %c0_i32_0 : i32, i32, i32
  }
  func.func @transform_12(%arg0: i32, %arg1: i32) -> (i32, i32, i32) {
    %c0_i32 = arith.constant 0 : i32
    %c0_i32_0 = arith.constant 0 : i32
    %c0_i32_1 = arith.constant 0 : i32
    return %arg0, %c0_i32, %c0_i32_0 : i32, i32, i32
  }
  func.func @transform_13(%arg0: i32, %arg1: i32) -> (i32, i32, i32) {
    %c0_i32 = arith.constant 0 : i32
    %c0_i32_0 = arith.constant 0 : i32
    %c0_i32_1 = arith.constant 0 : i32
    return %arg0, %c0_i32, %c0_i32_0 : i32, i32, i32
  }
  func.func @transform_14(%arg0: i32, %arg1: i32) -> (i32, i32, i32) {
    %c0_i32 = arith.constant 0 : i32
    %c0_i32_0 = arith.constant 0 : i32
    %c0_i32_1 = arith.constant 0 : i32
    return %arg0, %c0_i32, %c0_i32_0 : i32, i32, i32
  }
  func.func @transform_15(%arg0: i32, %arg1: i32) -> (i32, i32, i32) {
    %c0_i32 = arith.constant 0 : i32
    %c0_i32_0 = arith.constant 0 : i32
    %c0_i32_1 = arith.constant 0 : i32
    return %arg0, %c0_i32, %c0_i32_0 : i32, i32, i32
  }
  func.func @transform_16(%arg0: i32, %arg1: i32) -> (i32, i32, i32) {
    %c0_i32 = arith.constant 0 : i32
    %c0_i32_0 = arith.constant 0 : i32
    %c0_i32_1 = arith.constant 0 : i32
    return %arg0, %c0_i32, %c0_i32_0 : i32, i32, i32
  }
  func.func @transform_17(%arg0: i32, %arg1: i32) -> (i32, i32, i32) {
    %c0_i32 = arith.constant 0 : i32
    %c0_i32_0 = arith.constant 0 : i32
    %c0_i32_1 = arith.constant 0 : i32
    return %arg0, %c0_i32, %c0_i32_0 : i32, i32, i32
  }
  func.func @transform_18(%arg0: i32, %arg1: i32) -> (i32, i32, i32) {
    %c0_i32 = arith.constant 0 : i32
    %c0_i32_0 = arith.constant 0 : i32
    %c0_i32_1 = arith.constant 0 : i32
    return %arg0, %c0_i32, %c0_i32_0 : i32, i32, i32
  }
  func.func @transform_19(%arg0: i32, %arg1: i32) -> (i32, i32, i32) {
    %c0_i32 = arith.constant 0 : i32
    %c0_i32_0 = arith.constant 0 : i32
    %c0_i32_1 = arith.constant 0 : i32
    return %arg0, %c0_i32, %c0_i32_0 : i32, i32, i32
  }
  func.func @transform_20(%arg0: i32, %arg1: i32) -> (i32, i32, i32) {
    %c0_i32 = arith.constant 0 : i32
    %c0_i32_0 = arith.constant 0 : i32
    %c0_i32_1 = arith.constant 0 : i32
    return %arg0, %c0_i32, %c0_i32_0 : i32, i32, i32
  }
  func.func @transform_21(%arg0: i32, %arg1: i32) -> (i32, i32, i32, i32) {
    %c0_i32 = arith.constant 0 : i32
    %c0_i32_0 = arith.constant 0 : i32
    %c0_i32_1 = arith.constant 0 : i32
    return %arg0, %arg1, %c0_i32, %c0_i32_0 : i32, i32, i32, i32
  }
  func.func @transform_22(%arg0: i32, %arg1: i32) -> (i32, i32, i32, i32) {
    %c0_i32 = arith.constant 0 : i32
    %c0_i32_0 = arith.constant 0 : i32
    %c0_i32_1 = arith.constant 0 : i32
    return %arg0, %arg1, %c0_i32, %c0_i32_0 : i32, i32, i32, i32
  }
}

</mosaic_0001>

<llo_original>
// kernel: tpu_custom_call.1
$region0: #{tpu_custom_call.1}
  #allocation0 [shape = 'u32[]', space=smem, size = 0x4, offset = 0x4, fixed_abs, tag = 'smem constant byte address 0x4 - core index']
  #allocation1 [shape = 'u32[144,128]{1,0:T(1,128)}', space=vmem, size = 0x12000, scoped, tag = 'internal scratch']
  %s0 = inlined_call_operand.vmem [shape: bf16[2,2,8,512], index: 0, kind: input, shape index: {}]
  %s1 = inlined_call_operand.vmem [shape: f32[2,2,1,512], index: 1, kind: input, shape index: {}]
  %s2 = inlined_call_operand.vmem [shape: f32[2,2,8,512], index: 2, kind: input, shape index: {}]
  %s3 = inlined_call_operand.hbm [shape: bf16[2,512,256], index: 3, kind: input, shape index: {}]
  %s4 = inlined_call_operand.vmem [shape: bf16[2,256,8], index: 4, kind: input, shape index: {}]
  %s5 = inlined_call_operand.hbm [shape: bf16[2,512,512], index: 5, kind: input, shape index: {}]
  %s6 = inlined_call_operand.vmem [shape: f32[2,1,512], index: 6, kind: input, shape index: {}]
  %s7 = inlined_call_operand.vmem [shape: f32[2,1,512], index: 7, kind: input, shape index: {}]
  %s8 = inlined_call_operand.vmem [shape: f32[2,1,512], index: 8, kind: input, shape index: {}]
  %s9 = inlined_call_operand.hbm [shape: bf16[2,512,512], index: 9, kind: input, shape index: {}]
  %s10 = inlined_call_operand.vmem [shape: f32[2,1,512], index: 10, kind: input, shape index: {}]
  %s11 = inlined_call_operand.hbm [shape: bf16[2,512,256], index: 11, kind: input, shape index: {}]
  %s12 = inlined_call_operand.vmem [shape: f32[2,1,256], index: 12, kind: input, shape index: {}]
  %s13 = inlined_call_operand.hbm [shape: bf16[2,256,256], index: 13, kind: input, shape index: {}]
  %s14 = inlined_call_operand.vmem [shape: f32[2,1,256], index: 14, kind: input, shape index: {}]
  %s15 = inlined_call_operand.hbm [shape: bf16[2,256,512], index: 15, kind: input, shape index: {}]
  %s16 = inlined_call_operand.vmem [shape: f32[2,1,512], index: 16, kind: input, shape index: {}]
  %s17 = inlined_call_operand.hbm [shape: bf16[2,512,128], index: 17, kind: input, shape index: {}]
  %s18 = inlined_call_operand.vmem [shape: f32[2,1,128], index: 18, kind: input, shape index: {}]
  %s19 = inlined_call_operand.hbm [shape: bf16[2,128,512], index: 19, kind: input, shape index: {}]
  %s20 = inlined_call_operand.vmem [shape: f32[2,1,512], index: 20, kind: input, shape index: {}]
  %s21 = inlined_call_operand.hbm [shape: f32[2,2,8,512], index: 21, kind: output, shape index: {0}]
  %s22 = inlined_call_operand.hbm [shape: f32[2,2,8,512], index: 22, kind: output, shape index: {1}]
  %23 = xla_tuple %s21, %s22
  %s24 = sld [smem:[#allocation0]]
  $region157: #{tpu_custom_call.1} parent=0
    _
  %s26 = ssub.s32 1, %s24
  %s27 = scalar_select 0, %s26, %s24
  $region1: #{tpu_custom_call.1} parent=0
    #allocation2 [shape = 'u8[524288]{0}', space=vmem, size = 0x80000, scoped, tag = 'input window, operand 3']
    #allocation3 [shape = 's32[2]{0}', space=sflag, size = 0x8, scoped, tag = 'scoped memory for tpu_custom_call.1']
    #allocation4 [shape = 's32[2]{0}', space=sflag, size = 0x8, scoped, tag = 'scoped memory for tpu_custom_call.1']
    #allocation5 [shape = 'u8[1048576]{0}', space=vmem, size = 0x100000, scoped, tag = 'input window, operand 5']
    #allocation6 [shape = 's32[2]{0}', space=sflag, size = 0x8, scoped, tag = 'scoped memory for tpu_custom_call.1']
    #allocation7 [shape = 'u8[1048576]{0}', space=vmem, size = 0x100000, scoped, tag = 'input window, operand 9']
    #allocation8 [shape = 'u8[524288]{0}', space=vmem, size = 0x80000, scoped, tag = 'input window, operand 11']
    #allocation9 [shape = 's32[2]{0}', space=sflag, size = 0x8, scoped, tag = 'scoped memory for tpu_custom_call.1']
    #allocation10 [shape = 'u8[262144]{0}', space=vmem, size = 0x40000, scoped, tag = 'input window, operand 13']
    #allocation11 [shape = 'u8[524288]{0}', space=vmem, size = 0x80000, scoped, tag = 'input window, operand 15']
    #allocation12 [shape = 's32[2]{0}', space=sflag, size = 0x8, scoped, tag = 'scoped memory for tpu_custom_call.1']
    #allocation13 [shape = 'u8[262144]{0}', space=vmem, size = 0x40000, scoped, tag = 'input window, operand 17']
    #allocation14 [shape = 'u8[262144]{0}', space=vmem, size = 0x40000, scoped, tag = 'input window, operand 19']
    #allocation15 [shape = 's32[2]{0}', space=sflag, size = 0x8, scoped, tag = 'scoped memory for tpu_custom_call.1']
    #allocation16 [shape = 'u8[65536]{0}', space=vmem, size = 0x10000, scoped, tag = 'output window, operand 0']
    #allocation17 [shape = 'u8[65536]{0}', space=vmem, size = 0x10000, scoped, tag = 'output window, operand 1']
    #allocation18 [shape = 's32[2]{0}', space=sflag, size = 0x8, scoped, tag = 'scoped memory for tpu_custom_call.1']
    %28 = vsyncpa [#allocation3], 0
    %s29 = scalar_lea.sflag [#allocation3], 1
    %30 = vsyncpa %s29, 0
    %31 = vsyncpa [#allocation6], 0
    %s32 = scalar_lea.sflag [#allocation6], 1
    %33 = vsyncpa %s32, 0
    %34 = vsyncpa [#allocation9], 0
    %s35 = scalar_lea.sflag [#allocation9], 1
    %36 = vsyncpa %s35, 0
    %37 = vsyncpa [#allocation12], 0
    %s38 = scalar_lea.sflag [#allocation12], 1
    %39 = vsyncpa %s38, 0
    %40 = vsyncpa [#allocation15], 0
    %s41 = scalar_lea.sflag [#allocation15], 1
    %42 = vsyncpa %s41, 0
    %43 = vsyncpa [#allocation4], 0
    %s44 = scalar_lea.sflag [#allocation4], 1
    %45 = vsyncpa %s44, 0
    %46 = vsyncpa [#allocation18], 0
    %s47 = scalar_lea.sflag [#allocation18], 1
    %48 = vsyncpa %s47, 0
    loop: start=0, step=1, limit=4
    $region2: #{tpu_custom_call.1} parent=1 // loop_pre_header
      _
    $region3: #{tpu_custom_call.1} parent=1 // loop_header
      %s50 = sphi 0, %s54
      %p51 = scmp.ge.s32.totalorder %s50, 4
      %s57 = sphi 0, %s69
      %s58 = sphi 0, %s65
      %s59 = sphi 0, %s57
      %s60 = sphi 0, %s58
      %s61 = sphi 0, %s59
      %s62 = sphi 0, %s60
      %s74 = sphi 0, %s76
      %s77 = sphi 0, %s74
      %s78 = sphi 0, %s77
      %s94 = sphi 0, %s78
      %s102 = sphi 0, %s104
      %s105 = sphi 0, %s102
      %s106 = sphi 0, %s105
      %s122 = sphi 0, %s106
      %s130 = sphi 0, %s132
      %s133 = sphi 0, %s130
      %s134 = sphi 0, %s133
      %s150 = sphi 0, %s134
      %s156 = sphi 0, %s158
      %s159 = sphi 0, %s156
      %s160 = sphi 0, %s159
      %s176 = sphi 0, %s160
      %s182 = sphi 0, %s184
      %s185 = sphi 0, %s182
      %s186 = sphi 0, %s185
      %s202 = sphi 0, %s186
      %s208 = sphi 0, %s210
      %s211 = sphi 0, %s208
      %s212 = sphi 0, %s211
      %s228 = sphi 0, %s212
      %s234 = sphi 0, %s236
      %s237 = sphi 0, %s234
      %s238 = sphi 0, %s237
      %s254 = sphi 0, %s238
      %s260 = sphi 0, %s262
      %s263 = sphi 0, %s260
      %s264 = sphi 0, %s263
      %s280 = sphi 0, %s264
      %s286 = sphi 0, %s288
      %s289 = sphi 0, %s286
      %s290 = sphi 0, %s289
      %s306 = sphi 0, %s290
      %s312 = sphi 0, %s314
      %s315 = sphi 0, %s312
      %s316 = sphi 0, %s315
      %s332 = sphi 0, %s316
      %s338 = sphi 0, %s340
      %s341 = sphi 0, %s338
      %s342 = sphi 0, %s341
      %s358 = sphi 0, %s342
      %s364 = sphi 0, %s366
      %s367 = sphi 0, %s364
      %s368 = sphi 0, %s367
      %s384 = sphi 0, %s368
      %s390 = sphi 0, %s392
      %s393 = sphi 0, %s390
      %s394 = sphi 0, %s393
      %s410 = sphi 0, %s394
      %s416 = sphi 0, %s418
      %s419 = sphi 0, %s416
      %s420 = sphi 0, %s419
      %s436 = sphi 0, %s420
      %s442 = sphi 0, %s444
      %s445 = sphi 0, %s442
      %s446 = sphi 0, %s445
      %s462 = sphi 0, %s446
      %s468 = sphi 0, %s470
      %s471 = sphi 0, %s468
      %s472 = sphi 0, %s471
      %s488 = sphi 0, %s472
      %s494 = sphi 0, %s496
      %s497 = sphi 0, %s494
      %s498 = sphi 0, %s497
      %s514 = sphi 0, %s498
      %s520 = sphi 0, %s522
      %s523 = sphi 0, %s520
      %s524 = sphi 0, %s523
      %s540 = sphi 0, %s524
      %s546 = sphi 0, %s548
      %s549 = sphi 0, %s546
      %s550 = sphi 0, %s549
      %s566 = sphi 0, %s550
      %s572 = sphi 0, %s574
      %s575 = sphi 0, %s572
      %s576 = sphi 0, %s575
      %s592 = sphi 0, %s576
      %s598 = sphi 0, %s600
      %s601 = sphi 0, %s598
      %s602 = sphi 0, %s601
      %s618 = sphi 0, %s602
      %s626 = sphi 0, %s628
      %s629 = sphi 0, %s626
      %s630 = sphi 0, %s629
      %s646 = sphi 0, %s630
      %s654 = sphi 0, %s656
      %s657 = sphi 0, %s654
      %s658 = sphi 0, %s657
      %s674 = sphi 0, %s658
    $region4: #{tpu_custom_call.1} parent=1 // loop_header_branch
      %53 = sbr.rel (%p51) target = $region8
    $region5: #{tpu_custom_call.1} parent=1 // loop_body
      %s55 = ssub.s32 %s50, 1
      %s56 = ssub.s32 %s50, 2
      %s63 = sadd.s32 1, %s58
      %p64 = scmp.ge.s32.totalorder %s63, 1
      %s65 = scalar_select %p64, 0, %s63
      %s66 = sadd.s32 1, %s57
      %s67 = scalar_select %p64, %s66, %s57
      %p68 = scmp.ge.s32.totalorder %s67, 2
      %s69 = scalar_select %p68, 0, %s67
      %s70 = ssub.s32 %s57, %s69
      %s71 = ssub.s32 %s58, %s65
      %s72 = sor.u32 %s70, %s71
      %p73 = scmp.eq.s32.totalorder %s72, 0
      %s75 = sadd.s32 %s74, 1
      %s76 = scalar_select %p73, %s74, %s75
      %p79 = pneg %p73
      %p80 = scmp.eq.s32.totalorder %s50, 1
      %p81 = por %p79, %p80
      %p82 = scmp.ne.s32.totalorder %s74, %s77
      %p83 = scmp.eq.s32.totalorder %s50, 0
      %p84 = por %p82, %p83
      %p85 = scmp.ne.s32.totalorder %s74, %s77
      %p86 = scmp.eq.s32.totalorder %s55, 1
      %p87 = por %p85, %p86
      %p88 = scmp.ne.s32.totalorder %s77, %s78
      %p89 = scmp.eq.s32.totalorder %s55, 0
      %p90 = por %p88, %p89
      %p91 = scmp.ne.s32.totalorder %s77, %s78
      %p92 = scmp.eq.s32.totalorder %s56, 1
      %p93 = por %p91, %p92
      %p95 = scmp.ne.s32.totalorder %s78, %s94
      %p96 = scmp.eq.s32.totalorder %s56, 0
      %p97 = por %p95, %p96
      %s98 = ssub.s32 %s57, %s69
      %s99 = ssub.s32 %s58, %s65
      %s100 = sor.u32 %s98, %s99
      %p101 = scmp.eq.s32.totalorder %s100, 0
      %s103 = sadd.s32 %s102, 1
      %s104 = scalar_select %p101, %s102, %s103
      %p107 = pneg %p101
      %p108 = scmp.eq.s32.totalorder %s50, 1
      %p109 = por %p107, %p108
      %p110 = scmp.ne.s32.totalorder %s102, %s105
      %p111 = scmp.eq.s32.totalorder %s50, 0
      %p112 = por %p110, %p111
      %p113 = scmp.ne.s32.totalorder %s102, %s105
      %p114 = scmp.eq.s32.totalorder %s55, 1
      %p115 = por %p113, %p114
      %p116 = scmp.ne.s32.totalorder %s105, %s106
      %p117 = scmp.eq.s32.totalorder %s55, 0
      %p118 = por %p116, %p117
      %p119 = scmp.ne.s32.totalorder %s105, %s106
      %p120 = scmp.eq.s32.totalorder %s56, 1
      %p121 = por %p119, %p120
      %p123 = scmp.ne.s32.totalorder %s106, %s122
      %p124 = scmp.eq.s32.totalorder %s56, 0
      %p125 = por %p123, %p124
      %s126 = ssub.s32 %s57, %s69
      %s127 = ssub.s32 %s58, %s65
      %s128 = sor.u32 %s126, %s127
      %p129 = scmp.eq.s32.totalorder %s128, 0
      %s131 = sadd.s32 %s130, 1
      %s132 = scalar_select %p129, %s130, %s131
      %p135 = pneg %p129
      %p136 = scmp.eq.s32.totalorder %s50, 1
      %p137 = por %p135, %p136
      %p138 = scmp.ne.s32.totalorder %s130, %s133
      %p139 = scmp.eq.s32.totalorder %s50, 0
      %p140 = por %p138, %p139
      %p141 = scmp.ne.s32.totalorder %s130, %s133
      %p142 = scmp.eq.s32.totalorder %s55, 1
      %p143 = por %p141, %p142
      %p144 = scmp.ne.s32.totalorder %s133, %s134
      %p145 = scmp.eq.s32.totalorder %s55, 0
      %p146 = por %p144, %p145
      %p147 = scmp.ne.s32.totalorder %s133, %s134
      %p148 = scmp.eq.s32.totalorder %s56, 1
      %p149 = por %p147, %p148
      %p151 = scmp.ne.s32.totalorder %s134, %s150
      %p152 = scmp.eq.s32.totalorder %s56, 0
      %p153 = por %p151, %p152
      %s154 = ssub.s32 %s57, %s69
      %p155 = scmp.eq.s32.totalorder %s154, 0
      %s157 = sadd.s32 %s156, 1
      %s158 = scalar_select %p155, %s156, %s157
      %p161 = pneg %p155
      %p162 = scmp.eq.s32.totalorder %s50, 1
      %p163 = por %p161, %p162
      %p164 = scmp.ne.s32.totalorder %s156, %s159
      %p165 = scmp.eq.s32.totalorder %s50, 0
      %p166 = por %p164, %p165
      %p167 = scmp.ne.s32.totalorder %s156, %s159
      %p168 = scmp.eq.s32.totalorder %s55, 1
      %p169 = por %p167, %p168
      %p170 = scmp.ne.s32.totalorder %s159, %s160
      %p171 = scmp.eq.s32.totalorder %s55, 0
      %p172 = por %p170, %p171
      %p173 = scmp.ne.s32.totalorder %s159, %s160
      %p174 = scmp.eq.s32.totalorder %s56, 1
      %p175 = por %p173, %p174
      %p177 = scmp.ne.s32.totalorder %s160, %s176
      %p178 = scmp.eq.s32.totalorder %s56, 0
      %p179 = por %p177, %p178
      %s180 = ssub.s32 %s57, %s69
      %p181 = scmp.eq.s32.totalorder %s180, 0
      %s183 = sadd.s32 %s182, 1
      %s184 = scalar_select %p181, %s182, %s183
      %p187 = pneg %p181
      %p188 = scmp.eq.s32.totalorder %s50, 1
      %p189 = por %p187, %p188
      %p190 = scmp.ne.s32.totalorder %s182, %s185
      %p191 = scmp.eq.s32.totalorder %s50, 0
      %p192 = por %p190, %p191
      %p193 = scmp.ne.s32.totalorder %s182, %s185
      %p194 = scmp.eq.s32.totalorder %s55, 1
      %p195 = por %p193, %p194
      %p196 = scmp.ne.s32.totalorder %s185, %s186
      %p197 = scmp.eq.s32.totalorder %s55, 0
      %p198 = por %p196, %p197
      %p199 = scmp.ne.s32.totalorder %s185, %s186
      %p200 = scmp.eq.s32.totalorder %s56, 1
      %p201 = por %p199, %p200
      %p203 = scmp.ne.s32.totalorder %s186, %s202
      %p204 = scmp.eq.s32.totalorder %s56, 0
      %p205 = por %p203, %p204
      %s206 = ssub.s32 %s57, %s69
      %p207 = scmp.eq.s32.totalorder %s206, 0
      %s209 = sadd.s32 %s208, 1
      %s210 = scalar_select %p207, %s208, %s209
      %p213 = pneg %p207
      %p214 = scmp.eq.s32.totalorder %s50, 1
      %p215 = por %p213, %p214
      %p216 = scmp.ne.s32.totalorder %s208, %s211
      %p217 = scmp.eq.s32.totalorder %s50, 0
      %p218 = por %p216, %p217
      %p219 = scmp.ne.s32.totalorder %s208, %s211
      %p220 = scmp.eq.s32.totalorder %s55, 1
      %p221 = por %p219, %p220
      %p222 = scmp.ne.s32.totalorder %s211, %s212
      %p223 = scmp.eq.s32.totalorder %s55, 0
      %p224 = por %p222, %p223
      %p225 = scmp.ne.s32.totalorder %s211, %s212
      %p226 = scmp.eq.s32.totalorder %s56, 1
      %p227 = por %p225, %p226
      %p229 = scmp.ne.s32.totalorder %s212, %s228
      %p230 = scmp.eq.s32.totalorder %s56, 0
      %p231 = por %p229, %p230
      %s232 = ssub.s32 %s57, %s69
      %p233 = scmp.eq.s32.totalorder %s232, 0
      %s235 = sadd.s32 %s234, 1
      %s236 = scalar_select %p233, %s234, %s235
      %p239 = pneg %p233
      %p240 = scmp.eq.s32.totalorder %s50, 1
      %p241 = por %p239, %p240
      %p242 = scmp.ne.s32.totalorder %s234, %s237
      %p243 = scmp.eq.s32.totalorder %s50, 0
      %p244 = por %p242, %p243
      %p245 = scmp.ne.s32.totalorder %s234, %s237
      %p246 = scmp.eq.s32.totalorder %s55, 1
      %p247 = por %p245, %p246
      %p248 = scmp.ne.s32.totalorder %s237, %s238
      %p249 = scmp.eq.s32.totalorder %s55, 0
      %p250 = por %p248, %p249
      %p251 = scmp.ne.s32.totalorder %s237, %s238
      %p252 = scmp.eq.s32.totalorder %s56, 1
      %p253 = por %p251, %p252
      %p255 = scmp.ne.s32.totalorder %s238, %s254
      %p256 = scmp.eq.s32.totalorder %s56, 0
      %p257 = por %p255, %p256
      %s258 = ssub.s32 %s57, %s69
      %p259 = scmp.eq.s32.totalorder %s258, 0
      %s261 = sadd.s32 %s260, 1
      %s262 = scalar_select %p259, %s260, %s261
      %p265 = pneg %p259
      %p266 = scmp.eq.s32.totalorder %s50, 1
      %p267 = por %p265, %p266
      %p268 = scmp.ne.s32.totalorder %s260, %s263
      %p269 = scmp.eq.s32.totalorder %s50, 0
      %p270 = por %p268, %p269
      %p271 = scmp.ne.s32.totalorder %s260, %s263
      %p272 = scmp.eq.s32.totalorder %s55, 1
      %p273 = por %p271, %p272
      %p274 = scmp.ne.s32.totalorder %s263, %s264
      %p275 = scmp.eq.s32.totalorder %s55, 0
      %p276 = por %p274, %p275
      %p277 = scmp.ne.s32.totalorder %s263, %s264
      %p278 = scmp.eq.s32.totalorder %s56, 1
      %p279 = por %p277, %p278
      %p281 = scmp.ne.s32.totalorder %s264, %s280
      %p282 = scmp.eq.s32.totalorder %s56, 0
      %p283 = por %p281, %p282
      %s284 = ssub.s32 %s57, %s69
      %p285 = scmp.eq.s32.totalorder %s284, 0
      %s287 = sadd.s32 %s286, 1
      %s288 = scalar_select %p285, %s286, %s287
      %p291 = pneg %p285
      %p292 = scmp.eq.s32.totalorder %s50, 1
      %p293 = por %p291, %p292
      %p294 = scmp.ne.s32.totalorder %s286, %s289
      %p295 = scmp.eq.s32.totalorder %s50, 0
      %p296 = por %p294, %p295
      %p297 = scmp.ne.s32.totalorder %s286, %s289
      %p298 = scmp.eq.s32.totalorder %s55, 1
      %p299 = por %p297, %p298
      %p300 = scmp.ne.s32.totalorder %s289, %s290
      %p301 = scmp.eq.s32.totalorder %s55, 0
      %p302 = por %p300, %p301
      %p303 = scmp.ne.s32.totalorder %s289, %s290
      %p304 = scmp.eq.s32.totalorder %s56, 1
      %p305 = por %p303, %p304
      %p307 = scmp.ne.s32.totalorder %s290, %s306
      %p308 = scmp.eq.s32.totalorder %s56, 0
      %p309 = por %p307, %p308
      %s310 = ssub.s32 %s57, %s69
      %p311 = scmp.eq.s32.totalorder %s310, 0
      %s313 = sadd.s32 %s312, 1
      %s314 = scalar_select %p311, %s312, %s313
      %p317 = pneg %p311
      %p318 = scmp.eq.s32.totalorder %s50, 1
      %p319 = por %p317, %p318
      %p320 = scmp.ne.s32.totalorder %s312, %s315
      %p321 = scmp.eq.s32.totalorder %s50, 0
      %p322 = por %p320, %p321
      %p323 = scmp.ne.s32.totalorder %s312, %s315
      %p324 = scmp.eq.s32.totalorder %s55, 1
      %p325 = por %p323, %p324
      %p326 = scmp.ne.s32.totalorder %s315, %s316
      %p327 = scmp.eq.s32.totalorder %s55, 0
      %p328 = por %p326, %p327
      %p329 = scmp.ne.s32.totalorder %s315, %s316
      %p330 = scmp.eq.s32.totalorder %s56, 1
      %p331 = por %p329, %p330
      %p333 = scmp.ne.s32.totalorder %s316, %s332
      %p334 = scmp.eq.s32.totalorder %s56, 0
      %p335 = por %p333, %p334
      %s336 = ssub.s32 %s57, %s69
      %p337 = scmp.eq.s32.totalorder %s336, 0
      %s339 = sadd.s32 %s338, 1
      %s340 = scalar_select %p337, %s338, %s339
      %p343 = pneg %p337
      %p344 = scmp.eq.s32.totalorder %s50, 1
      %p345 = por %p343, %p344
      %p346 = scmp.ne.s32.totalorder %s338, %s341
      %p347 = scmp.eq.s32.totalorder %s50, 0
      %p348 = por %p346, %p347
      %p349 = scmp.ne.s32.totalorder %s338, %s341
      %p350 = scmp.eq.s32.totalorder %s55, 1
      %p351 = por %p349, %p350
      %p352 = scmp.ne.s32.totalorder %s341, %s342
      %p353 = scmp.eq.s32.totalorder %s55, 0
      %p354 = por %p352, %p353
      %p355 = scmp.ne.s32.totalorder %s341, %s342
      %p356 = scmp.eq.s32.totalorder %s56, 1
      %p357 = por %p355, %p356
      %p359 = scmp.ne.s32.totalorder %s342, %s358
      %p360 = scmp.eq.s32.totalorder %s56, 0
      %p361 = por %p359, %p360
      %s362 = ssub.s32 %s57, %s69
      %p363 = scmp.eq.s32.totalorder %s362, 0
      %s365 = sadd.s32 %s364, 1
      %s366 = scalar_select %p363, %s364, %s365
      %p369 = pneg %p363
      %p370 = scmp.eq.s32.totalorder %s50, 1
      %p371 = por %p369, %p370
      %p372 = scmp.ne.s32.totalorder %s364, %s367
      %p373 = scmp.eq.s32.totalorder %s50, 0
      %p374 = por %p372, %p373
      %p375 = scmp.ne.s32.totalorder %s364, %s367
      %p376 = scmp.eq.s32.totalorder %s55, 1
      %p377 = por %p375, %p376
      %p378 = scmp.ne.s32.totalorder %s367, %s368
      %p379 = scmp.eq.s32.totalorder %s55, 0
      %p380 = por %p378, %p379
      %p381 = scmp.ne.s32.totalorder %s367, %s368
      %p382 = scmp.eq.s32.totalorder %s56, 1
      %p383 = por %p381, %p382
      %p385 = scmp.ne.s32.totalorder %s368, %s384
      %p386 = scmp.eq.s32.totalorder %s56, 0
      %p387 = por %p385, %p386
      %s388 = ssub.s32 %s57, %s69
      %p389 = scmp.eq.s32.totalorder %s388, 0
      %s391 = sadd.s32 %s390, 1
      %s392 = scalar_select %p389, %s390, %s391
      %p395 = pneg %p389
      %p396 = scmp.eq.s32.totalorder %s50, 1
      %p397 = por %p395, %p396
      %p398 = scmp.ne.s32.totalorder %s390, %s393
      %p399 = scmp.eq.s32.totalorder %s50, 0
      %p400 = por %p398, %p399
      %p401 = scmp.ne.s32.totalorder %s390, %s393
      %p402 = scmp.eq.s32.totalorder %s55, 1
      %p403 = por %p401, %p402
      %p404 = scmp.ne.s32.totalorder %s393, %s394
      %p405 = scmp.eq.s32.totalorder %s55, 0
      %p406 = por %p404, %p405
      %p407 = scmp.ne.s32.totalorder %s393, %s394
      %p408 = scmp.eq.s32.totalorder %s56, 1
      %p409 = por %p407, %p408
      %p411 = scmp.ne.s32.totalorder %s394, %s410
      %p412 = scmp.eq.s32.totalorder %s56, 0
      %p413 = por %p411, %p412
      %s414 = ssub.s32 %s57, %s69
      %p415 = scmp.eq.s32.totalorder %s414, 0
      %s417 = sadd.s32 %s416, 1
      %s418 = scalar_select %p415, %s416, %s417
      %p421 = pneg %p415
      %p422 = scmp.eq.s32.totalorder %s50, 1
      %p423 = por %p421, %p422
      %p424 = scmp.ne.s32.totalorder %s416, %s419
      %p425 = scmp.eq.s32.totalorder %s50, 0
      %p426 = por %p424, %p425
      %p427 = scmp.ne.s32.totalorder %s416, %s419
      %p428 = scmp.eq.s32.totalorder %s55, 1
      %p429 = por %p427, %p428
      %p430 = scmp.ne.s32.totalorder %s419, %s420
      %p431 = scmp.eq.s32.totalorder %s55, 0
      %p432 = por %p430, %p431
      %p433 = scmp.ne.s32.totalorder %s419, %s420
      %p434 = scmp.eq.s32.totalorder %s56, 1
      %p435 = por %p433, %p434
      %p437 = scmp.ne.s32.totalorder %s420, %s436
      %p438 = scmp.eq.s32.totalorder %s56, 0
      %p439 = por %p437, %p438
      %s440 = ssub.s32 %s57, %s69
      %p441 = scmp.eq.s32.totalorder %s440, 0
      %s443 = sadd.s32 %s442, 1
      %s444 = scalar_select %p441, %s442, %s443
      %p447 = pneg %p441
      %p448 = scmp.eq.s32.totalorder %s50, 1
      %p449 = por %p447, %p448
      %p450 = scmp.ne.s32.totalorder %s442, %s445
      %p451 = scmp.eq.s32.totalorder %s50, 0
      %p452 = por %p450, %p451
      %p453 = scmp.ne.s32.totalorder %s442, %s445
      %p454 = scmp.eq.s32.totalorder %s55, 1
      %p455 = por %p453, %p454
      %p456 = scmp.ne.s32.totalorder %s445, %s446
      %p457 = scmp.eq.s32.totalorder %s55, 0
      %p458 = por %p456, %p457
      %p459 = scmp.ne.s32.totalorder %s445, %s446
      %p460 = scmp.eq.s32.totalorder %s56, 1
      %p461 = por %p459, %p460
      %p463 = scmp.ne.s32.totalorder %s446, %s462
      %p464 = scmp.eq.s32.totalorder %s56, 0
      %p465 = por %p463, %p464
      %s466 = ssub.s32 %s57, %s69
      %p467 = scmp.eq.s32.totalorder %s466, 0
      %s469 = sadd.s32 %s468, 1
      %s470 = scalar_select %p467, %s468, %s469
      %p473 = pneg %p467
      %p474 = scmp.eq.s32.totalorder %s50, 1
      %p475 = por %p473, %p474
      %p476 = scmp.ne.s32.totalorder %s468, %s471
      %p477 = scmp.eq.s32.totalorder %s50, 0
      %p478 = por %p476, %p477
      %p479 = scmp.ne.s32.totalorder %s468, %s471
      %p480 = scmp.eq.s32.totalorder %s55, 1
      %p481 = por %p479, %p480
      %p482 = scmp.ne.s32.totalorder %s471, %s472
      %p483 = scmp.eq.s32.totalorder %s55, 0
      %p484 = por %p482, %p483
      %p485 = scmp.ne.s32.totalorder %s471, %s472
      %p486 = scmp.eq.s32.totalorder %s56, 1
      %p487 = por %p485, %p486
      %p489 = scmp.ne.s32.totalorder %s472, %s488
      %p490 = scmp.eq.s32.totalorder %s56, 0
      %p491 = por %p489, %p490
      %s492 = ssub.s32 %s57, %s69
      %p493 = scmp.eq.s32.totalorder %s492, 0
      %s495 = sadd.s32 %s494, 1
      %s496 = scalar_select %p493, %s494, %s495
      %p499 = pneg %p493
      %p500 = scmp.eq.s32.totalorder %s50, 1
      %p501 = por %p499, %p500
      %p502 = scmp.ne.s32.totalorder %s494, %s497
      %p503 = scmp.eq.s32.totalorder %s50, 0
      %p504 = por %p502, %p503
      %p505 = scmp.ne.s32.totalorder %s494, %s497
      %p506 = scmp.eq.s32.totalorder %s55, 1
      %p507 = por %p505, %p506
      %p508 = scmp.ne.s32.totalorder %s497, %s498
      %p509 = scmp.eq.s32.totalorder %s55, 0
      %p510 = por %p508, %p509
      %p511 = scmp.ne.s32.totalorder %s497, %s498
      %p512 = scmp.eq.s32.totalorder %s56, 1
      %p513 = por %p511, %p512
      %p515 = scmp.ne.s32.totalorder %s498, %s514
      %p516 = scmp.eq.s32.totalorder %s56, 0
      %p517 = por %p515, %p516
      %s518 = ssub.s32 %s57, %s69
      %p519 = scmp.eq.s32.totalorder %s518, 0
      %s521 = sadd.s32 %s520, 1
      %s522 = scalar_select %p519, %s520, %s521
      %p525 = pneg %p519
      %p526 = scmp.eq.s32.totalorder %s50, 1
      %p527 = por %p525, %p526
      %p528 = scmp.ne.s32.totalorder %s520, %s523
      %p529 = scmp.eq.s32.totalorder %s50, 0
      %p530 = por %p528, %p529
      %p531 = scmp.ne.s32.totalorder %s520, %s523
      %p532 = scmp.eq.s32.totalorder %s55, 1
      %p533 = por %p531, %p532
      %p534 = scmp.ne.s32.totalorder %s523, %s524
      %p535 = scmp.eq.s32.totalorder %s55, 0
      %p536 = por %p534, %p535
      %p537 = scmp.ne.s32.totalorder %s523, %s524
      %p538 = scmp.eq.s32.totalorder %s56, 1
      %p539 = por %p537, %p538
      %p541 = scmp.ne.s32.totalorder %s524, %s540
      %p542 = scmp.eq.s32.totalorder %s56, 0
      %p543 = por %p541, %p542
      %s544 = ssub.s32 %s57, %s69
      %p545 = scmp.eq.s32.totalorder %s544, 0
      %s547 = sadd.s32 %s546, 1
      %s548 = scalar_select %p545, %s546, %s547
      %p551 = pneg %p545
      %p552 = scmp.eq.s32.totalorder %s50, 1
      %p553 = por %p551, %p552
      %p554 = scmp.ne.s32.totalorder %s546, %s549
      %p555 = scmp.eq.s32.totalorder %s50, 0
      %p556 = por %p554, %p555
      %p557 = scmp.ne.s32.totalorder %s546, %s549
      %p558 = scmp.eq.s32.totalorder %s55, 1
      %p559 = por %p557, %p558
      %p560 = scmp.ne.s32.totalorder %s549, %s550
      %p561 = scmp.eq.s32.totalorder %s55, 0
      %p562 = por %p560, %p561
      %p563 = scmp.ne.s32.totalorder %s549, %s550
      %p564 = scmp.eq.s32.totalorder %s56, 1
      %p565 = por %p563, %p564
      %p567 = scmp.ne.s32.totalorder %s550, %s566
      %p568 = scmp.eq.s32.totalorder %s56, 0
      %p569 = por %p567, %p568
      %s570 = ssub.s32 %s57, %s69
      %p571 = scmp.eq.s32.totalorder %s570, 0
      %s573 = sadd.s32 %s572, 1
      %s574 = scalar_select %p571, %s572, %s573
      %p577 = pneg %p571
      %p578 = scmp.eq.s32.totalorder %s50, 1
      %p579 = por %p577, %p578
      %p580 = scmp.ne.s32.totalorder %s572, %s575
      %p581 = scmp.eq.s32.totalorder %s50, 0
      %p582 = por %p580, %p581
      %p583 = scmp.ne.s32.totalorder %s572, %s575
      %p584 = scmp.eq.s32.totalorder %s55, 1
      %p585 = por %p583, %p584
      %p586 = scmp.ne.s32.totalorder %s575, %s576
      %p587 = scmp.eq.s32.totalorder %s55, 0
      %p588 = por %p586, %p587
      %p589 = scmp.ne.s32.totalorder %s575, %s576
      %p590 = scmp.eq.s32.totalorder %s56, 1
      %p591 = por %p589, %p590
      %p593 = scmp.ne.s32.totalorder %s576, %s592
      %p594 = scmp.eq.s32.totalorder %s56, 0
      %p595 = por %p593, %p594
      %s596 = ssub.s32 %s57, %s69
      %p597 = scmp.eq.s32.totalorder %s596, 0
      %s599 = sadd.s32 %s598, 1
      %s600 = scalar_select %p597, %s598, %s599
      %p603 = pneg %p597
      %p604 = scmp.eq.s32.totalorder %s50, 1
      %p605 = por %p603, %p604
      %p606 = scmp.ne.s32.totalorder %s598, %s601
      %p607 = scmp.eq.s32.totalorder %s50, 0
      %p608 = por %p606, %p607
      %p609 = scmp.ne.s32.totalorder %s598, %s601
      %p610 = scmp.eq.s32.totalorder %s55, 1
      %p611 = por %p609, %p610
      %p612 = scmp.ne.s32.totalorder %s601, %s602
      %p613 = scmp.eq.s32.totalorder %s55, 0
      %p614 = por %p612, %p613
      %p615 = scmp.ne.s32.totalorder %s601, %s602
      %p616 = scmp.eq.s32.totalorder %s56, 1
      %p617 = por %p615, %p616
      %p619 = scmp.ne.s32.totalorder %s602, %s618
      %p620 = scmp.eq.s32.totalorder %s56, 0
      %p621 = por %p619, %p620
      %s622 = ssub.s32 %s57, %s69
      %s623 = ssub.s32 %s58, %s65
      %s624 = sor.u32 %s622, %s623
      %p625 = scmp.eq.s32.totalorder %s624, 0
      %s627 = sadd.s32 %s626, 1
      %s628 = scalar_select %p625, %s626, %s627
      %p631 = pneg %p625
      %p632 = scmp.eq.s32.totalorder %s50, 1
      %p633 = por %p631, %p632
      %p634 = scmp.ne.s32.totalorder %s626, %s629
      %p635 = scmp.eq.s32.totalorder %s50, 0
      %p636 = por %p634, %p635
      %p637 = scmp.ne.s32.totalorder %s626, %s629
      %p638 = scmp.eq.s32.totalorder %s55, 1
      %p639 = por %p637, %p638
      %p640 = scmp.ne.s32.totalorder %s629, %s630
      %p641 = scmp.eq.s32.totalorder %s55, 0
      %p642 = por %p640, %p641
      %p643 = scmp.ne.s32.totalorder %s629, %s630
      %p644 = scmp.eq.s32.totalorder %s56, 1
      %p645 = por %p643, %p644
      %p647 = scmp.ne.s32.totalorder %s630, %s646
      %p648 = scmp.eq.s32.totalorder %s56, 0
      %p649 = por %p647, %p648
      %s650 = ssub.s32 %s57, %s69
      %s651 = ssub.s32 %s58, %s65
      %s652 = sor.u32 %s650, %s651
      %p653 = scmp.eq.s32.totalorder %s652, 0
      %s655 = sadd.s32 %s654, 1
      %s656 = scalar_select %p653, %s654, %s655
      %p659 = pneg %p653
      %p660 = scmp.eq.s32.totalorder %s50, 1
      %p661 = por %p659, %p660
      %p662 = scmp.ne.s32.totalorder %s654, %s657
      %p663 = scmp.eq.s32.totalorder %s50, 0
      %p664 = por %p662, %p663
      %p665 = scmp.ne.s32.totalorder %s654, %s657
      %p666 = scmp.eq.s32.totalorder %s55, 1
      %p667 = por %p665, %p666
      %p668 = scmp.ne.s32.totalorder %s657, %s658
      %p669 = scmp.eq.s32.totalorder %s55, 0
      %p670 = por %p668, %p669
      %p671 = scmp.ne.s32.totalorder %s657, %s658
      %p672 = scmp.eq.s32.totalorder %s56, 1
      %p673 = por %p671, %p672
      %p675 = scmp.ne.s32.totalorder %s658, %s674
      %p676 = scmp.eq.s32.totalorder %s56, 0
      %p677 = por %p675, %p676
      %p678 = scmp.le.s32.totalorder 1, %s50
      %p679 = scmp.lt.s32.totalorder %s50, 3
      %p680 = pnand %p678, %p679
      %p681 = pneg %p680
      // Predicated region
      $region9: #{tpu_custom_call.1} parent=5 // pred_check
        _
      $region10: #{tpu_custom_call.1} parent=5 // pred_check_branch
        %683 = sbr.rel (%p680) target = $region12
      $region11: #{tpu_custom_call.1} parent=5 // pred_region
        %s684 = ssub.s32 %s50, 1
      $region12: #{tpu_custom_call.1} parent=5 // pred_fallthru
        _
      %p685 = scmp.lt.s32.totalorder %s50, 2
      // Predicated region
      $region13: #{tpu_custom_call.1} parent=5 // pred_check
        %p686 = pneg %p685
      $region14: #{tpu_custom_call.1} parent=5 // pred_check_branch
        %688 = sbr.rel (%p686) target = $region16
      $region15: #{tpu_custom_call.1} parent=5 // pred_region
        // Predicated region
        $region17: #{tpu_custom_call.1} parent=15 // pred_check
          %p689 = pneg %p84
        $region18: #{tpu_custom_call.1} parent=15 // pred_check_branch
          %691 = sbr.rel (%p689) target = $region20
        $region19: #{tpu_custom_call.1} parent=15 // pred_region
          %s692 = smul.u32 2, %s58
          %p693 = scmp.lt.s32.totalorder %s57, 1
          %s694 = scalar_select %p693, %s57, 1
          %p695 = scmp.lt.s32.totalorder %s692, 1
          %s696 = scalar_select %p695, %s692, 1
          %s697 = smul.addr %s696, 4
          %s698 = smul.addr %s694, 8
          %s699 = sadd.s32 %s697, %s698
          %s700 = smul.addr %s699, 4
          %s701 = scalar_lea.vmem %s0, %s700
          %s702 = smul.u32 2, %s58
        $region20: #{tpu_custom_call.1} parent=15 // pred_fallthru
          _
        // Predicated region
        $region21: #{tpu_custom_call.1} parent=15 // pred_check
          %p703 = pneg %p112
        $region22: #{tpu_custom_call.1} parent=15 // pred_check_branch
          %705 = sbr.rel (%p703) target = $region24
        $region23: #{tpu_custom_call.1} parent=15 // pred_region
          %s706 = smul.u32 2, %s58
          %p707 = scmp.lt.s32.totalorder %s57, 1
          %s708 = scalar_select %p707, %s57, 1
          %p709 = scmp.lt.s32.totalorder %s706, 1
          %s710 = scalar_select %p709, %s706, 1
          %s711 = smul.addr %s710, 4
          %s712 = smul.addr %s708, 8
          %s713 = sadd.s32 %s711, %s712
          %s714 = scalar_lea.vmem %s1, %s713
          %s715 = smul.u32 2, %s58
        $region24: #{tpu_custom_call.1} parent=15 // pred_fallthru
          _
        // Predicated region
        $region25: #{tpu_custom_call.1} parent=15 // pred_check
          %p716 = pneg %p140
        $region26: #{tpu_custom_call.1} parent=15 // pred_check_branch
          %718 = sbr.rel (%p716) target = $region28
        $region27: #{tpu_custom_call.1} parent=15 // pred_region
          %s719 = smul.u32 2, %s58
          %p720 = scmp.lt.s32.totalorder %s57, 1
          %s721 = scalar_select %p720, %s57, 1
          %p722 = scmp.lt.s32.totalorder %s719, 1
          %s723 = scalar_select %p722, %s719, 1
          %s724 = smul.addr %s723, 4
          %s725 = smul.addr %s721, 8
          %s726 = sadd.s32 %s724, %s725
          %s727 = smul.addr %s726, 8
          %s728 = scalar_lea.vmem %s2, %s727
          %s729 = smul.u32 2, %s58
        $region28: #{tpu_custom_call.1} parent=15 // pred_fallthru
          _
        // Predicated region
        $region29: #{tpu_custom_call.1} parent=15 // pred_check
          %p730 = pneg %p166
        $region30: #{tpu_custom_call.1} parent=15 // pred_check_branch
          %732 = sbr.rel (%p730) target = $region32
        $region31: #{tpu_custom_call.1} parent=15 // pred_region
          %s733 = sand.u32 %s156, 1
          %s734 = scalar_lea.sflag [#allocation3], %s733
          %s735 = sand.u32 %s156, 1
          %s736 = smul.addr %s735, 512
          %s737 = scalar_lea.vmem [#allocation2], %s736
          %s739 = ssub.s32 8192, 8192
          %740 = vsyncadd %s734, %s739
          %s741 = smul.addr %s57, 128
          %s742 = smul.addr %s741, 64
          %s743 = scalar_lea.hbm %s3, %s742
          %s744 = sshll.u32 %s737, 4
          %s745 = int_to_ptr.vmem [resolvable:$true] %s744
          %750 = dma.hbm_to_vmem [thread:$0]  %s743, 8192, %s745, %s734, 128, 128, 8
        $region32: #{tpu_custom_call.1} parent=15 // pred_fallthru
          _
        // Predicated region
        $region33: #{tpu_custom_call.1} parent=15 // pred_check
          %p751 = pneg %p192
        $region34: #{tpu_custom_call.1} parent=15 // pred_check_branch
          %753 = sbr.rel (%p751) target = $region36
        $region35: #{tpu_custom_call.1} parent=15 // pred_region
          %p754 = scmp.lt.s32.totalorder %s57, 1
          %s755 = scalar_select %p754, %s57, 1
          %s756 = smul.addr %s755, 32
          %s757 = smul.addr %s756, 4
          %s758 = scalar_lea.vmem %s4, %s757
        $region36: #{tpu_custom_call.1} parent=15 // pred_fallthru
          _
        // Predicated region
        $region37: #{tpu_custom_call.1} parent=15 // pred_check
          %p759 = pneg %p218
        $region38: #{tpu_custom_call.1} parent=15 // pred_check_branch
          %761 = sbr.rel (%p759) target = $region40
        $region39: #{tpu_custom_call.1} parent=15 // pred_region
          %s762 = sand.u32 %s50, 1
          %s763 = scalar_lea.sflag [#allocation6], %s762
          %s764 = sand.u32 %s208, 1
          %s765 = smul.addr %s764, 1024
          %s766 = scalar_lea.vmem [#allocation5], %s765
          %s768 = ssub.s32 16384, 16384
          %769 = vsyncadd %s763, %s768
          %s770 = smul.addr %s57, 256
          %s771 = smul.addr %s770, 64
          %s772 = scalar_lea.hbm %s5, %s771
          %s773 = sshll.u32 %s766, 4
          %s774 = int_to_ptr.vmem [resolvable:$true] %s773
          %779 = dma.hbm_to_vmem [thread:$0]  %s772, 16384, %s774, %s763, 256, 256, 16
        $region40: #{tpu_custom_call.1} parent=15 // pred_fallthru
          _
        // Predicated region
        $region41: #{tpu_custom_call.1} parent=15 // pred_check
          %p780 = pneg %p244
        $region42: #{tpu_custom_call.1} parent=15 // pred_check_branch
          %782 = sbr.rel (%p780) target = $region44
        $region43: #{tpu_custom_call.1} parent=15 // pred_region
          %p783 = scmp.lt.s32.totalorder %s57, 1
          %s784 = scalar_select %p783, %s57, 1
          %s785 = smul.addr %s784, 4
          %s786 = scalar_lea.vmem %s6, %s785
        $region44: #{tpu_custom_call.1} parent=15 // pred_fallthru
          _
        // Predicated region
        $region45: #{tpu_custom_call.1} parent=15 // pred_check
          %p787 = pneg %p270
        $region46: #{tpu_custom_call.1} parent=15 // pred_check_branch
          %789 = sbr.rel (%p787) target = $region48
        $region47: #{tpu_custom_call.1} parent=15 // pred_region
          %p790 = scmp.lt.s32.totalorder %s57, 1
          %s791 = scalar_select %p790, %s57, 1
          %s792 = smul.addr %s791, 4
          %s793 = scalar_lea.vmem %s7, %s792
        $region48: #{tpu_custom_call.1} parent=15 // pred_fallthru
          _
        // Predicated region
        $region49: #{tpu_custom_call.1} parent=15 // pred_check
          %p794 = pneg %p296
        $region50: #{tpu_custom_call.1} parent=15 // pred_check_branch
          %796 = sbr.rel (%p794) target = $region52
        $region51: #{tpu_custom_call.1} parent=15 // pred_region
          %p797 = scmp.lt.s32.totalorder %s57, 1
          %s798 = scalar_select %p797, %s57, 1
          %s799 = smul.addr %s798, 4
          %s800 = scalar_lea.vmem %s8, %s799
        $region52: #{tpu_custom_call.1} parent=15 // pred_fallthru
          _
        // Predicated region
        $region53: #{tpu_custom_call.1} parent=15 // pred_check
          %p801 = pneg %p322
        $region54: #{tpu_custom_call.1} parent=15 // pred_check_branch
          %803 = sbr.rel (%p801) target = $region56
        $region55: #{tpu_custom_call.1} parent=15 // pred_region
          %s804 = sand.u32 %s50, 1
          %s805 = scalar_lea.sflag [#allocation6], %s804
          %s806 = sand.u32 %s312, 1
          %s807 = smul.addr %s806, 1024
          %s808 = scalar_lea.vmem [#allocation7], %s807
          %s810 = ssub.s32 16384, 16384
          %811 = vsyncadd %s805, %s810
          %s812 = smul.addr %s57, 256
          %s813 = smul.addr %s812, 64
          %s814 = scalar_lea.hbm %s9, %s813
          %s815 = sshll.u32 %s808, 4
          %s816 = int_to_ptr.vmem [resolvable:$true] %s815
          %821 = dma.hbm_to_vmem [thread:$0]  %s814, 16384, %s816, %s805, 256, 256, 16
        $region56: #{tpu_custom_call.1} parent=15 // pred_fallthru
          _
        // Predicated region
        $region57: #{tpu_custom_call.1} parent=15 // pred_check
          %p822 = pneg %p348
        $region58: #{tpu_custom_call.1} parent=15 // pred_check_branch
          %824 = sbr.rel (%p822) target = $region60
        $region59: #{tpu_custom_call.1} parent=15 // pred_region
          %p825 = scmp.lt.s32.totalorder %s57, 1
          %s826 = scalar_select %p825, %s57, 1
          %s827 = smul.addr %s826, 4
          %s828 = scalar_lea.vmem %s10, %s827
        $region60: #{tpu_custom_call.1} parent=15 // pred_fallthru
          _
        // Predicated region
        $region61: #{tpu_custom_call.1} parent=15 // pred_check
          %p829 = pneg %p374
        $region62: #{tpu_custom_call.1} parent=15 // pred_check_branch
          %831 = sbr.rel (%p829) target = $region64
        $region63: #{tpu_custom_call.1} parent=15 // pred_region
          %s832 = sand.u32 %s50, 1
          %s833 = scalar_lea.sflag [#allocation9], %s832
          %s834 = sand.u32 %s364, 1
          %s835 = smul.addr %s834, 512
          %s836 = scalar_lea.vmem [#allocation8], %s835
          %s838 = ssub.s32 8192, 8192
          %839 = vsyncadd %s833, %s838
          %s840 = smul.addr %s57, 128
          %s841 = smul.addr %s840, 64
          %s842 = scalar_lea.hbm %s11, %s841
          %s843 = sshll.u32 %s836, 4
          %s844 = int_to_ptr.vmem [resolvable:$true] %s843
          %849 = dma.hbm_to_vmem [thread:$0]  %s842, 8192, %s844, %s833, 128, 128, 8
        $region64: #{tpu_custom_call.1} parent=15 // pred_fallthru
          _
        // Predicated region
        $region65: #{tpu_custom_call.1} parent=15 // pred_check
          %p850 = pneg %p400
        $region66: #{tpu_custom_call.1} parent=15 // pred_check_branch
          %852 = sbr.rel (%p850) target = $region68
        $region67: #{tpu_custom_call.1} parent=15 // pred_region
          %p853 = scmp.lt.s32.totalorder %s57, 1
          %s854 = scalar_select %p853, %s57, 1
          %s855 = smul.addr %s854, 2
          %s856 = scalar_lea.vmem %s12, %s855
        $region68: #{tpu_custom_call.1} parent=15 // pred_fallthru
          _
        // Predicated region
        $region69: #{tpu_custom_call.1} parent=15 // pred_check
          %p857 = pneg %p426
        $region70: #{tpu_custom_call.1} parent=15 // pred_check_branch
          %859 = sbr.rel (%p857) target = $region72
        $region71: #{tpu_custom_call.1} parent=15 // pred_region
          %s860 = sand.u32 %s50, 1
          %s861 = scalar_lea.sflag [#allocation9], %s860
          %s862 = sand.u32 %s416, 1
          %s863 = smul.addr %s862, 256
          %s864 = scalar_lea.vmem [#allocation10], %s863
          %s866 = ssub.s32 4096, 4096
          %867 = vsyncadd %s861, %s866
          %s868 = smul.addr %s57, 64
          %s869 = smul.addr %s868, 64
          %s870 = scalar_lea.hbm %s13, %s869
          %s871 = sshll.u32 %s864, 4
          %s872 = int_to_ptr.vmem [resolvable:$true] %s871
          %877 = dma.hbm_to_vmem [thread:$0]  %s870, 4096, %s872, %s861, 128, 128, 8
        $region72: #{tpu_custom_call.1} parent=15 // pred_fallthru
          _
        // Predicated region
        $region73: #{tpu_custom_call.1} parent=15 // pred_check
          %p878 = pneg %p452
        $region74: #{tpu_custom_call.1} parent=15 // pred_check_branch
          %880 = sbr.rel (%p878) target = $region76
        $region75: #{tpu_custom_call.1} parent=15 // pred_region
          %p881 = scmp.lt.s32.totalorder %s57, 1
          %s882 = scalar_select %p881, %s57, 1
          %s883 = smul.addr %s882, 2
          %s884 = scalar_lea.vmem %s14, %s883
        $region76: #{tpu_custom_call.1} parent=15 // pred_fallthru
          _
        // Predicated region
        $region77: #{tpu_custom_call.1} parent=15 // pred_check
          %p885 = pneg %p478
        $region78: #{tpu_custom_call.1} parent=15 // pred_check_branch
          %887 = sbr.rel (%p885) target = $region80
        $region79: #{tpu_custom_call.1} parent=15 // pred_region
          %s888 = sand.u32 %s50, 1
          %s889 = scalar_lea.sflag [#allocation12], %s888
          %s890 = sand.u32 %s468, 1
          %s891 = smul.addr %s890, 512
          %s892 = scalar_lea.vmem [#allocation11], %s891
          %s894 = ssub.s32 8192, 8192
          %895 = vsyncadd %s889, %s894
          %s896 = smul.addr %s57, 128
          %s897 = smul.addr %s896, 64
          %s898 = scalar_lea.hbm %s15, %s897
          %s899 = sshll.u32 %s892, 4
          %s900 = int_to_ptr.vmem [resolvable:$true] %s899
          %905 = dma.hbm_to_vmem [thread:$0]  %s898, 8192, %s900, %s889, 256, 256, 16
        $region80: #{tpu_custom_call.1} parent=15 // pred_fallthru
          _
        // Predicated region
        $region81: #{tpu_custom_call.1} parent=15 // pred_check
          %p906 = pneg %p504
        $region82: #{tpu_custom_call.1} parent=15 // pred_check_branch
          %908 = sbr.rel (%p906) target = $region84
        $region83: #{tpu_custom_call.1} parent=15 // pred_region
          %p909 = scmp.lt.s32.totalorder %s57, 1
          %s910 = scalar_select %p909, %s57, 1
          %s911 = smul.addr %s910, 4
          %s912 = scalar_lea.vmem %s16, %s911
        $region84: #{tpu_custom_call.1} parent=15 // pred_fallthru
          _
        // Predicated region
        $region85: #{tpu_custom_call.1} parent=15 // pred_check
          %p913 = pneg %p530
        $region86: #{tpu_custom_call.1} parent=15 // pred_check_branch
          %915 = sbr.rel (%p913) target = $region88
        $region87: #{tpu_custom_call.1} parent=15 // pred_region
          %s916 = sand.u32 %s50, 1
          %s917 = scalar_lea.sflag [#allocation12], %s916
          %s918 = sand.u32 %s520, 1
          %s919 = smul.addr %s918, 256
          %s920 = scalar_lea.vmem [#allocation13], %s919
          %s922 = ssub.s32 4096, 4096
          %923 = vsyncadd %s917, %s922
          %s924 = smul.addr %s57, 64
          %s925 = smul.addr %s924, 64
          %s926 = scalar_lea.hbm %s17, %s925
          %s927 = sshll.u32 %s920, 4
          %s928 = int_to_ptr.vmem [resolvable:$true] %s927
          %933 = dma.hbm_to_vmem [thread:$0]  %s926, 4096, %s928, %s917, 64, 64, 4
        $region88: #{tpu_custom_call.1} parent=15 // pred_fallthru
          _
        // Predicated region
        $region89: #{tpu_custom_call.1} parent=15 // pred_check
          %p934 = pneg %p556
        $region90: #{tpu_custom_call.1} parent=15 // pred_check_branch
          %936 = sbr.rel (%p934) target = $region92
        $region91: #{tpu_custom_call.1} parent=15 // pred_region
          %p937 = scmp.lt.s32.totalorder %s57, 1
          %s938 = scalar_select %p937, %s57, 1
          %s939 = scalar_lea.vmem %s18, %s938
        $region92: #{tpu_custom_call.1} parent=15 // pred_fallthru
          _
        // Predicated region
        $region93: #{tpu_custom_call.1} parent=15 // pred_check
          %p940 = pneg %p582
        $region94: #{tpu_custom_call.1} parent=15 // pred_check_branch
          %942 = sbr.rel (%p940) target = $region96
        $region95: #{tpu_custom_call.1} parent=15 // pred_region
          %s943 = sand.u32 %s572, 1
          %s944 = scalar_lea.sflag [#allocation15], %s943
          %s945 = sand.u32 %s572, 1
          %s946 = smul.addr %s945, 256
          %s947 = scalar_lea.vmem [#allocation14], %s946
          %s949 = ssub.s32 4096, 4096
          %950 = vsyncadd %s944, %s949
          %s951 = smul.addr %s57, 64
          %s952 = smul.addr %s951, 64
          %s953 = scalar_lea.hbm %s19, %s952
          %s954 = sshll.u32 %s947, 4
          %s955 = int_to_ptr.vmem [resolvable:$true] %s954
          %960 = dma.hbm_to_vmem [thread:$0]  %s953, 4096, %s955, %s944, 256, 256, 16
        $region96: #{tpu_custom_call.1} parent=15 // pred_fallthru
          _
        // Predicated region
        $region97: #{tpu_custom_call.1} parent=15 // pred_check
          %p961 = pneg %p608
        $region98: #{tpu_custom_call.1} parent=15 // pred_check_branch
          %963 = sbr.rel (%p961) target = $region100
        $region99: #{tpu_custom_call.1} parent=15 // pred_region
          %p964 = scmp.lt.s32.totalorder %s57, 1
          %s965 = scalar_select %p964, %s57, 1
          %s966 = smul.addr %s965, 4
          %s967 = scalar_lea.vmem %s20, %s966
        $region100: #{tpu_custom_call.1} parent=15 // pred_fallthru
          _
      $region16: #{tpu_custom_call.1} parent=5 // pred_fallthru
        _
      %p968 = scmp.le.s32.totalorder 1, %s50
      %p969 = scmp.lt.s32.totalorder %s50, 3
      %p970 = pnand %p968, %p969
      %p971 = pneg %p970
      // Predicated region
      $region101: #{tpu_custom_call.1} parent=5 // pred_check
        _
      $region102: #{tpu_custom_call.1} parent=5 // pred_check_branch
        %973 = sbr.rel (%p970) target = $region104
      $region103: #{tpu_custom_call.1} parent=5 // pred_region
        %s974 = ssub.s32 %s50, 1
        %s975 = sand.u32 %s159, 1
        %s976 = scalar_lea.sflag [#allocation3], %s975
        %s977 = sand.u32 %s159, 1
        %s978 = smul.addr %s977, 512
        %s979 = scalar_lea.vmem [#allocation2], %s978
        // Predicated region
        $region105: #{tpu_custom_call.1} parent=103 // pred_check
          %p980 = pneg %p172
        $region106: #{tpu_custom_call.1} parent=103 // pred_check_branch
          %982 = sbr.rel (%p980) target = $region108
        $region107: #{tpu_custom_call.1} parent=103 // pred_region
          %983 = dma.done %s976, 8192
        $region108: #{tpu_custom_call.1} parent=103 // pred_fallthru
          _
        %s984 = sand.u32 %s55, 1
        %s985 = scalar_lea.sflag [#allocation6], %s984
        %s986 = sand.u32 %s211, 1
        %s987 = smul.addr %s986, 1024
        %s988 = scalar_lea.vmem [#allocation5], %s987
        // Predicated region
        $region109: #{tpu_custom_call.1} parent=103 // pred_check
          %p989 = pneg %p224
        $region110: #{tpu_custom_call.1} parent=103 // pred_check_branch
          %991 = sbr.rel (%p989) target = $region112
        $region111: #{tpu_custom_call.1} parent=103 // pred_region
          %992 = dma.done %s985, 16384
        $region112: #{tpu_custom_call.1} parent=103 // pred_fallthru
          _
        %s993 = sand.u32 %s55, 1
        %s994 = scalar_lea.sflag [#allocation6], %s993
        %s995 = sand.u32 %s315, 1
        %s996 = smul.addr %s995, 1024
        %s997 = scalar_lea.vmem [#allocation7], %s996
        // Predicated region
        $region113: #{tpu_custom_call.1} parent=103 // pred_check
          %p998 = pneg %p328
        $region114: #{tpu_custom_call.1} parent=103 // pred_check_branch
          %1000 = sbr.rel (%p998) target = $region116
        $region115: #{tpu_custom_call.1} parent=103 // pred_region
          %1001 = dma.done %s994, 16384
        $region116: #{tpu_custom_call.1} parent=103 // pred_fallthru
          _
        %s1002 = sand.u32 %s55, 1
        %s1003 = scalar_lea.sflag [#allocation9], %s1002
        %s1004 = sand.u32 %s367, 1
        %s1005 = smul.addr %s1004, 512
        %s1006 = scalar_lea.vmem [#allocation8], %s1005
        // Predicated region
        $region117: #{tpu_custom_call.1} parent=103 // pred_check
          %p1007 = pneg %p380
        $region118: #{tpu_custom_call.1} parent=103 // pred_check_branch
          %1009 = sbr.rel (%p1007) target = $region120
        $region119: #{tpu_custom_call.1} parent=103 // pred_region
          %1010 = dma.done %s1003, 8192
        $region120: #{tpu_custom_call.1} parent=103 // pred_fallthru
          _
        %s1011 = sand.u32 %s55, 1
        %s1012 = scalar_lea.sflag [#allocation9], %s1011
        %s1013 = sand.u32 %s419, 1
        %s1014 = smul.addr %s1013, 256
        %s1015 = scalar_lea.vmem [#allocation10], %s1014
        // Predicated region
        $region121: #{tpu_custom_call.1} parent=103 // pred_check
          %p1016 = pneg %p432
        $region122: #{tpu_custom_call.1} parent=103 // pred_check_branch
          %1018 = sbr.rel (%p1016) target = $region124
        $region123: #{tpu_custom_call.1} parent=103 // pred_region
          %1019 = dma.done %s1012, 4096
        $region124: #{tpu_custom_call.1} parent=103 // pred_fallthru
          _
        %s1020 = sand.u32 %s55, 1
        %s1021 = scalar_lea.sflag [#allocation12], %s1020
        %s1022 = sand.u32 %s471, 1
        %s1023 = smul.addr %s1022, 512
        %s1024 = scalar_lea.vmem [#allocation11], %s1023
        // Predicated region
        $region125: #{tpu_custom_call.1} parent=103 // pred_check
          %p1025 = pneg %p484
        $region126: #{tpu_custom_call.1} parent=103 // pred_check_branch
          %1027 = sbr.rel (%p1025) target = $region128
        $region127: #{tpu_custom_call.1} parent=103 // pred_region
          %1028 = dma.done %s1021, 8192
        $region128: #{tpu_custom_call.1} parent=103 // pred_fallthru
          _
        %s1029 = sand.u32 %s55, 1
        %s1030 = scalar_lea.sflag [#allocation12], %s1029
        %s1031 = sand.u32 %s523, 1
        %s1032 = smul.addr %s1031, 256
        %s1033 = scalar_lea.vmem [#allocation13], %s1032
        // Predicated region
        $region129: #{tpu_custom_call.1} parent=103 // pred_check
          %p1034 = pneg %p536
        $region130: #{tpu_custom_call.1} parent=103 // pred_check_branch
          %1036 = sbr.rel (%p1034) target = $region132
        $region131: #{tpu_custom_call.1} parent=103 // pred_region
          %1037 = dma.done %s1030, 4096
        $region132: #{tpu_custom_call.1} parent=103 // pred_fallthru
          _
        %s1038 = sand.u32 %s575, 1
        %s1039 = scalar_lea.sflag [#allocation15], %s1038
        %s1040 = sand.u32 %s575, 1
        %s1041 = smul.addr %s1040, 256
        %s1042 = scalar_lea.vmem [#allocation14], %s1041
        // Predicated region
        $region133: #{tpu_custom_call.1} parent=103 // pred_check
          %p1043 = pneg %p588
        $region134: #{tpu_custom_call.1} parent=103 // pred_check_branch
          %1045 = sbr.rel (%p1043) target = $region136
        $region135: #{tpu_custom_call.1} parent=103 // pred_region
          %1046 = dma.done %s1039, 4096
        $region136: #{tpu_custom_call.1} parent=103 // pred_fallthru
          _
        %s1047 = smul.u32 2, %s60
        %p1048 = scmp.lt.s32.totalorder %s59, 1
        %s1049 = scalar_select %p1048, %s59, 1
        %p1050 = scmp.lt.s32.totalorder %s1047, 1
        %s1051 = scalar_select %p1050, %s1047, 1
        %s1052 = smul.addr %s1051, 4
        %s1053 = smul.addr %s1049, 8
        %s1054 = sadd.s32 %s1052, %s1053
        %s1055 = smul.addr %s1054, 4
        %s1056 = scalar_lea.vmem %s0, %s1055
        %p1057 = pneg %p90
        %p1058 = pneg %p87
        %s1059 = smul.u32 2, %s60
        %p1060 = scmp.lt.s32.totalorder %s59, 1
        %s1061 = scalar_select %p1060, %s59, 1
        %p1062 = scmp.lt.s32.totalorder %s1059, 1
        %s1063 = scalar_select %p1062, %s1059, 1
        %s1064 = smul.addr %s1063, 4
        %s1065 = smul.addr %s1061, 8
        %s1066 = sadd.s32 %s1064, %s1065
        %s1067 = scalar_lea.vmem %s1, %s1066
        %p1068 = pneg %p118
        %p1069 = pneg %p115
        %s1070 = smul.u32 2, %s60
        %p1071 = scmp.lt.s32.totalorder %s59, 1
        %s1072 = scalar_select %p1071, %s59, 1
        %p1073 = scmp.lt.s32.totalorder %s1070, 1
        %s1074 = scalar_select %p1073, %s1070, 1
        %s1075 = smul.addr %s1074, 4
        %s1076 = smul.addr %s1072, 8
        %s1077 = sadd.s32 %s1075, %s1076
        %s1078 = smul.addr %s1077, 8
        %s1079 = scalar_lea.vmem %s2, %s1078
        %p1080 = pneg %p146
        %p1081 = pneg %p143
        %s1082 = sand.u32 %s159, 1
        %s1083 = scalar_lea.sflag [#allocation3], %s1082
        %s1084 = sand.u32 %s159, 1
        %s1085 = smul.addr %s1084, 512
        %s1086 = scalar_lea.vmem [#allocation2], %s1085
        %p1087 = pneg %p172
        %p1088 = pneg %p169
        %p1089 = scmp.lt.s32.totalorder %s59, 1
        %s1090 = scalar_select %p1089, %s59, 1
        %s1091 = smul.addr %s1090, 32
        %s1092 = smul.addr %s1091, 4
        %s1093 = scalar_lea.vmem %s4, %s1092
        %p1094 = pneg %p198
        %p1095 = pneg %p195
        %s1096 = sand.u32 %s55, 1
        %s1097 = scalar_lea.sflag [#allocation6], %s1096
        %s1098 = sand.u32 %s211, 1
        %s1099 = smul.addr %s1098, 1024
        %s1100 = scalar_lea.vmem [#allocation5], %s1099
        %p1101 = pneg %p224
        %p1102 = pneg %p221
        %p1103 = scmp.lt.s32.totalorder %s59, 1
        %s1104 = scalar_select %p1103, %s59, 1
        %s1105 = smul.addr %s1104, 4
        %s1106 = scalar_lea.vmem %s6, %s1105
        %p1107 = pneg %p250
        %p1108 = pneg %p247
        %p1109 = scmp.lt.s32.totalorder %s59, 1
        %s1110 = scalar_select %p1109, %s59, 1
        %s1111 = smul.addr %s1110, 4
        %s1112 = scalar_lea.vmem %s7, %s1111
        %p1113 = pneg %p276
        %p1114 = pneg %p273
        %p1115 = scmp.lt.s32.totalorder %s59, 1
        %s1116 = scalar_select %p1115, %s59, 1
        %s1117 = smul.addr %s1116, 4
        %s1118 = scalar_lea.vmem %s8, %s1117
        %p1119 = pneg %p302
        %p1120 = pneg %p299
        %s1121 = sand.u32 %s55, 1
        %s1122 = scalar_lea.sflag [#allocation6], %s1121
        %s1123 = sand.u32 %s315, 1
        %s1124 = smul.addr %s1123, 1024
        %s1125 = scalar_lea.vmem [#allocation7], %s1124
        %p1126 = pneg %p328
        %p1127 = pneg %p325
        %p1128 = scmp.lt.s32.totalorder %s59, 1
        %s1129 = scalar_select %p1128, %s59, 1
        %s1130 = smul.addr %s1129, 4
        %s1131 = scalar_lea.vmem %s10, %s1130
        %p1132 = pneg %p354
        %p1133 = pneg %p351
        %s1134 = sand.u32 %s55, 1
        %s1135 = scalar_lea.sflag [#allocation9], %s1134
        %s1136 = sand.u32 %s367, 1
        %s1137 = smul.addr %s1136, 512
        %s1138 = scalar_lea.vmem [#allocation8], %s1137
        %p1139 = pneg %p380
        %p1140 = pneg %p377
        %p1141 = scmp.lt.s32.totalorder %s59, 1
        %s1142 = scalar_select %p1141, %s59, 1
        %s1143 = smul.addr %s1142, 2
        %s1144 = scalar_lea.vmem %s12, %s1143
        %p1145 = pneg %p406
        %p1146 = pneg %p403
        %s1147 = sand.u32 %s55, 1
        %s1148 = scalar_lea.sflag [#allocation9], %s1147
        %s1149 = sand.u32 %s419, 1
        %s1150 = smul.addr %s1149, 256
        %s1151 = scalar_lea.vmem [#allocation10], %s1150
        %p1152 = pneg %p432
        %p1153 = pneg %p429
        %p1154 = scmp.lt.s32.totalorder %s59, 1
        %s1155 = scalar_select %p1154, %s59, 1
        %s1156 = smul.addr %s1155, 2
        %s1157 = scalar_lea.vmem %s14, %s1156
        %p1158 = pneg %p458
        %p1159 = pneg %p455
        %s1160 = sand.u32 %s55, 1
        %s1161 = scalar_lea.sflag [#allocation12], %s1160
        %s1162 = sand.u32 %s471, 1
        %s1163 = smul.addr %s1162, 512
        %s1164 = scalar_lea.vmem [#allocation11], %s1163
        %p1165 = pneg %p484
        %p1166 = pneg %p481
        %p1167 = scmp.lt.s32.totalorder %s59, 1
        %s1168 = scalar_select %p1167, %s59, 1
        %s1169 = smul.addr %s1168, 4
        %s1170 = scalar_lea.vmem %s16, %s1169
        %p1171 = pneg %p510
        %p1172 = pneg %p507
        %s1173 = sand.u32 %s55, 1
        %s1174 = scalar_lea.sflag [#allocation12], %s1173
        %s1175 = sand.u32 %s523, 1
        %s1176 = smul.addr %s1175, 256
        %s1177 = scalar_lea.vmem [#allocation13], %s1176
        %p1178 = pneg %p536
        %p1179 = pneg %p533
        %p1180 = scmp.lt.s32.totalorder %s59, 1
        %s1181 = scalar_select %p1180, %s59, 1
        %s1182 = scalar_lea.vmem %s18, %s1181
        %p1183 = pneg %p562
        %p1184 = pneg %p559
        %s1185 = sand.u32 %s575, 1
        %s1186 = scalar_lea.sflag [#allocation15], %s1185
        %s1187 = sand.u32 %s575, 1
        %s1188 = smul.addr %s1187, 256
        %s1189 = scalar_lea.vmem [#allocation14], %s1188
        %p1190 = pneg %p588
        %p1191 = pneg %p585
        %p1192 = scmp.lt.s32.totalorder %s59, 1
        %s1193 = scalar_select %p1192, %s59, 1
        %s1194 = smul.addr %s1193, 4
        %s1195 = scalar_lea.vmem %s20, %s1194
        %p1196 = pneg %p614
        %p1197 = pneg %p611
        %p1198 = pneg %p642
        %p1199 = pneg %p639
        %s1200 = sand.u32 %s629, 1
        %s1201 = scalar_lea.sflag [#allocation4], %s1200
        %s1202 = sand.u32 %s629, 1
        %s1203 = smul.addr %s1202, 64
        %s1204 = scalar_lea.vmem [#allocation16], %s1203
        %p1205 = pneg %p670
        %p1206 = pneg %p667
        %s1207 = sand.u32 %s657, 1
        %s1208 = scalar_lea.sflag [#allocation18], %s1207
        %s1209 = sand.u32 %s657, 1
        %s1210 = smul.addr %s1209, 64
        %s1211 = scalar_lea.vmem [#allocation17], %s1210
        %s1212 = smul.u32 2, %s60
        %p1213 = scmp.lt.s32.totalorder %s59, 1
        %s1214 = scalar_select %p1213, %s59, 1
        %p1215 = scmp.lt.s32.totalorder %s1212, 1
        %s1216 = scalar_select %p1215, %s1212, 1
        %s1217 = smul.addr %s1216, 4
        %s1218 = smul.addr %s1214, 8
        %s1219 = sadd.s32 %s1217, %s1218
        %s1220 = smul.addr %s1219, 4
        %s1221 = scalar_lea.vmem %s0, %s1220
        %s1222 = smul.u32 2, %s60
        %s1223 = smul.u32 2, %s60
        %p1224 = scmp.lt.s32.totalorder %s59, 1
        %s1225 = scalar_select %p1224, %s59, 1
        %p1226 = scmp.lt.s32.totalorder %s1223, 1
        %s1227 = scalar_select %p1226, %s1223, 1
        %s1228 = smul.addr %s1227, 4
        %s1229 = smul.addr %s1225, 8
        %s1230 = sadd.s32 %s1228, %s1229
        %s1231 = scalar_lea.vmem %s1, %s1230
        %s1232 = smul.u32 2, %s60
        %s1233 = smul.u32 2, %s60
        %p1234 = scmp.lt.s32.totalorder %s59, 1
        %s1235 = scalar_select %p1234, %s59, 1
        %p1236 = scmp.lt.s32.totalorder %s1233, 1
        %s1237 = scalar_select %p1236, %s1233, 1
        %s1238 = smul.addr %s1237, 4
        %s1239 = smul.addr %s1235, 8
        %s1240 = sadd.s32 %s1238, %s1239
        %s1241 = smul.addr %s1240, 8
        %s1242 = scalar_lea.vmem %s2, %s1241
        %s1243 = smul.u32 2, %s60
        %p1244 = scmp.lt.s32.totalorder %s59, 1
        %s1245 = scalar_select %p1244, %s59, 1
        %s1246 = smul.addr %s1245, 32
        %s1247 = smul.addr %s1246, 4
        %s1248 = scalar_lea.vmem %s4, %s1247
        %p1249 = scmp.lt.s32.totalorder %s59, 1
        %s1250 = scalar_select %p1249, %s59, 1
        %s1251 = smul.addr %s1250, 4
        %s1252 = scalar_lea.vmem %s6, %s1251
        %p1253 = scmp.lt.s32.totalorder %s59, 1
        %s1254 = scalar_select %p1253, %s59, 1
        %s1255 = smul.addr %s1254, 4
        %s1256 = scalar_lea.vmem %s7, %s1255
        %p1257 = scmp.lt.s32.totalorder %s59, 1
        %s1258 = scalar_select %p1257, %s59, 1
        %s1259 = smul.addr %s1258, 4
        %s1260 = scalar_lea.vmem %s8, %s1259
        %p1261 = scmp.lt.s32.totalorder %s59, 1
        %s1262 = scalar_select %p1261, %s59, 1
        %s1263 = smul.addr %s1262, 4
        %s1264 = scalar_lea.vmem %s10, %s1263
        %p1265 = scmp.lt.s32.totalorder %s59, 1
        %s1266 = scalar_select %p1265, %s59, 1
        %s1267 = smul.addr %s1266, 2
        %s1268 = scalar_lea.vmem %s12, %s1267
        %p1269 = scmp.lt.s32.totalorder %s59, 1
        %s1270 = scalar_select %p1269, %s59, 1
        %s1271 = smul.addr %s1270, 2
        %s1272 = scalar_lea.vmem %s14, %s1271
        %p1273 = scmp.lt.s32.totalorder %s59, 1
        %s1274 = scalar_select %p1273, %s59, 1
        %s1275 = smul.addr %s1274, 4
        %s1276 = scalar_lea.vmem %s16, %s1275
        %p1277 = scmp.lt.s32.totalorder %s59, 1
        %s1278 = scalar_select %p1277, %s59, 1
        %s1279 = scalar_lea.vmem %s18, %s1278
        %p1280 = scmp.lt.s32.totalorder %s59, 1
        %s1281 = scalar_select %p1280, %s59, 1
        %s1282 = smul.addr %s1281, 4
        %s1283 = scalar_lea.vmem %s20, %s1282
        %s1284 = smul.u32 2, %s60
        %s1285 = smul.u32 2, %s60
        %v1287 = vld [vmem:[%s1221] sm:$0xff]
        %v1288 = vld [vmem:[%s1221 + $0x8] sm:$0xff]
        %v1289 = vld [vmem:[%s1221 + $0x10] sm:$0xff]
        %v1290 = vld [vmem:[%s1221 + $0x18] sm:$0xff]
        %v1291 = vld [vmem:[%s1231] sm:$0xf]
        %v1292 = vld [vmem:[%s1231 + $0x4] sm:$0xf]
        %v1293 = vld [vmem:[%s1242] sm:$0xff]
        %v1294 = vld [vmem:[%s1242 + $0x8] sm:$0xff]
        %v1295 = vld [vmem:[%s1242 + $0x10] sm:$0xff]
        %v1296 = vld [vmem:[%s1242 + $0x18] sm:$0xff]
        %v1297 = vld [vmem:[%s1242 + $0x20] sm:$0xff]
        %v1298 = vld [vmem:[%s1242 + $0x28] sm:$0xff]
        %v1299 = vld [vmem:[%s1242 + $0x30] sm:$0xff]
        %v1300 = vld [vmem:[%s1242 + $0x38] sm:$0xff]
        %v1301 = vld [vmem:[%s979] sm:$0xff]
        %v1302 = vld [vmem:[%s979 + $0x8] sm:$0xff]
        %v1303 = vld [vmem:[%s979 + $0x10] sm:$0xff]
        %v1304 = vld [vmem:[%s979 + $0x18] sm:$0xff]
        %v1305 = vld [vmem:[%s979 + $0x20] sm:$0xff]
        %v1306 = vld [vmem:[%s979 + $0x28] sm:$0xff]
        %v1307 = vld [vmem:[%s979 + $0x30] sm:$0xff]
        %v1308 = vld [vmem:[%s979 + $0x38] sm:$0xff]
        %v1309 = vld [vmem:[%s979 + $0x40] sm:$0xff]
        %v1310 = vld [vmem:[%s979 + $0x48] sm:$0xff]
        %v1311 = vld [vmem:[%s979 + $0x50] sm:$0xff]
        %v1312 = vld [vmem:[%s979 + $0x58] sm:$0xff]
        %v1313 = vld [vmem:[%s979 + $0x60] sm:$0xff]
        %v1314 = vld [vmem:[%s979 + $0x68] sm:$0xff]
        %v1315 = vld [vmem:[%s979 + $0x70] sm:$0xff]
        %v1316 = vld [vmem:[%s979 + $0x78] sm:$0xff]
        %v1317 = vld [vmem:[%s979 + $0x80] sm:$0xff]
        %v1318 = vld [vmem:[%s979 + $0x88] sm:$0xff]
        %v1319 = vld [vmem:[%s979 + $0x90] sm:$0xff]
        %v1320 = vld [vmem:[%s979 + $0x98] sm:$0xff]
        %v1321 = vld [vmem:[%s979 + $0xa0] sm:$0xff]
        %v1322 = vld [vmem:[%s979 + $0xa8] sm:$0xff]
        %v1323 = vld [vmem:[%s979 + $0xb0] sm:$0xff]
        %v1324 = vld [vmem:[%s979 + $0xb8] sm:$0xff]
        %v1325 = vld [vmem:[%s979 + $0xc0] sm:$0xff]
        %v1326 = vld [vmem:[%s979 + $0xc8] sm:$0xff]
        %v1327 = vld [vmem:[%s979 + $0xd0] sm:$0xff]
        %v1328 = vld [vmem:[%s979 + $0xd8] sm:$0xff]
        %v1329 = vld [vmem:[%s979 + $0xe0] sm:$0xff]
        %v1330 = vld [vmem:[%s979 + $0xe8] sm:$0xff]
        %v1331 = vld [vmem:[%s979 + $0xf0] sm:$0xff]
        %v1332 = vld [vmem:[%s979 + $0xf8] sm:$0xff]
        %v1333 = vld [vmem:[%s979 + $0x100] sm:$0xff]
        %v1334 = vld [vmem:[%s979 + $0x108] sm:$0xff]
        %v1335 = vld [vmem:[%s979 + $0x110] sm:$0xff]
        %v1336 = vld [vmem:[%s979 + $0x118] sm:$0xff]
        %v1337 = vld [vmem:[%s979 + $0x120] sm:$0xff]
        %v1338 = vld [vmem:[%s979 + $0x128] sm:$0xff]
        %v1339 = vld [vmem:[%s979 + $0x130] sm:$0xff]
        %v1340 = vld [vmem:[%s979 + $0x138] sm:$0xff]
        %v1341 = vld [vmem:[%s979 + $0x140] sm:$0xff]
        %v1342 = vld [vmem:[%s979 + $0x148] sm:$0xff]
        %v1343 = vld [vmem:[%s979 + $0x150] sm:$0xff]
        %v1344 = vld [vmem:[%s979 + $0x158] sm:$0xff]
        %v1345 = vld [vmem:[%s979 + $0x160] sm:$0xff]
        %v1346 = vld [vmem:[%s979 + $0x168] sm:$0xff]
        %v1347 = vld [vmem:[%s979 + $0x170] sm:$0xff]
        %v1348 = vld [vmem:[%s979 + $0x178] sm:$0xff]
        %v1349 = vld [vmem:[%s979 + $0x180] sm:$0xff]
        %v1350 = vld [vmem:[%s979 + $0x188] sm:$0xff]
        %v1351 = vld [vmem:[%s979 + $0x190] sm:$0xff]
        %v1352 = vld [vmem:[%s979 + $0x198] sm:$0xff]
        %v1353 = vld [vmem:[%s979 + $0x1a0] sm:$0xff]
        %v1354 = vld [vmem:[%s979 + $0x1a8] sm:$0xff]
        %v1355 = vld [vmem:[%s979 + $0x1b0] sm:$0xff]
        %v1356 = vld [vmem:[%s979 + $0x1b8] sm:$0xff]
        %v1357 = vld [vmem:[%s979 + $0x1c0] sm:$0xff]
        %v1358 = vld [vmem:[%s979 + $0x1c8] sm:$0xff]
        %v1359 = vld [vmem:[%s979 + $0x1d0] sm:$0xff]
        %v1360 = vld [vmem:[%s979 + $0x1d8] sm:$0xff]
        %v1361 = vld [vmem:[%s979 + $0x1e0] sm:$0xff]
        %v1362 = vld [vmem:[%s979 + $0x1e8] sm:$0xff]
        %v1363 = vld [vmem:[%s979 + $0x1f0] sm:$0xff]
        %v1364 = vld [vmem:[%s979 + $0x1f8] sm:$0xff]
        %v1369 = vunpack.c.l.b16 %v1287
        %v1370 = vunpack.c.h.b16 %v1287
        %v1371 = vunpack.c.l.b16 %v1288
        %v1372 = vunpack.c.h.b16 %v1288
        %v1373 = vunpack.c.l.b16 %v1289
        %v1374 = vunpack.c.h.b16 %v1289
        %v1375 = vunpack.c.l.b16 %v1290
        %v1376 = vunpack.c.h.b16 %v1290
        %v1377 = vpack.c.b16 %v1373, %v1369
        %v1378 = vpack.c.b16 %v1374, %v1370
        %v1379 = vpack.c.b16 %v1375, %v1371
        %v1380 = vpack.c.b16 %v1376, %v1372
        %v1449 = vunpack.c.l.b16 %v1301
        %v1450 = vunpack.c.h.b16 %v1301
        %v1451 = vunpack.c.l.b16 %v1302
        %v1452 = vunpack.c.h.b16 %v1302
        %v1453 = vunpack.c.l.b16 %v1303
        %v1454 = vunpack.c.h.b16 %v1303
        %v1455 = vunpack.c.l.b16 %v1304
        %v1456 = vunpack.c.h.b16 %v1304
        %v1457 = vunpack.c.l.b16 %v1305
        %v1458 = vunpack.c.h.b16 %v1305
        %v1459 = vunpack.c.l.b16 %v1306
        %v1460 = vunpack.c.h.b16 %v1306
        %v1461 = vunpack.c.l.b16 %v1307
        %v1462 = vunpack.c.h.b16 %v1307
        %v1463 = vunpack.c.l.b16 %v1308
        %v1464 = vunpack.c.h.b16 %v1308
        %v1465 = vunpack.c.l.b16 %v1309
        %v1466 = vunpack.c.h.b16 %v1309
        %v1467 = vunpack.c.l.b16 %v1310
        %v1468 = vunpack.c.h.b16 %v1310
        %v1469 = vunpack.c.l.b16 %v1311
        %v1470 = vunpack.c.h.b16 %v1311
        %v1471 = vunpack.c.l.b16 %v1312
        %v1472 = vunpack.c.h.b16 %v1312
        %v1473 = vunpack.c.l.b16 %v1313
        %v1474 = vunpack.c.h.b16 %v1313
        %v1475 = vunpack.c.l.b16 %v1314
        %v1476 = vunpack.c.h.b16 %v1314
        %v1477 = vunpack.c.l.b16 %v1315
        %v1478 = vunpack.c.h.b16 %v1315
        %v1479 = vunpack.c.l.b16 %v1316
        %v1480 = vunpack.c.h.b16 %v1316
        %v1481 = vunpack.c.l.b16 %v1317
        %v1482 = vunpack.c.h.b16 %v1317
        %v1483 = vunpack.c.l.b16 %v1318
        %v1484 = vunpack.c.h.b16 %v1318
        %v1485 = vunpack.c.l.b16 %v1319
        %v1486 = vunpack.c.h.b16 %v1319
        %v1487 = vunpack.c.l.b16 %v1320
        %v1488 = vunpack.c.h.b16 %v1320
        %v1489 = vunpack.c.l.b16 %v1321
        %v1490 = vunpack.c.h.b16 %v1321
        %v1491 = vunpack.c.l.b16 %v1322
        %v1492 = vunpack.c.h.b16 %v1322
        %v1493 = vunpack.c.l.b16 %v1323
        %v1494 = vunpack.c.h.b16 %v1323
        %v1495 = vunpack.c.l.b16 %v1324
        %v1496 = vunpack.c.h.b16 %v1324
        %v1497 = vunpack.c.l.b16 %v1325
        %v1498 = vunpack.c.h.b16 %v1325
        %v1499 = vunpack.c.l.b16 %v1326
        %v1500 = vunpack.c.h.b16 %v1326
        %v1501 = vunpack.c.l.b16 %v1327
        %v1502 = vunpack.c.h.b16 %v1327
        %v1503 = vunpack.c.l.b16 %v1328
        %v1504 = vunpack.c.h.b16 %v1328
        %v1505 = vunpack.c.l.b16 %v1329
        %v1506 = vunpack.c.h.b16 %v1329
        %v1507 = vunpack.c.l.b16 %v1330
        %v1508 = vunpack.c.h.b16 %v1330
        %v1509 = vunpack.c.l.b16 %v1331
        %v1510 = vunpack.c.h.b16 %v1331
        %v1511 = vunpack.c.l.b16 %v1332
        %v1512 = vunpack.c.h.b16 %v1332
        %v1513 = vunpack.c.l.b16 %v1333
        %v1514 = vunpack.c.h.b16 %v1333
        %v1515 = vunpack.c.l.b16 %v1334
        %v1516 = vunpack.c.h.b16 %v1334
        %v1517 = vunpack.c.l.b16 %v1335
        %v1518 = vunpack.c.h.b16 %v1335
        %v1519 = vunpack.c.l.b16 %v1336
        %v1520 = vunpack.c.h.b16 %v1336
        %v1521 = vunpack.c.l.b16 %v1337
        %v1522 = vunpack.c.h.b16 %v1337
        %v1523 = vunpack.c.l.b16 %v1338
        %v1524 = vunpack.c.h.b16 %v1338
        %v1525 = vunpack.c.l.b16 %v1339
        %v1526 = vunpack.c.h.b16 %v1339
        %v1527 = vunpack.c.l.b16 %v1340
        %v1528 = vunpack.c.h.b16 %v1340
        %v1529 = vunpack.c.l.b16 %v1341
        %v1530 = vunpack.c.h.b16 %v1341
        %v1531 = vunpack.c.l.b16 %v1342
        %v1532 = vunpack.c.h.b16 %v1342
        %v1533 = vunpack.c.l.b16 %v1343
        %v1534 = vunpack.c.h.b16 %v1343
        %v1535 = vunpack.c.l.b16 %v1344
        %v1536 = vunpack.c.h.b16 %v1344
        %v1537 = vunpack.c.l.b16 %v1345
        %v1538 = vunpack.c.h.b16 %v1345
        %v1539 = vunpack.c.l.b16 %v1346
        %v1540 = vunpack.c.h.b16 %v1346
        %v1541 = vunpack.c.l.b16 %v1347
        %v1542 = vunpack.c.h.b16 %v1347
        %v1543 = vunpack.c.l.b16 %v1348
        %v1544 = vunpack.c.h.b16 %v1348
        %v1545 = vunpack.c.l.b16 %v1349
        %v1546 = vunpack.c.h.b16 %v1349
        %v1547 = vunpack.c.l.b16 %v1350
        %v1548 = vunpack.c.h.b16 %v1350
        %v1549 = vunpack.c.l.b16 %v1351
        %v1550 = vunpack.c.h.b16 %v1351
        %v1551 = vunpack.c.l.b16 %v1352
        %v1552 = vunpack.c.h.b16 %v1352
        %v1553 = vunpack.c.l.b16 %v1353
        %v1554 = vunpack.c.h.b16 %v1353
        %v1555 = vunpack.c.l.b16 %v1354
        %v1556 = vunpack.c.h.b16 %v1354
        %v1557 = vunpack.c.l.b16 %v1355
        %v1558 = vunpack.c.h.b16 %v1355
        %v1559 = vunpack.c.l.b16 %v1356
        %v1560 = vunpack.c.h.b16 %v1356
        %v1561 = vunpack.c.l.b16 %v1357
        %v1562 = vunpack.c.h.b16 %v1357
        %v1563 = vunpack.c.l.b16 %v1358
        %v1564 = vunpack.c.h.b16 %v1358
        %v1565 = vunpack.c.l.b16 %v1359
        %v1566 = vunpack.c.h.b16 %v1359
        %v1567 = vunpack.c.l.b16 %v1360
        %v1568 = vunpack.c.h.b16 %v1360
        %v1569 = vunpack.c.l.b16 %v1361
        %v1570 = vunpack.c.h.b16 %v1361
        %v1571 = vunpack.c.l.b16 %v1362
        %v1572 = vunpack.c.h.b16 %v1362
        %v1573 = vunpack.c.l.b16 %v1363
        %v1574 = vunpack.c.h.b16 %v1363
        %v1575 = vunpack.c.l.b16 %v1364
        %v1576 = vunpack.c.h.b16 %v1364
        %v1577 = vpack.c.b16 %v1451, %v1449
        %v1578 = vpack.c.b16 %v1452, %v1450
        %v1579 = vpack.c.b16 %v1455, %v1453
        %v1580 = vpack.c.b16 %v1456, %v1454
        %v1581 = vpack.c.b16 %v1459, %v1457
        %v1582 = vpack.c.b16 %v1460, %v1458
        %v1583 = vpack.c.b16 %v1463, %v1461
        %v1584 = vpack.c.b16 %v1464, %v1462
        %v1585 = vpack.c.b16 %v1467, %v1465
        %v1586 = vpack.c.b16 %v1468, %v1466
        %v1587 = vpack.c.b16 %v1471, %v1469
        %v1588 = vpack.c.b16 %v1472, %v1470
        %v1589 = vpack.c.b16 %v1475, %v1473
        %v1590 = vpack.c.b16 %v1476, %v1474
        %v1591 = vpack.c.b16 %v1479, %v1477
        %v1592 = vpack.c.b16 %v1480, %v1478
        %v1593 = vpack.c.b16 %v1483, %v1481
        %v1594 = vpack.c.b16 %v1484, %v1482
        %v1595 = vpack.c.b16 %v1487, %v1485
        %v1596 = vpack.c.b16 %v1488, %v1486
        %v1597 = vpack.c.b16 %v1491, %v1489
        %v1598 = vpack.c.b16 %v1492, %v1490
        %v1599 = vpack.c.b16 %v1495, %v1493
        %v1600 = vpack.c.b16 %v1496, %v1494
        %v1601 = vpack.c.b16 %v1499, %v1497
        %v1602 = vpack.c.b16 %v1500, %v1498
        %v1603 = vpack.c.b16 %v1503, %v1501
        %v1604 = vpack.c.b16 %v1504, %v1502
        %v1605 = vpack.c.b16 %v1507, %v1505
        %v1606 = vpack.c.b16 %v1508, %v1506
        %v1607 = vpack.c.b16 %v1511, %v1509
        %v1608 = vpack.c.b16 %v1512, %v1510
        %v1609 = vpack.c.b16 %v1515, %v1513
        %v1610 = vpack.c.b16 %v1516, %v1514
        %v1611 = vpack.c.b16 %v1519, %v1517
        %v1612 = vpack.c.b16 %v1520, %v1518
        %v1613 = vpack.c.b16 %v1523, %v1521
        %v1614 = vpack.c.b16 %v1524, %v1522
        %v1615 = vpack.c.b16 %v1527, %v1525
        %v1616 = vpack.c.b16 %v1528, %v1526
        %v1617 = vpack.c.b16 %v1531, %v1529
        %v1618 = vpack.c.b16 %v1532, %v1530
        %v1619 = vpack.c.b16 %v1535, %v1533
        %v1620 = vpack.c.b16 %v1536, %v1534
        %v1621 = vpack.c.b16 %v1539, %v1537
        %v1622 = vpack.c.b16 %v1540, %v1538
        %v1623 = vpack.c.b16 %v1543, %v1541
        %v1624 = vpack.c.b16 %v1544, %v1542
        %v1625 = vpack.c.b16 %v1547, %v1545
        %v1626 = vpack.c.b16 %v1548, %v1546
        %v1627 = vpack.c.b16 %v1551, %v1549
        %v1628 = vpack.c.b16 %v1552, %v1550
        %v1629 = vpack.c.b16 %v1555, %v1553
        %v1630 = vpack.c.b16 %v1556, %v1554
        %v1631 = vpack.c.b16 %v1559, %v1557
        %v1632 = vpack.c.b16 %v1560, %v1558
        %v1633 = vpack.c.b16 %v1563, %v1561
        %v1634 = vpack.c.b16 %v1564, %v1562
        %v1635 = vpack.c.b16 %v1567, %v1565
        %v1636 = vpack.c.b16 %v1568, %v1566
        %v1637 = vpack.c.b16 %v1571, %v1569
        %v1638 = vpack.c.b16 %v1572, %v1570
        %v1639 = vpack.c.b16 %v1575, %v1573
        %v1640 = vpack.c.b16 %v1576, %v1574
        %1705 = vmatprep.subr.bf16.mxu0 %v1578
        %1706 = vmatpush1.bf16.msra.mxu0 %v1577
        %1707 = vmatprep.subr.bf16.mxu0 %v1580
        %1708 = vmatpush1.bf16.msra.mxu0 %v1579
        %1709 = vmatprep.subr.bf16.mxu0 %v1582
        %1710 = vmatpush1.bf16.msra.mxu0 %v1581
        %1711 = vmatprep.subr.bf16.mxu0 %v1584
        %1712 = vmatpush1.bf16.msra.mxu0 %v1583
        %1713 = vmatprep.subr.bf16.mxu0 %v1586
        %1714 = vmatpush1.bf16.msra.mxu0 %v1585
        %1715 = vmatprep.subr.bf16.mxu0 %v1588
        %1716 = vmatpush1.bf16.msra.mxu0 %v1587
        %1717 = vmatprep.subr.bf16.mxu0 %v1590
        %1718 = vmatpush1.bf16.msra.mxu0 %v1589
        %1719 = vmatprep.subr.bf16.mxu0 %v1592
        %1720 = vmatpush1.bf16.msra.mxu0 %v1591
        %1721 = vmatprep.subr.bf16.mxu0 %v1594
        %1722 = vmatpush1.bf16.msra.mxu0 %v1593
        %1723 = vmatprep.subr.bf16.mxu0 %v1596
        %1724 = vmatpush1.bf16.msra.mxu0 %v1595
        %1725 = vmatprep.subr.bf16.mxu0 %v1598
        %1726 = vmatpush1.bf16.msra.mxu0 %v1597
        %1727 = vmatprep.subr.bf16.mxu0 %v1600
        %1728 = vmatpush1.bf16.msra.mxu0 %v1599
        %1729 = vmatprep.subr.bf16.mxu0 %v1602
        %1730 = vmatpush1.bf16.msra.mxu0 %v1601
        %1731 = vmatprep.subr.bf16.mxu0 %v1604
        %1732 = vmatpush1.bf16.msra.mxu0 %v1603
        %1733 = vmatprep.subr.bf16.mxu0 %v1606
        %1734 = vmatpush1.bf16.msra.mxu0 %v1605
        %1735 = vmatprep.subr.bf16.mxu0 %v1608
        %1736 = vmatpush1.bf16.msra.mxu0 %v1607
        %1737 = vmatprep.mubr.bf16.mxu0 %v1378
        %1738 = vmatmul.mubr.bf16.gmra.mrb[0].mxu0 %v1377
        %v1739 = vpop.f32.mrb[0].mxu0
        %v1740 = vadd.f32 0.0, %v1739
        %v1741 = vpop.f32.mrb[0].mxu0
        %v1742 = vadd.f32 0.0, %v1741
        %v1743 = vpop.f32.mrb[0].mxu0
        %v1744 = vadd.f32 0.0, %v1743
        %v1745 = vpop.f32.mrb[0].mxu0
        %v1746 = vadd.f32 0.0, %v1745
        %1747 = vdwg.mxu0
        %1748 = vmatprep.subr.bf16.mxu0 %v1610
        %1749 = vmatpush1.bf16.msra.mxu0 %v1609
        %1750 = vmatprep.subr.bf16.mxu0 %v1612
        %1751 = vmatpush1.bf16.msra.mxu0 %v1611
        %1752 = vmatprep.subr.bf16.mxu0 %v1614
        %1753 = vmatpush1.bf16.msra.mxu0 %v1613
        %1754 = vmatprep.subr.bf16.mxu0 %v1616
        %1755 = vmatpush1.bf16.msra.mxu0 %v1615
        %1756 = vmatprep.subr.bf16.mxu0 %v1618
        %1757 = vmatpush1.bf16.msra.mxu0 %v1617
        %1758 = vmatprep.subr.bf16.mxu0 %v1620
        %1759 = vmatpush1.bf16.msra.mxu0 %v1619
        %1760 = vmatprep.subr.bf16.mxu0 %v1622
        %1761 = vmatpush1.bf16.msra.mxu0 %v1621
        %1762 = vmatprep.subr.bf16.mxu0 %v1624
        %1763 = vmatpush1.bf16.msra.mxu0 %v1623
        %1764 = vmatprep.subr.bf16.mxu0 %v1626
        %1765 = vmatpush1.bf16.msra.mxu0 %v1625
        %1766 = vmatprep.subr.bf16.mxu0 %v1628
        %1767 = vmatpush1.bf16.msra.mxu0 %v1627
        %1768 = vmatprep.subr.bf16.mxu0 %v1630
        %1769 = vmatpush1.bf16.msra.mxu0 %v1629
        %1770 = vmatprep.subr.bf16.mxu0 %v1632
        %1771 = vmatpush1.bf16.msra.mxu0 %v1631
        %1772 = vmatprep.subr.bf16.mxu0 %v1634
        %1773 = vmatpush1.bf16.msra.mxu0 %v1633
        %1774 = vmatprep.subr.bf16.mxu0 %v1636
        %1775 = vmatpush1.bf16.msra.mxu0 %v1635
        %1776 = vmatprep.subr.bf16.mxu0 %v1638
        %1777 = vmatpush1.bf16.msra.mxu0 %v1637
        %1778 = vmatprep.subr.bf16.mxu0 %v1640
        %1779 = vmatpush1.bf16.msra.mxu0 %v1639
        %1780 = vmatprep.mubr.bf16.mxu0 %v1380
        %1781 = vmatmul.mubr.bf16.gmra.mrb[0].mxu0 %v1379
        %v1782 = vpop.f32.mrb[0].mxu0
        %v1783 = vadd.f32 %v1740, %v1782
        %v1784 = vpop.f32.mrb[0].mxu0
        %v1785 = vadd.f32 %v1742, %v1784
        %v1786 = vpop.f32.mrb[0].mxu0
        %v1787 = vadd.f32 %v1744, %v1786
        %v1788 = vpop.f32.mrb[0].mxu0
        %v1789 = vadd.f32 %v1746, %v1788
        %1790 = vdwg.mxu0
        %v1791 = vtanh.pop %v1783
        %v1792 = vtanh.pop %v1785
        %v1793 = vtanh.pop %v1787
        %v1794 = vtanh.pop %v1789
        %v1795 = vpack.c.bf16 %v1793, %v1791
        %v1796 = vpack.c.bf16 %v1794, %v1792
        %v1797 = vld [vmem:[%s1248] sm:$0xf]
        %v1798 = vld [vmem:[%s1248 + $0x4] sm:$0xf]
        %v1799 = vld [vmem:[%s1248 + $0x8] sm:$0xf]
        %v1800 = vld [vmem:[%s1248 + $0xc] sm:$0xf]
        %v1801 = vld [vmem:[%s1248 + $0x10] sm:$0xf]
        %v1802 = vld [vmem:[%s1248 + $0x14] sm:$0xf]
        %v1803 = vld [vmem:[%s1248 + $0x18] sm:$0xf]
        %v1804 = vld [vmem:[%s1248 + $0x1c] sm:$0xf]
        %v1805 = vld [vmem:[%s1248 + $0x20] sm:$0xf]
        %v1806 = vld [vmem:[%s1248 + $0x24] sm:$0xf]
        %v1807 = vld [vmem:[%s1248 + $0x28] sm:$0xf]
        %v1808 = vld [vmem:[%s1248 + $0x2c] sm:$0xf]
        %v1809 = vld [vmem:[%s1248 + $0x30] sm:$0xf]
        %v1810 = vld [vmem:[%s1248 + $0x34] sm:$0xf]
        %v1811 = vld [vmem:[%s1248 + $0x38] sm:$0xf]
        %v1812 = vld [vmem:[%s1248 + $0x3c] sm:$0xf]
        %v1813 = vld [vmem:[%s1248 + $0x40] sm:$0xf]
        %v1814 = vld [vmem:[%s1248 + $0x44] sm:$0xf]
        %v1815 = vld [vmem:[%s1248 + $0x48] sm:$0xf]
        %v1816 = vld [vmem:[%s1248 + $0x4c] sm:$0xf]
        %v1817 = vld [vmem:[%s1248 + $0x50] sm:$0xf]
        %v1818 = vld [vmem:[%s1248 + $0x54] sm:$0xf]
        %v1819 = vld [vmem:[%s1248 + $0x58] sm:$0xf]
        %v1820 = vld [vmem:[%s1248 + $0x5c] sm:$0xf]
        %v1821 = vld [vmem:[%s1248 + $0x60] sm:$0xf]
        %v1822 = vld [vmem:[%s1248 + $0x64] sm:$0xf]
        %v1823 = vld [vmem:[%s1248 + $0x68] sm:$0xf]
        %v1824 = vld [vmem:[%s1248 + $0x6c] sm:$0xf]
        %v1825 = vld [vmem:[%s1248 + $0x70] sm:$0xf]
        %v1826 = vld [vmem:[%s1248 + $0x74] sm:$0xf]
        %v1827 = vld [vmem:[%s1248 + $0x78] sm:$0xf]
        %v1828 = vld [vmem:[%s1248 + $0x7c] sm:$0xf]
        %v1861 = vunpack.c.l.b16 %v1797
        %v1862 = vunpack.c.l.b16 %v1798
        %v1863 = vunpack.c.l.b16 %v1799
        %v1864 = vunpack.c.l.b16 %v1800
        %v1865 = vunpack.c.l.b16 %v1801
        %v1866 = vunpack.c.l.b16 %v1802
        %v1867 = vunpack.c.l.b16 %v1803
        %v1868 = vunpack.c.l.b16 %v1804
        %v1869 = vunpack.c.l.b16 %v1805
        %v1870 = vunpack.c.l.b16 %v1806
        %v1871 = vunpack.c.l.b16 %v1807
        %v1872 = vunpack.c.l.b16 %v1808
        %v1873 = vunpack.c.l.b16 %v1809
        %v1874 = vunpack.c.l.b16 %v1810
        %v1875 = vunpack.c.l.b16 %v1811
        %v1876 = vunpack.c.l.b16 %v1812
        %v1877 = vunpack.c.l.b16 %v1813
        %v1878 = vunpack.c.l.b16 %v1814
        %v1879 = vunpack.c.l.b16 %v1815
        %v1880 = vunpack.c.l.b16 %v1816
        %v1881 = vunpack.c.l.b16 %v1817
        %v1882 = vunpack.c.l.b16 %v1818
        %v1883 = vunpack.c.l.b16 %v1819
        %v1884 = vunpack.c.l.b16 %v1820
        %v1885 = vunpack.c.l.b16 %v1821
        %v1886 = vunpack.c.l.b16 %v1822
        %v1887 = vunpack.c.l.b16 %v1823
        %v1888 = vunpack.c.l.b16 %v1824
        %v1889 = vunpack.c.l.b16 %v1825
        %v1890 = vunpack.c.l.b16 %v1826
        %v1891 = vunpack.c.l.b16 %v1827
        %v1892 = vunpack.c.l.b16 %v1828
        %v1893 = vpack.c.b16 %v1862, %v1861
        %v1894 = vpack.c.b16 %v1864, %v1863
        %v1895 = vpack.c.b16 %v1866, %v1865
        %v1896 = vpack.c.b16 %v1868, %v1867
        %v1897 = vpack.c.b16 %v1870, %v1869
        %v1898 = vpack.c.b16 %v1872, %v1871
        %v1899 = vpack.c.b16 %v1874, %v1873
        %v1900 = vpack.c.b16 %v1876, %v1875
        %v1901 = vpack.c.b16 %v1878, %v1877
        %v1902 = vpack.c.b16 %v1880, %v1879
        %v1903 = vpack.c.b16 %v1882, %v1881
        %v1904 = vpack.c.b16 %v1884, %v1883
        %v1905 = vpack.c.b16 %v1886, %v1885
        %v1906 = vpack.c.b16 %v1888, %v1887
        %v1907 = vpack.c.b16 %v1890, %v1889
        %v1908 = vpack.c.b16 %v1892, %v1891
        %1925 = vmatprep.subr.bf16.mxu0 0
        %1926 = vmatpush1.bf16.msra.mxu0 %v1893
        %1927 = vmatprep.subr.bf16.mxu0 0
        %1928 = vmatpush1.bf16.msra.mxu0 %v1894
        %1929 = vmatprep.subr.bf16.mxu0 0
        %1930 = vmatpush1.bf16.msra.mxu0 %v1895
        %1931 = vmatprep.subr.bf16.mxu0 0
        %1932 = vmatpush1.bf16.msra.mxu0 %v1896
        %1933 = vmatprep.subr.bf16.mxu0 0
        %1934 = vmatpush1.bf16.msra.mxu0 %v1897
        %1935 = vmatprep.subr.bf16.mxu0 0
        %1936 = vmatpush1.bf16.msra.mxu0 %v1898
        %1937 = vmatprep.subr.bf16.mxu0 0
        %1938 = vmatpush1.bf16.msra.mxu0 %v1899
        %1939 = vmatprep.subr.bf16.mxu0 0
        %1940 = vmatpush1.bf16.msra.mxu0 %v1900
        %1941 = vmatprep.subr.bf16.mxu0 0
        %1942 = vmatpush1.bf16.msra.mxu0 %v1901
        %1943 = vmatprep.subr.bf16.mxu0 0
        %1944 = vmatpush1.bf16.msra.mxu0 %v1902
        %1945 = vmatprep.subr.bf16.mxu0 0
        %1946 = vmatpush1.bf16.msra.mxu0 %v1903
        %1947 = vmatprep.subr.bf16.mxu0 0
        %1948 = vmatpush1.bf16.msra.mxu0 %v1904
        %1949 = vmatprep.subr.bf16.mxu0 0
        %1950 = vmatpush1.bf16.msra.mxu0 %v1905
        %1951 = vmatprep.subr.bf16.mxu0 0
        %1952 = vmatpush1.bf16.msra.mxu0 %v1906
        %1953 = vmatprep.subr.bf16.mxu0 0
        %1954 = vmatpush1.bf16.msra.mxu0 %v1907
        %1955 = vmatprep.subr.bf16.mxu0 0
        %1956 = vmatpush1.bf16.msra.mxu0 %v1908
        %1957 = vmatprep.mubr.bf16.mxu0 %v1796
        %1958 = vmatmul.mubr.bf16.gmra.mrb[0].mxu0 %v1795
        %v1959 = vpop.f32.mrb[0].mxu0
        %v1960 = vadd.f32 0.0, %v1959
        %v1961 = vpop.f32.mrb[0].mxu0
        %v1962 = vpop.f32.mrb[0].mxu0
        %v1963 = vadd.f32 0.0, %v1962
        %v1964 = vpop.f32.mrb[0].mxu0
        %1965 = vdwg.mxu0
        %vm1966 = vcmask 64512
        %v1967 = vsel %vm1966, %v1960, -inf
        %v1968 = vrot.slane %v1967, 4
        %v1969 = vmax.f32 %v1967, %v1968
        %v1970 = vrot.slane %v1969, 2
        %v1971 = vmax.f32 %v1969, %v1970
        %v1972 = vrot.slane %v1971, 1
        %v1973 = vmax.f32 %v1971, %v1972
        %v1974 = vsel %vm1966, %v1963, -inf
        %v1975 = vrot.slane %v1974, 4
        %v1976 = vmax.f32 %v1974, %v1975
        %v1977 = vrot.slane %v1976, 2
        %v1978 = vmax.f32 %v1976, %v1977
        %v1979 = vrot.slane %v1978, 1
        %v1980 = vmax.f32 %v1978, %v1979
        %v1981 = vsub.f32 %v1960, %v1973
        %v1982 = vsub.f32 %v1963, %v1980
        %v1983 = vmul.f32 %v1981, 1.442695
        %v1984 = vpow.pop %v1983
        %v1985 = vmul.f32 %v1982, 1.442695
        %v1986 = vpow.pop %v1985
        %v1987 = vsel %vm1966, %v1984, 0.0
        %v1988 = vrot.slane %v1987, 4
        %v1989 = vadd.f32 %v1987, %v1988
        %v1990 = vrot.slane %v1989, 2
        %v1991 = vadd.f32 %v1989, %v1990
        %v1992 = vrot.slane %v1991, 1
        %v1993 = vadd.f32 %v1991, %v1992
        %v1994 = vsel %vm1966, %v1986, 0.0
        %v1995 = vrot.slane %v1994, 4
        %v1996 = vadd.f32 %v1994, %v1995
        %v1997 = vrot.slane %v1996, 2
        %v1998 = vadd.f32 %v1996, %v1997
        %v1999 = vrot.slane %v1998, 1
        %v2000 = vadd.f32 %v1998, %v1999
        %v2001 = vrcp.pop %v1993
        %v2002 = vmul.f32 %v1984, %v2001
        %v2003 = vrcp.pop %v2000
        %v2004 = vmul.f32 %v1986, %v2003
        %v2005 = vpack.c.bf16 %v2002, %v2002
        %v2006 = vpack.c.bf16 %v2004, %v2004
        %2007 = vxpose.xlu0.c.b16.start [1/8] %v2005, 128
        %2008 = vxpose.xlu0.c.b16.cont [2/8] 0, 128
        %2009 = vxpose.xlu0.c.b16.cont [3/8] 0, 128
        %2010 = vxpose.xlu0.c.b16.cont [4/8] 0, 128
        %2011 = vxpose.xlu0.c.b16.cont [5/8] 0, 128
        %2012 = vxpose.xlu0.c.b16.cont [6/8] 0, 128
        %2013 = vxpose.xlu0.c.b16.cont [7/8] 0, 128
        %2014 = vxpose.xlu0.c.b16.end [8/8] 0, 128
        %v2015 = vpop.trf.xlu0
        %v2016 = vpop.trf.xlu0
        %v2017 = vpop.trf.xlu0
        %v2018 = vpop.trf.xlu0
        %v2019 = vpop.trf.xlu0
        %v2020 = vpop.trf.xlu0
        %v2021 = vpop.trf.xlu0
        %v2022 = vpop.trf.xlu0
        %v2023 = vpack.c.b16 %v1369, %v1369
        %v2024 = vpack.c.b16 %v1370, %v1370
        %v2025 = vpack.c.b16 %v1371, %v1371
        %v2026 = vpack.c.b16 %v1372, %v1372
        %v2028 = vsel %vm1966, %v2015, 0
        %vm2030 = vcmask 1043456
        %v2032 = vsel %vm2030, %v2023, 0
        %v2035 = vsel %vm2030, %v2024, 0
        %v2038 = vsel %vm2030, %v2025, 0
        %v2041 = vsel %vm2030, %v2026, 0
        %2043 = vmatprep.subr.bf16.mxu0 %v2035
        %2044 = vmatpush1.bf16.msra.mxu0 %v2032
        %2045 = vmatprep.subr.bf16.mxu0 0
        %2046 = vmatpush1.bf16.msra.mxu0 0
        %2047 = vmatprep.subr.bf16.mxu0 0
        %2048 = vmatpush1.bf16.msra.mxu0 0
        %2049 = vmatprep.subr.bf16.mxu0 0
        %2050 = vmatpush1.bf16.msra.mxu0 0
        %2051 = vmatprep.subr.bf16.mxu0 0
        %2052 = vmatpush1.bf16.msra.mxu0 0
        %2053 = vmatprep.subr.bf16.mxu0 0
        %2054 = vmatpush1.bf16.msra.mxu0 0
        %2055 = vmatprep.subr.bf16.mxu0 0
        %2056 = vmatpush1.bf16.msra.mxu0 0
        %2057 = vmatprep.subr.bf16.mxu0 0
        %2058 = vmatpush1.bf16.msra.mxu0 0
        %2059 = vmatprep.subr.bf16.mxu0 0
        %2060 = vmatpush1.bf16.msra.mxu0 0
        %2061 = vmatprep.subr.bf16.mxu0 0
        %2062 = vmatpush1.bf16.msra.mxu0 0
        %2063 = vmatprep.subr.bf16.mxu0 0
        %2064 = vmatpush1.bf16.msra.mxu0 0
        %2065 = vmatprep.subr.bf16.mxu0 0
        %2066 = vmatpush1.bf16.msra.mxu0 0
        %2067 = vmatprep.subr.bf16.mxu0 0
        %2068 = vmatpush1.bf16.msra.mxu0 0
        %2069 = vmatprep.subr.bf16.mxu0 0
        %2070 = vmatpush1.bf16.msra.mxu0 0
        %2071 = vmatprep.subr.bf16.mxu0 0
        %2072 = vmatpush1.bf16.msra.mxu0 0
        %2073 = vmatprep.subr.bf16.mxu0 0
        %2074 = vmatpush1.bf16.msra.mxu0 0
        %2075 = vmatprep.mubr.bf16.mxu0 0
        %2076 = vmatmul.mubr.bf16.gmra.mrb[0].mxu0 %v2028
        %v2077 = vpop.f32.mrb[0].mxu0
        %v2078 = vadd.f32 0.0, %v2077
        %v2079 = vpop.f32.mrb[0].mxu0
        %v2080 = vadd.f32 0.0, %v2079
        %v2081 = vpop.f32.mrb[0].mxu0
        %v2082 = vpop.f32.mrb[0].mxu0
        %2083 = vdwg.mxu0
        %2084 = vmatprep.subr.bf16.mxu0 %v2041
        %2085 = vmatpush1.bf16.msra.mxu0 %v2038
        %2086 = vmatprep.subr.bf16.mxu0 0
        %2087 = vmatpush1.bf16.msra.mxu0 0
        %2088 = vmatprep.subr.bf16.mxu0 0
        %2089 = vmatpush1.bf16.msra.mxu0 0
        %2090 = vmatprep.subr.bf16.mxu0 0
        %2091 = vmatpush1.bf16.msra.mxu0 0
        %2092 = vmatprep.subr.bf16.mxu0 0
        %2093 = vmatpush1.bf16.msra.mxu0 0
        %2094 = vmatprep.subr.bf16.mxu0 0
        %2095 = vmatpush1.bf16.msra.mxu0 0
        %2096 = vmatprep.subr.bf16.mxu0 0
        %2097 = vmatpush1.bf16.msra.mxu0 0
        %2098 = vmatprep.subr.bf16.mxu0 0
        %2099 = vmatpush1.bf16.msra.mxu0 0
        %2100 = vmatprep.subr.bf16.mxu0 0
        %2101 = vmatpush1.bf16.msra.mxu0 0
        %2102 = vmatprep.subr.bf16.mxu0 0
        %2103 = vmatpush1.bf16.msra.mxu0 0
        %2104 = vmatprep.subr.bf16.mxu0 0
        %2105 = vmatpush1.bf16.msra.mxu0 0
        %2106 = vmatprep.subr.bf16.mxu0 0
        %2107 = vmatpush1.bf16.msra.mxu0 0
        %2108 = vmatprep.subr.bf16.mxu0 0
        %2109 = vmatpush1.bf16.msra.mxu0 0
        %2110 = vmatprep.subr.bf16.mxu0 0
        %2111 = vmatpush1.bf16.msra.mxu0 0
        %2112 = vmatprep.subr.bf16.mxu0 0
        %2113 = vmatpush1.bf16.msra.mxu0 0
        %2114 = vmatprep.subr.bf16.mxu0 0
        %2115 = vmatpush1.bf16.msra.mxu0 0
        %2116 = vmatprep.mubr.bf16.mxu0 0
        %2117 = vmatmul.mubr.bf16.gmra.mrb[0].mxu0 %v2028
        %v2118 = vpop.f32.mrb[0].mxu0
        %v2119 = vadd.f32 0.0, %v2118
        %v2120 = vpop.f32.mrb[0].mxu0
        %v2121 = vadd.f32 0.0, %v2120
        %v2122 = vpop.f32.mrb[0].mxu0
        %v2123 = vpop.f32.mrb[0].mxu0
        %2124 = vdwg.mxu0
        %2125 = vxpose.xlu0.c.b16.start [1/8] %v2006, 128
        %2126 = vxpose.xlu0.c.b16.cont [2/8] 0, 128
        %2127 = vxpose.xlu0.c.b16.cont [3/8] 0, 128
        %2128 = vxpose.xlu0.c.b16.cont [4/8] 0, 128
        %2129 = vxpose.xlu0.c.b16.cont [5/8] 0, 128
        %2130 = vxpose.xlu0.c.b16.cont [6/8] 0, 128
        %2131 = vxpose.xlu0.c.b16.cont [7/8] 0, 128
        %2132 = vxpose.xlu0.c.b16.end [8/8] 0, 128
        %v2133 = vpop.trf.xlu0
        %v2134 = vpop.trf.xlu0
        %v2135 = vpop.trf.xlu0
        %v2136 = vpop.trf.xlu0
        %v2137 = vpop.trf.xlu0
        %v2138 = vpop.trf.xlu0
        %v2139 = vpop.trf.xlu0
        %v2140 = vpop.trf.xlu0
        %v2141 = vpack.c.b16 %v1373, %v1373
        %v2142 = vpack.c.b16 %v1374, %v1374
        %v2143 = vpack.c.b16 %v1375, %v1375
        %v2144 = vpack.c.b16 %v1376, %v1376
        %v2146 = vsel %vm1966, %v2133, 0
        %v2149 = vsel %vm2030, %v2141, 0
        %v2152 = vsel %vm2030, %v2142, 0
        %v2155 = vsel %vm2030, %v2143, 0
        %v2158 = vsel %vm2030, %v2144, 0
        %2160 = vmatprep.subr.bf16.mxu0 %v2152
        %2161 = vmatpush1.bf16.msra.mxu0 %v2149
        %2162 = vmatprep.subr.bf16.mxu0 0
        %2163 = vmatpush1.bf16.msra.mxu0 0
        %2164 = vmatprep.subr.bf16.mxu0 0
        %2165 = vmatpush1.bf16.msra.mxu0 0
        %2166 = vmatprep.subr.bf16.mxu0 0
        %2167 = vmatpush1.bf16.msra.mxu0 0
        %2168 = vmatprep.subr.bf16.mxu0 0
        %2169 = vmatpush1.bf16.msra.mxu0 0
        %2170 = vmatprep.subr.bf16.mxu0 0
        %2171 = vmatpush1.bf16.msra.mxu0 0
        %2172 = vmatprep.subr.bf16.mxu0 0
        %2173 = vmatpush1.bf16.msra.mxu0 0
        %2174 = vmatprep.subr.bf16.mxu0 0
        %2175 = vmatpush1.bf16.msra.mxu0 0
        %2176 = vmatprep.subr.bf16.mxu0 0
        %2177 = vmatpush1.bf16.msra.mxu0 0
        %2178 = vmatprep.subr.bf16.mxu0 0
        %2179 = vmatpush1.bf16.msra.mxu0 0
        %2180 = vmatprep.subr.bf16.mxu0 0
        %2181 = vmatpush1.bf16.msra.mxu0 0
        %2182 = vmatprep.subr.bf16.mxu0 0
        %2183 = vmatpush1.bf16.msra.mxu0 0
        %2184 = vmatprep.subr.bf16.mxu0 0
        %2185 = vmatpush1.bf16.msra.mxu0 0
        %2186 = vmatprep.subr.bf16.mxu0 0
        %2187 = vmatpush1.bf16.msra.mxu0 0
        %2188 = vmatprep.subr.bf16.mxu0 0
        %2189 = vmatpush1.bf16.msra.mxu0 0
        %2190 = vmatprep.subr.bf16.mxu0 0
        %2191 = vmatpush1.bf16.msra.mxu0 0
        %2192 = vmatprep.mubr.bf16.mxu0 0
        %2193 = vmatmul.mubr.bf16.gmra.mrb[0].mxu0 %v2146
        %v2194 = vpop.f32.mrb[0].mxu0
        %v2195 = vadd.f32 0.0, %v2194
        %v2196 = vpop.f32.mrb[0].mxu0
        %v2197 = vadd.f32 0.0, %v2196
        %v2198 = vpop.f32.mrb[0].mxu0
        %v2199 = vpop.f32.mrb[0].mxu0
        %2200 = vdwg.mxu0
        %2201 = vmatprep.subr.bf16.mxu0 %v2158
        %2202 = vmatpush1.bf16.msra.mxu0 %v2155
        %2203 = vmatprep.subr.bf16.mxu0 0
        %2204 = vmatpush1.bf16.msra.mxu0 0
        %2205 = vmatprep.subr.bf16.mxu0 0
        %2206 = vmatpush1.bf16.msra.mxu0 0
        %2207 = vmatprep.subr.bf16.mxu0 0
        %2208 = vmatpush1.bf16.msra.mxu0 0
        %2209 = vmatprep.subr.bf16.mxu0 0
        %2210 = vmatpush1.bf16.msra.mxu0 0
        %2211 = vmatprep.subr.bf16.mxu0 0
        %2212 = vmatpush1.bf16.msra.mxu0 0
        %2213 = vmatprep.subr.bf16.mxu0 0
        %2214 = vmatpush1.bf16.msra.mxu0 0
        %2215 = vmatprep.subr.bf16.mxu0 0
        %2216 = vmatpush1.bf16.msra.mxu0 0
        %2217 = vmatprep.subr.bf16.mxu0 0
        %2218 = vmatpush1.bf16.msra.mxu0 0
        %2219 = vmatprep.subr.bf16.mxu0 0
        %2220 = vmatpush1.bf16.msra.mxu0 0
        %2221 = vmatprep.subr.bf16.mxu0 0
        %2222 = vmatpush1.bf16.msra.mxu0 0
        %2223 = vmatprep.subr.bf16.mxu0 0
        %2224 = vmatpush1.bf16.msra.mxu0 0
        %2225 = vmatprep.subr.bf16.mxu0 0
        %2226 = vmatpush1.bf16.msra.mxu0 0
        %2227 = vmatprep.subr.bf16.mxu0 0
        %2228 = vmatpush1.bf16.msra.mxu0 0
        %2229 = vmatprep.subr.bf16.mxu0 0
        %2230 = vmatpush1.bf16.msra.mxu0 0
        %2231 = vmatprep.subr.bf16.mxu0 0
        %2232 = vmatpush1.bf16.msra.mxu0 0
        %2233 = vmatprep.mubr.bf16.mxu0 0
        %2234 = vmatmul.mubr.bf16.gmra.mrb[0].mxu0 %v2146
        %v2235 = vpop.f32.mrb[0].mxu0
        %v2236 = vadd.f32 0.0, %v2235
        %v2237 = vpop.f32.mrb[0].mxu0
        %v2238 = vadd.f32 0.0, %v2237
        %v2239 = vpop.f32.mrb[0].mxu0
        %v2240 = vpop.f32.mrb[0].mxu0
        %2241 = vdwg.mxu0
        %v2242 = vpack.c.bf16 %v2195, %v2078
        %v2243 = vpack.c.bf16 %v2197, %v2080
        %v2244 = vpack.c.bf16 %v2236, %v2119
        %v2245 = vpack.c.bf16 %v2238, %v2121
        %v2246 = vld [vmem:[%s988] sm:$0xff]
        %v2247 = vld [vmem:[%s988 + $0x8] sm:$0xff]
        %v2248 = vld [vmem:[%s988 + $0x10] sm:$0xff]
        %v2249 = vld [vmem:[%s988 + $0x18] sm:$0xff]
        %v2250 = vld [vmem:[%s988 + $0x20] sm:$0xff]
        %v2251 = vld [vmem:[%s988 + $0x28] sm:$0xff]
        %v2252 = vld [vmem:[%s988 + $0x30] sm:$0xff]
        %v2253 = vld [vmem:[%s988 + $0x38] sm:$0xff]
        %v2254 = vld [vmem:[%s988 + $0x40] sm:$0xff]
        %v2255 = vld [vmem:[%s988 + $0x48] sm:$0xff]
        %v2256 = vld [vmem:[%s988 + $0x50] sm:$0xff]
        %v2257 = vld [vmem:[%s988 + $0x58] sm:$0xff]
        %v2258 = vld [vmem:[%s988 + $0x60] sm:$0xff]
        %v2259 = vld [vmem:[%s988 + $0x68] sm:$0xff]
        %v2260 = vld [vmem:[%s988 + $0x70] sm:$0xff]
        %v2261 = vld [vmem:[%s988 + $0x78] sm:$0xff]
        %v2262 = vld [vmem:[%s988 + $0x80] sm:$0xff]
        %v2263 = vld [vmem:[%s988 + $0x88] sm:$0xff]
        %v2264 = vld [vmem:[%s988 + $0x90] sm:$0xff]
        %v2265 = vld [vmem:[%s988 + $0x98] sm:$0xff]
        %v2266 = vld [vmem:[%s988 + $0xa0] sm:$0xff]
        %v2267 = vld [vmem:[%s988 + $0xa8] sm:$0xff]
        %v2268 = vld [vmem:[%s988 + $0xb0] sm:$0xff]
        %v2269 = vld [vmem:[%s988 + $0xb8] sm:$0xff]
        %v2270 = vld [vmem:[%s988 + $0xc0] sm:$0xff]
        %v2271 = vld [vmem:[%s988 + $0xc8] sm:$0xff]
        %v2272 = vld [vmem:[%s988 + $0xd0] sm:$0xff]
        %v2273 = vld [vmem:[%s988 + $0xd8] sm:$0xff]
        %v2274 = vld [vmem:[%s988 + $0xe0] sm:$0xff]
        %v2275 = vld [vmem:[%s988 + $0xe8] sm:$0xff]
        %v2276 = vld [vmem:[%s988 + $0xf0] sm:$0xff]
        %v2277 = vld [vmem:[%s988 + $0xf8] sm:$0xff]
        %v2278 = vld [vmem:[%s988 + $0x100] sm:$0xff]
        %v2279 = vld [vmem:[%s988 + $0x108] sm:$0xff]
        %v2280 = vld [vmem:[%s988 + $0x110] sm:$0xff]
        %v2281 = vld [vmem:[%s988 + $0x118] sm:$0xff]
        %v2282 = vld [vmem:[%s988 + $0x120] sm:$0xff]
        %v2283 = vld [vmem:[%s988 + $0x128] sm:$0xff]
        %v2284 = vld [vmem:[%s988 + $0x130] sm:$0xff]
        %v2285 = vld [vmem:[%s988 + $0x138] sm:$0xff]
        %v2286 = vld [vmem:[%s988 + $0x140] sm:$0xff]
        %v2287 = vld [vmem:[%s988 + $0x148] sm:$0xff]
        %v2288 = vld [vmem:[%s988 + $0x150] sm:$0xff]
        %v2289 = vld [vmem:[%s988 + $0x158] sm:$0xff]
        %v2290 = vld [vmem:[%s988 + $0x160] sm:$0xff]
        %v2291 = vld [vmem:[%s988 + $0x168] sm:$0xff]
        %v2292 = vld [vmem:[%s988 + $0x170] sm:$0xff]
        %v2293 = vld [vmem:[%s988 + $0x178] sm:$0xff]
        %v2294 = vld [vmem:[%s988 + $0x180] sm:$0xff]
        %v2295 = vld [vmem:[%s988 + $0x188] sm:$0xff]
        %v2296 = vld [vmem:[%s988 + $0x190] sm:$0xff]
        %v2297 = vld [vmem:[%s988 + $0x198] sm:$0xff]
        %v2298 = vld [vmem:[%s988 + $0x1a0] sm:$0xff]
        %v2299 = vld [vmem:[%s988 + $0x1a8] sm:$0xff]
        %v2300 = vld [vmem:[%s988 + $0x1b0] sm:$0xff]
        %v2301 = vld [vmem:[%s988 + $0x1b8] sm:$0xff]
        %v2302 = vld [vmem:[%s988 + $0x1c0] sm:$0xff]
        %v2303 = vld [vmem:[%s988 + $0x1c8] sm:$0xff]
        %v2304 = vld [vmem:[%s988 + $0x1d0] sm:$0xff]
        %v2305 = vld [vmem:[%s988 + $0x1d8] sm:$0xff]
        %v2306 = vld [vmem:[%s988 + $0x1e0] sm:$0xff]
        %v2307 = vld [vmem:[%s988 + $0x1e8] sm:$0xff]
        %v2308 = vld [vmem:[%s988 + $0x1f0] sm:$0xff]
        %v2309 = vld [vmem:[%s988 + $0x1f8] sm:$0xff]
        %v2310 = vld [vmem:[%s988 + $0x200] sm:$0xff]
        %v2311 = vld [vmem:[%s988 + $0x208] sm:$0xff]
        %v2312 = vld [vmem:[%s988 + $0x210] sm:$0xff]
        %v2313 = vld [vmem:[%s988 + $0x218] sm:$0xff]
        %v2314 = vld [vmem:[%s988 + $0x220] sm:$0xff]
        %v2315 = vld [vmem:[%s988 + $0x228] sm:$0xff]
        %v2316 = vld [vmem:[%s988 + $0x230] sm:$0xff]
        %v2317 = vld [vmem:[%s988 + $0x238] sm:$0xff]
        %v2318 = vld [vmem:[%s988 + $0x240] sm:$0xff]
        %v2319 = vld [vmem:[%s988 + $0x248] sm:$0xff]
        %v2320 = vld [vmem:[%s988 + $0x250] sm:$0xff]
        %v2321 = vld [vmem:[%s988 + $0x258] sm:$0xff]
        %v2322 = vld [vmem:[%s988 + $0x260] sm:$0xff]
        %v2323 = vld [vmem:[%s988 + $0x268] sm:$0xff]
        %v2324 = vld [vmem:[%s988 + $0x270] sm:$0xff]
        %v2325 = vld [vmem:[%s988 + $0x278] sm:$0xff]
        %v2326 = vld [vmem:[%s988 + $0x280] sm:$0xff]
        %v2327 = vld [vmem:[%s988 + $0x288] sm:$0xff]
        %v2328 = vld [vmem:[%s988 + $0x290] sm:$0xff]
        %v2329 = vld [vmem:[%s988 + $0x298] sm:$0xff]
        %v2330 = vld [vmem:[%s988 + $0x2a0] sm:$0xff]
        %v2331 = vld [vmem:[%s988 + $0x2a8] sm:$0xff]
        %v2332 = vld [vmem:[%s988 + $0x2b0] sm:$0xff]
        %v2333 = vld [vmem:[%s988 + $0x2b8] sm:$0xff]
        %v2334 = vld [vmem:[%s988 + $0x2c0] sm:$0xff]
        %v2335 = vld [vmem:[%s988 + $0x2c8] sm:$0xff]
        %v2336 = vld [vmem:[%s988 + $0x2d0] sm:$0xff]
        %v2337 = vld [vmem:[%s988 + $0x2d8] sm:$0xff]
        %v2338 = vld [vmem:[%s988 + $0x2e0] sm:$0xff]
        %v2339 = vld [vmem:[%s988 + $0x2e8] sm:$0xff]
        %v2340 = vld [vmem:[%s988 + $0x2f0] sm:$0xff]
        %v2341 = vld [vmem:[%s988 + $0x2f8] sm:$0xff]
        %v2342 = vld [vmem:[%s988 + $0x300] sm:$0xff]
        %v2343 = vld [vmem:[%s988 + $0x308] sm:$0xff]
        %v2344 = vld [vmem:[%s988 + $0x310] sm:$0xff]
        %v2345 = vld [vmem:[%s988 + $0x318] sm:$0xff]
        %v2346 = vld [vmem:[%s988 + $0x320] sm:$0xff]
        %v2347 = vld [vmem:[%s988 + $0x328] sm:$0xff]
        %v2348 = vld [vmem:[%s988 + $0x330] sm:$0xff]
        %v2349 = vld [vmem:[%s988 + $0x338] sm:$0xff]
        %v2350 = vld [vmem:[%s988 + $0x340] sm:$0xff]
        %v2351 = vld [vmem:[%s988 + $0x348] sm:$0xff]
        %v2352 = vld [vmem:[%s988 + $0x350] sm:$0xff]
        %v2353 = vld [vmem:[%s988 + $0x358] sm:$0xff]
        %v2354 = vld [vmem:[%s988 + $0x360] sm:$0xff]
        %v2355 = vld [vmem:[%s988 + $0x368] sm:$0xff]
        %v2356 = vld [vmem:[%s988 + $0x370] sm:$0xff]
        %v2357 = vld [vmem:[%s988 + $0x378] sm:$0xff]
        %v2358 = vld [vmem:[%s988 + $0x380] sm:$0xff]
        %v2359 = vld [vmem:[%s988 + $0x388] sm:$0xff]
        %v2360 = vld [vmem:[%s988 + $0x390] sm:$0xff]
        %v2361 = vld [vmem:[%s988 + $0x398] sm:$0xff]
        %v2362 = vld [vmem:[%s988 + $0x3a0] sm:$0xff]
        %v2363 = vld [vmem:[%s988 + $0x3a8] sm:$0xff]
        %v2364 = vld [vmem:[%s988 + $0x3b0] sm:$0xff]
        %v2365 = vld [vmem:[%s988 + $0x3b8] sm:$0xff]
        %v2366 = vld [vmem:[%s988 + $0x3c0] sm:$0xff]
        %v2367 = vld [vmem:[%s988 + $0x3c8] sm:$0xff]
        %v2368 = vld [vmem:[%s988 + $0x3d0] sm:$0xff]
        %v2369 = vld [vmem:[%s988 + $0x3d8] sm:$0xff]
        %v2370 = vld [vmem:[%s988 + $0x3e0] sm:$0xff]
        %v2371 = vld [vmem:[%s988 + $0x3e8] sm:$0xff]
        %v2372 = vld [vmem:[%s988 + $0x3f0] sm:$0xff]
        %v2373 = vld [vmem:[%s988 + $0x3f8] sm:$0xff]
        %v2374 = vld [vmem:[%s1252] sm:$0xf]
        %v2376 = vlaneseq
        %v2377 = vshrl.u32 %v2376, 7
        %v2378 = vsub.s32 0, %v2377
        %v2379 = vrot.slane %v2374, %v2378
        %v2380 = vlaneseq
        %v2381 = vshrl.u32 %v2380, 7
        %v2382 = vsub.s32 1, %v2381
        %v2383 = vrot.slane %v2374, %v2382
        %v2384 = vlaneseq
        %v2385 = vshrl.u32 %v2384, 7
        %v2386 = vsub.s32 2, %v2385
        %v2387 = vrot.slane %v2374, %v2386
        %v2388 = vlaneseq
        %v2389 = vshrl.u32 %v2388, 7
        %v2390 = vsub.s32 3, %v2389
        %v2391 = vrot.slane %v2374, %v2390
        %v2524 = vunpack.c.l.b16 %v2246
        %v2525 = vunpack.c.h.b16 %v2246
        %v2526 = vunpack.c.l.b16 %v2247
        %v2527 = vunpack.c.h.b16 %v2247
        %v2528 = vunpack.c.l.b16 %v2248
        %v2529 = vunpack.c.h.b16 %v2248
        %v2530 = vunpack.c.l.b16 %v2249
        %v2531 = vunpack.c.h.b16 %v2249
        %v2532 = vunpack.c.l.b16 %v2250
        %v2533 = vunpack.c.h.b16 %v2250
        %v2534 = vunpack.c.l.b16 %v2251
        %v2535 = vunpack.c.h.b16 %v2251
        %v2536 = vunpack.c.l.b16 %v2252
        %v2537 = vunpack.c.h.b16 %v2252
        %v2538 = vunpack.c.l.b16 %v2253
        %v2539 = vunpack.c.h.b16 %v2253
        %v2540 = vunpack.c.l.b16 %v2254
        %v2541 = vunpack.c.h.b16 %v2254
        %v2542 = vunpack.c.l.b16 %v2255
        %v2543 = vunpack.c.h.b16 %v2255
        %v2544 = vunpack.c.l.b16 %v2256
        %v2545 = vunpack.c.h.b16 %v2256
        %v2546 = vunpack.c.l.b16 %v2257
        %v2547 = vunpack.c.h.b16 %v2257
        %v2548 = vunpack.c.l.b16 %v2258
        %v2549 = vunpack.c.h.b16 %v2258
        %v2550 = vunpack.c.l.b16 %v2259
        %v2551 = vunpack.c.h.b16 %v2259
        %v2552 = vunpack.c.l.b16 %v2260
        %v2553 = vunpack.c.h.b16 %v2260
        %v2554 = vunpack.c.l.b16 %v2261
        %v2555 = vunpack.c.h.b16 %v2261
        %v2556 = vunpack.c.l.b16 %v2262
        %v2557 = vunpack.c.h.b16 %v2262
        %v2558 = vunpack.c.l.b16 %v2263
        %v2559 = vunpack.c.h.b16 %v2263
        %v2560 = vunpack.c.l.b16 %v2264
        %v2561 = vunpack.c.h.b16 %v2264
        %v2562 = vunpack.c.l.b16 %v2265
        %v2563 = vunpack.c.h.b16 %v2265
        %v2564 = vunpack.c.l.b16 %v2266
        %v2565 = vunpack.c.h.b16 %v2266
        %v2566 = vunpack.c.l.b16 %v2267
        %v2567 = vunpack.c.h.b16 %v2267
        %v2568 = vunpack.c.l.b16 %v2268
        %v2569 = vunpack.c.h.b16 %v2268
        %v2570 = vunpack.c.l.b16 %v2269
        %v2571 = vunpack.c.h.b16 %v2269
        %v2572 = vunpack.c.l.b16 %v2270
        %v2573 = vunpack.c.h.b16 %v2270
        %v2574 = vunpack.c.l.b16 %v2271
        %v2575 = vunpack.c.h.b16 %v2271
        %v2576 = vunpack.c.l.b16 %v2272
        %v2577 = vunpack.c.h.b16 %v2272
        %v2578 = vunpack.c.l.b16 %v2273
        %v2579 = vunpack.c.h.b16 %v2273
        %v2580 = vunpack.c.l.b16 %v2274
        %v2581 = vunpack.c.h.b16 %v2274
        %v2582 = vunpack.c.l.b16 %v2275
        %v2583 = vunpack.c.h.b16 %v2275
        %v2584 = vunpack.c.l.b16 %v2276
        %v2585 = vunpack.c.h.b16 %v2276
        %v2586 = vunpack.c.l.b16 %v2277
        %v2587 = vunpack.c.h.b16 %v2277
        %v2588 = vunpack.c.l.b16 %v2278
        %v2589 = vunpack.c.h.b16 %v2278
        %v2590 = vunpack.c.l.b16 %v2279
        %v2591 = vunpack.c.h.b16 %v2279
        %v2592 = vunpack.c.l.b16 %v2280
        %v2593 = vunpack.c.h.b16 %v2280
        %v2594 = vunpack.c.l.b16 %v2281
        %v2595 = vunpack.c.h.b16 %v2281
        %v2596 = vunpack.c.l.b16 %v2282
        %v2597 = vunpack.c.h.b16 %v2282
        %v2598 = vunpack.c.l.b16 %v2283
        %v2599 = vunpack.c.h.b16 %v2283
        %v2600 = vunpack.c.l.b16 %v2284
        %v2601 = vunpack.c.h.b16 %v2284
        %v2602 = vunpack.c.l.b16 %v2285
        %v2603 = vunpack.c.h.b16 %v2285
        %v2604 = vunpack.c.l.b16 %v2286
        %v2605 = vunpack.c.h.b16 %v2286
        %v2606 = vunpack.c.l.b16 %v2287
        %v2607 = vunpack.c.h.b16 %v2287
        %v2608 = vunpack.c.l.b16 %v2288
        %v2609 = vunpack.c.h.b16 %v2288
        %v2610 = vunpack.c.l.b16 %v2289
        %v2611 = vunpack.c.h.b16 %v2289
        %v2612 = vunpack.c.l.b16 %v2290
        %v2613 = vunpack.c.h.b16 %v2290
        %v2614 = vunpack.c.l.b16 %v2291
        %v2615 = vunpack.c.h.b16 %v2291
        %v2616 = vunpack.c.l.b16 %v2292
        %v2617 = vunpack.c.h.b16 %v2292
        %v2618 = vunpack.c.l.b16 %v2293
        %v2619 = vunpack.c.h.b16 %v2293
        %v2620 = vunpack.c.l.b16 %v2294
        %v2621 = vunpack.c.h.b16 %v2294
        %v2622 = vunpack.c.l.b16 %v2295
        %v2623 = vunpack.c.h.b16 %v2295
        %v2624 = vunpack.c.l.b16 %v2296
        %v2625 = vunpack.c.h.b16 %v2296
        %v2626 = vunpack.c.l.b16 %v2297
        %v2627 = vunpack.c.h.b16 %v2297
        %v2628 = vunpack.c.l.b16 %v2298
        %v2629 = vunpack.c.h.b16 %v2298
        %v2630 = vunpack.c.l.b16 %v2299
        %v2631 = vunpack.c.h.b16 %v2299
        %v2632 = vunpack.c.l.b16 %v2300
        %v2633 = vunpack.c.h.b16 %v2300
        %v2634 = vunpack.c.l.b16 %v2301
        %v2635 = vunpack.c.h.b16 %v2301
        %v2636 = vunpack.c.l.b16 %v2302
        %v2637 = vunpack.c.h.b16 %v2302
        %v2638 = vunpack.c.l.b16 %v2303
        %v2639 = vunpack.c.h.b16 %v2303
        %v2640 = vunpack.c.l.b16 %v2304
        %v2641 = vunpack.c.h.b16 %v2304
        %v2642 = vunpack.c.l.b16 %v2305
        %v2643 = vunpack.c.h.b16 %v2305
        %v2644 = vunpack.c.l.b16 %v2306
        %v2645 = vunpack.c.h.b16 %v2306
        %v2646 = vunpack.c.l.b16 %v2307
        %v2647 = vunpack.c.h.b16 %v2307
        %v2648 = vunpack.c.l.b16 %v2308
        %v2649 = vunpack.c.h.b16 %v2308
        %v2650 = vunpack.c.l.b16 %v2309
        %v2651 = vunpack.c.h.b16 %v2309
        %v2652 = vunpack.c.l.b16 %v2310
        %v2653 = vunpack.c.h.b16 %v2310
        %v2654 = vunpack.c.l.b16 %v2311
        %v2655 = vunpack.c.h.b16 %v2311
        %v2656 = vunpack.c.l.b16 %v2312
        %v2657 = vunpack.c.h.b16 %v2312
        %v2658 = vunpack.c.l.b16 %v2313
        %v2659 = vunpack.c.h.b16 %v2313
        %v2660 = vunpack.c.l.b16 %v2314
        %v2661 = vunpack.c.h.b16 %v2314
        %v2662 = vunpack.c.l.b16 %v2315
        %v2663 = vunpack.c.h.b16 %v2315
        %v2664 = vunpack.c.l.b16 %v2316
        %v2665 = vunpack.c.h.b16 %v2316
        %v2666 = vunpack.c.l.b16 %v2317
        %v2667 = vunpack.c.h.b16 %v2317
        %v2668 = vunpack.c.l.b16 %v2318
        %v2669 = vunpack.c.h.b16 %v2318
        %v2670 = vunpack.c.l.b16 %v2319
        %v2671 = vunpack.c.h.b16 %v2319
        %v2672 = vunpack.c.l.b16 %v2320
        %v2673 = vunpack.c.h.b16 %v2320
        %v2674 = vunpack.c.l.b16 %v2321
        %v2675 = vunpack.c.h.b16 %v2321
        %v2676 = vunpack.c.l.b16 %v2322
        %v2677 = vunpack.c.h.b16 %v2322
        %v2678 = vunpack.c.l.b16 %v2323
        %v2679 = vunpack.c.h.b16 %v2323
        %v2680 = vunpack.c.l.b16 %v2324
        %v2681 = vunpack.c.h.b16 %v2324
        %v2682 = vunpack.c.l.b16 %v2325
        %v2683 = vunpack.c.h.b16 %v2325
        %v2684 = vunpack.c.l.b16 %v2326
        %v2685 = vunpack.c.h.b16 %v2326
        %v2686 = vunpack.c.l.b16 %v2327
        %v2687 = vunpack.c.h.b16 %v2327
        %v2688 = vunpack.c.l.b16 %v2328
        %v2689 = vunpack.c.h.b16 %v2328
        %v2690 = vunpack.c.l.b16 %v2329
        %v2691 = vunpack.c.h.b16 %v2329
        %v2692 = vunpack.c.l.b16 %v2330
        %v2693 = vunpack.c.h.b16 %v2330
        %v2694 = vunpack.c.l.b16 %v2331
        %v2695 = vunpack.c.h.b16 %v2331
        %v2696 = vunpack.c.l.b16 %v2332
        %v2697 = vunpack.c.h.b16 %v2332
        %v2698 = vunpack.c.l.b16 %v2333
        %v2699 = vunpack.c.h.b16 %v2333
        %v2700 = vunpack.c.l.b16 %v2334
        %v2701 = vunpack.c.h.b16 %v2334
        %v2702 = vunpack.c.l.b16 %v2335
        %v2703 = vunpack.c.h.b16 %v2335
        %v2704 = vunpack.c.l.b16 %v2336
        %v2705 = vunpack.c.h.b16 %v2336
        %v2706 = vunpack.c.l.b16 %v2337
        %v2707 = vunpack.c.h.b16 %v2337
        %v2708 = vunpack.c.l.b16 %v2338
        %v2709 = vunpack.c.h.b16 %v2338
        %v2710 = vunpack.c.l.b16 %v2339
        %v2711 = vunpack.c.h.b16 %v2339
        %v2712 = vunpack.c.l.b16 %v2340
        %v2713 = vunpack.c.h.b16 %v2340
        %v2714 = vunpack.c.l.b16 %v2341
        %v2715 = vunpack.c.h.b16 %v2341
        %v2716 = vunpack.c.l.b16 %v2342
        %v2717 = vunpack.c.h.b16 %v2342
        %v2718 = vunpack.c.l.b16 %v2343
        %v2719 = vunpack.c.h.b16 %v2343
        %v2720 = vunpack.c.l.b16 %v2344
        %v2721 = vunpack.c.h.b16 %v2344
        %v2722 = vunpack.c.l.b16 %v2345
        %v2723 = vunpack.c.h.b16 %v2345
        %v2724 = vunpack.c.l.b16 %v2346
        %v2725 = vunpack.c.h.b16 %v2346
        %v2726 = vunpack.c.l.b16 %v2347
        %v2727 = vunpack.c.h.b16 %v2347
        %v2728 = vunpack.c.l.b16 %v2348
        %v2729 = vunpack.c.h.b16 %v2348
        %v2730 = vunpack.c.l.b16 %v2349
        %v2731 = vunpack.c.h.b16 %v2349
        %v2732 = vunpack.c.l.b16 %v2350
        %v2733 = vunpack.c.h.b16 %v2350
        %v2734 = vunpack.c.l.b16 %v2351
        %v2735 = vunpack.c.h.b16 %v2351
        %v2736 = vunpack.c.l.b16 %v2352
        %v2737 = vunpack.c.h.b16 %v2352
        %v2738 = vunpack.c.l.b16 %v2353
        %v2739 = vunpack.c.h.b16 %v2353
        %v2740 = vunpack.c.l.b16 %v2354
        %v2741 = vunpack.c.h.b16 %v2354
        %v2742 = vunpack.c.l.b16 %v2355
        %v2743 = vunpack.c.h.b16 %v2355
        %v2744 = vunpack.c.l.b16 %v2356
        %v2745 = vunpack.c.h.b16 %v2356
        %v2746 = vunpack.c.l.b16 %v2357
        %v2747 = vunpack.c.h.b16 %v2357
        %v2748 = vunpack.c.l.b16 %v2358
        %v2749 = vunpack.c.h.b16 %v2358
        %v2750 = vunpack.c.l.b16 %v2359
        %v2751 = vunpack.c.h.b16 %v2359
        %v2752 = vunpack.c.l.b16 %v2360
        %v2753 = vunpack.c.h.b16 %v2360
        %v2754 = vunpack.c.l.b16 %v2361
        %v2755 = vunpack.c.h.b16 %v2361
        %v2756 = vunpack.c.l.b16 %v2362
        %v2757 = vunpack.c.h.b16 %v2362
        %v2758 = vunpack.c.l.b16 %v2363
        %v2759 = vunpack.c.h.b16 %v2363
        %v2760 = vunpack.c.l.b16 %v2364
        %v2761 = vunpack.c.h.b16 %v2364
        %v2762 = vunpack.c.l.b16 %v2365
        %v2763 = vunpack.c.h.b16 %v2365
        %v2764 = vunpack.c.l.b16 %v2366
        %v2765 = vunpack.c.h.b16 %v2366
        %v2766 = vunpack.c.l.b16 %v2367
        %v2767 = vunpack.c.h.b16 %v2367
        %v2768 = vunpack.c.l.b16 %v2368
        %v2769 = vunpack.c.h.b16 %v2368
        %v2770 = vunpack.c.l.b16 %v2369
        %v2771 = vunpack.c.h.b16 %v2369
        %v2772 = vunpack.c.l.b16 %v2370
        %v2773 = vunpack.c.h.b16 %v2370
        %v2774 = vunpack.c.l.b16 %v2371
        %v2775 = vunpack.c.h.b16 %v2371
        %v2776 = vunpack.c.l.b16 %v2372
        %v2777 = vunpack.c.h.b16 %v2372
        %v2778 = vunpack.c.l.b16 %v2373
        %v2779 = vunpack.c.h.b16 %v2373
        %v2780 = vpack.c.b16 %v2528, %v2524
        %v2781 = vpack.c.b16 %v2529, %v2525
        %v2782 = vpack.c.b16 %v2530, %v2526
        %v2783 = vpack.c.b16 %v2531, %v2527
        %v2784 = vpack.c.b16 %v2536, %v2532
        %v2785 = vpack.c.b16 %v2537, %v2533
        %v2786 = vpack.c.b16 %v2538, %v2534
        %v2787 = vpack.c.b16 %v2539, %v2535
        %v2788 = vpack.c.b16 %v2544, %v2540
        %v2789 = vpack.c.b16 %v2545, %v2541
        %v2790 = vpack.c.b16 %v2546, %v2542
        %v2791 = vpack.c.b16 %v2547, %v2543
        %v2792 = vpack.c.b16 %v2552, %v2548
        %v2793 = vpack.c.b16 %v2553, %v2549
        %v2794 = vpack.c.b16 %v2554, %v2550
        %v2795 = vpack.c.b16 %v2555, %v2551
        %v2796 = vpack.c.b16 %v2560, %v2556
        %v2797 = vpack.c.b16 %v2561, %v2557
        %v2798 = vpack.c.b16 %v2562, %v2558
        %v2799 = vpack.c.b16 %v2563, %v2559
        %v2800 = vpack.c.b16 %v2568, %v2564
        %v2801 = vpack.c.b16 %v2569, %v2565
        %v2802 = vpack.c.b16 %v2570, %v2566
        %v2803 = vpack.c.b16 %v2571, %v2567
        %v2804 = vpack.c.b16 %v2576, %v2572
        %v2805 = vpack.c.b16 %v2577, %v2573
        %v2806 = vpack.c.b16 %v2578, %v2574
        %v2807 = vpack.c.b16 %v2579, %v2575
        %v2808 = vpack.c.b16 %v2584, %v2580
        %v2809 = vpack.c.b16 %v2585, %v2581
        %v2810 = vpack.c.b16 %v2586, %v2582
        %v2811 = vpack.c.b16 %v2587, %v2583
        %v2812 = vpack.c.b16 %v2592, %v2588
        %v2813 = vpack.c.b16 %v2593, %v2589
        %v2814 = vpack.c.b16 %v2594, %v2590
        %v2815 = vpack.c.b16 %v2595, %v2591
        %v2816 = vpack.c.b16 %v2600, %v2596
        %v2817 = vpack.c.b16 %v2601, %v2597
        %v2818 = vpack.c.b16 %v2602, %v2598
        %v2819 = vpack.c.b16 %v2603, %v2599
        %v2820 = vpack.c.b16 %v2608, %v2604
        %v2821 = vpack.c.b16 %v2609, %v2605
        %v2822 = vpack.c.b16 %v2610, %v2606
        %v2823 = vpack.c.b16 %v2611, %v2607
        %v2824 = vpack.c.b16 %v2616, %v2612
        %v2825 = vpack.c.b16 %v2617, %v2613
        %v2826 = vpack.c.b16 %v2618, %v2614
        %v2827 = vpack.c.b16 %v2619, %v2615
        %v2828 = vpack.c.b16 %v2624, %v2620
        %v2829 = vpack.c.b16 %v2625, %v2621
        %v2830 = vpack.c.b16 %v2626, %v2622
        %v2831 = vpack.c.b16 %v2627, %v2623
        %v2832 = vpack.c.b16 %v2632, %v2628
        %v2833 = vpack.c.b16 %v2633, %v2629
        %v2834 = vpack.c.b16 %v2634, %v2630
        %v2835 = vpack.c.b16 %v2635, %v2631
        %v2836 = vpack.c.b16 %v2640, %v2636
        %v2837 = vpack.c.b16 %v2641, %v2637
        %v2838 = vpack.c.b16 %v2642, %v2638
        %v2839 = vpack.c.b16 %v2643, %v2639
        %v2840 = vpack.c.b16 %v2648, %v2644
        %v2841 = vpack.c.b16 %v2649, %v2645
        %v2842 = vpack.c.b16 %v2650, %v2646
        %v2843 = vpack.c.b16 %v2651, %v2647
        %v2844 = vpack.c.b16 %v2656, %v2652
        %v2845 = vpack.c.b16 %v2657, %v2653
        %v2846 = vpack.c.b16 %v2658, %v2654
        %v2847 = vpack.c.b16 %v2659, %v2655
        %v2848 = vpack.c.b16 %v2664, %v2660
        %v2849 = vpack.c.b16 %v2665, %v2661
        %v2850 = vpack.c.b16 %v2666, %v2662
        %v2851 = vpack.c.b16 %v2667, %v2663
        %v2852 = vpack.c.b16 %v2672, %v2668
        %v2853 = vpack.c.b16 %v2673, %v2669
        %v2854 = vpack.c.b16 %v2674, %v2670
        %v2855 = vpack.c.b16 %v2675, %v2671
        %v2856 = vpack.c.b16 %v2680, %v2676
        %v2857 = vpack.c.b16 %v2681, %v2677
        %v2858 = vpack.c.b16 %v2682, %v2678
        %v2859 = vpack.c.b16 %v2683, %v2679
        %v2860 = vpack.c.b16 %v2688, %v2684
        %v2861 = vpack.c.b16 %v2689, %v2685
        %v2862 = vpack.c.b16 %v2690, %v2686
        %v2863 = vpack.c.b16 %v2691, %v2687
        %v2864 = vpack.c.b16 %v2696, %v2692
        %v2865 = vpack.c.b16 %v2697, %v2693
        %v2866 = vpack.c.b16 %v2698, %v2694
        %v2867 = vpack.c.b16 %v2699, %v2695
        %v2868 = vpack.c.b16 %v2704, %v2700
        %v2869 = vpack.c.b16 %v2705, %v2701
        %v2870 = vpack.c.b16 %v2706, %v2702
        %v2871 = vpack.c.b16 %v2707, %v2703
        %v2872 = vpack.c.b16 %v2712, %v2708
        %v2873 = vpack.c.b16 %v2713, %v2709
        %v2874 = vpack.c.b16 %v2714, %v2710
        %v2875 = vpack.c.b16 %v2715, %v2711
        %v2876 = vpack.c.b16 %v2720, %v2716
        %v2877 = vpack.c.b16 %v2721, %v2717
        %v2878 = vpack.c.b16 %v2722, %v2718
        %v2879 = vpack.c.b16 %v2723, %v2719
        %v2880 = vpack.c.b16 %v2728, %v2724
        %v2881 = vpack.c.b16 %v2729, %v2725
        %v2882 = vpack.c.b16 %v2730, %v2726
        %v2883 = vpack.c.b16 %v2731, %v2727
        %v2884 = vpack.c.b16 %v2736, %v2732
        %v2885 = vpack.c.b16 %v2737, %v2733
        %v2886 = vpack.c.b16 %v2738, %v2734
        %v2887 = vpack.c.b16 %v2739, %v2735
        %v2888 = vpack.c.b16 %v2744, %v2740
        %v2889 = vpack.c.b16 %v2745, %v2741
        %v2890 = vpack.c.b16 %v2746, %v2742
        %v2891 = vpack.c.b16 %v2747, %v2743
        %v2892 = vpack.c.b16 %v2752, %v2748
        %v2893 = vpack.c.b16 %v2753, %v2749
        %v2894 = vpack.c.b16 %v2754, %v2750
        %v2895 = vpack.c.b16 %v2755, %v2751
        %v2896 = vpack.c.b16 %v2760, %v2756
        %v2897 = vpack.c.b16 %v2761, %v2757
        %v2898 = vpack.c.b16 %v2762, %v2758
        %v2899 = vpack.c.b16 %v2763, %v2759
        %v2900 = vpack.c.b16 %v2768, %v2764
        %v2901 = vpack.c.b16 %v2769, %v2765
        %v2902 = vpack.c.b16 %v2770, %v2766
        %v2903 = vpack.c.b16 %v2771, %v2767
        %v2904 = vpack.c.b16 %v2776, %v2772
        %v2905 = vpack.c.b16 %v2777, %v2773
        %v2906 = vpack.c.b16 %v2778, %v2774
        %v2907 = vpack.c.b16 %v2779, %v2775
        %3036 = vmatprep.subr.bf16.mxu0 %v2781
        %3037 = vmatpush1.bf16.msra.mxu0 %v2780
        %3038 = vmatprep.subr.bf16.mxu0 %v2785
        %3039 = vmatpush1.bf16.msra.mxu0 %v2784
        %3040 = vmatprep.subr.bf16.mxu0 %v2789
        %3041 = vmatpush1.bf16.msra.mxu0 %v2788
        %3042 = vmatprep.subr.bf16.mxu0 %v2793
        %3043 = vmatpush1.bf16.msra.mxu0 %v2792
        %3044 = vmatprep.subr.bf16.mxu0 %v2797
        %3045 = vmatpush1.bf16.msra.mxu0 %v2796
        %3046 = vmatprep.subr.bf16.mxu0 %v2801
        %3047 = vmatpush1.bf16.msra.mxu0 %v2800
        %3048 = vmatprep.subr.bf16.mxu0 %v2805
        %3049 = vmatpush1.bf16.msra.mxu0 %v2804
        %3050 = vmatprep.subr.bf16.mxu0 %v2809
        %3051 = vmatpush1.bf16.msra.mxu0 %v2808
        %3052 = vmatprep.subr.bf16.mxu0 %v2813
        %3053 = vmatpush1.bf16.msra.mxu0 %v2812
        %3054 = vmatprep.subr.bf16.mxu0 %v2817
        %3055 = vmatpush1.bf16.msra.mxu0 %v2816
        %3056 = vmatprep.subr.bf16.mxu0 %v2821
        %3057 = vmatpush1.bf16.msra.mxu0 %v2820
        %3058 = vmatprep.subr.bf16.mxu0 %v2825
        %3059 = vmatpush1.bf16.msra.mxu0 %v2824
        %3060 = vmatprep.subr.bf16.mxu0 %v2829
        %3061 = vmatpush1.bf16.msra.mxu0 %v2828
        %3062 = vmatprep.subr.bf16.mxu0 %v2833
        %3063 = vmatpush1.bf16.msra.mxu0 %v2832
        %3064 = vmatprep.subr.bf16.mxu0 %v2837
        %3065 = vmatpush1.bf16.msra.mxu0 %v2836
        %3066 = vmatprep.subr.bf16.mxu0 %v2841
        %3067 = vmatpush1.bf16.msra.mxu0 %v2840
        %3068 = vmatprep.mubr.bf16.mxu0 %v2243
        %3069 = vmatmul.mubr.bf16.gmra.mrb[0].mxu0 %v2242
        %v3070 = vpop.f32.mrb[0].mxu0
        %v3071 = vadd.f32 %v2379, %v3070
        %v3072 = vpop.f32.mrb[0].mxu0
        %v3073 = vadd.f32 %v2383, %v3072
        %v3074 = vpop.f32.mrb[0].mxu0
        %v3075 = vadd.f32 %v2379, %v3074
        %v3076 = vpop.f32.mrb[0].mxu0
        %v3077 = vadd.f32 %v2383, %v3076
        %3078 = vdwg.mxu0
        %3079 = vmatprep.subr.bf16.mxu0 %v2845
        %3080 = vmatpush1.bf16.msra.mxu0 %v2844
        %3081 = vmatprep.subr.bf16.mxu0 %v2849
        %3082 = vmatpush1.bf16.msra.mxu0 %v2848
        %3083 = vmatprep.subr.bf16.mxu0 %v2853
        %3084 = vmatpush1.bf16.msra.mxu0 %v2852
        %3085 = vmatprep.subr.bf16.mxu0 %v2857
        %3086 = vmatpush1.bf16.msra.mxu0 %v2856
        %3087 = vmatprep.subr.bf16.mxu0 %v2861
        %3088 = vmatpush1.bf16.msra.mxu0 %v2860
        %3089 = vmatprep.subr.bf16.mxu0 %v2865
        %3090 = vmatpush1.bf16.msra.mxu0 %v2864
        %3091 = vmatprep.subr.bf16.mxu0 %v2869
        %3092 = vmatpush1.bf16.msra.mxu0 %v2868
        %3093 = vmatprep.subr.bf16.mxu0 %v2873
        %3094 = vmatpush1.bf16.msra.mxu0 %v2872
        %3095 = vmatprep.subr.bf16.mxu0 %v2877
        %3096 = vmatpush1.bf16.msra.mxu0 %v2876
        %3097 = vmatprep.subr.bf16.mxu0 %v2881
        %3098 = vmatpush1.bf16.msra.mxu0 %v2880
        %3099 = vmatprep.subr.bf16.mxu0 %v2885
        %3100 = vmatpush1.bf16.msra.mxu0 %v2884
        %3101 = vmatprep.subr.bf16.mxu0 %v2889
        %3102 = vmatpush1.bf16.msra.mxu0 %v2888
        %3103 = vmatprep.subr.bf16.mxu0 %v2893
        %3104 = vmatpush1.bf16.msra.mxu0 %v2892
        %3105 = vmatprep.subr.bf16.mxu0 %v2897
        %3106 = vmatpush1.bf16.msra.mxu0 %v2896
        %3107 = vmatprep.subr.bf16.mxu0 %v2901
        %3108 = vmatpush1.bf16.msra.mxu0 %v2900
        %3109 = vmatprep.subr.bf16.mxu0 %v2905
        %3110 = vmatpush1.bf16.msra.mxu0 %v2904
        %3111 = vmatprep.mubr.bf16.mxu0 %v2245
        %3112 = vmatmul.mubr.bf16.gmra.mrb[0].mxu0 %v2244
        %v3113 = vpop.f32.mrb[0].mxu0
        %v3114 = vadd.f32 %v3071, %v3113
        %v3115 = vpop.f32.mrb[0].mxu0
        %v3116 = vadd.f32 %v3073, %v3115
        %v3117 = vpop.f32.mrb[0].mxu0
        %v3118 = vadd.f32 %v3075, %v3117
        %v3119 = vpop.f32.mrb[0].mxu0
        %v3120 = vadd.f32 %v3077, %v3119
        %3121 = vdwg.mxu0
        %3122 = vmatprep.subr.bf16.mxu0 %v2783
        %3123 = vmatpush1.bf16.msra.mxu0 %v2782
        %3124 = vmatprep.subr.bf16.mxu0 %v2787
        %3125 = vmatpush1.bf16.msra.mxu0 %v2786
        %3126 = vmatprep.subr.bf16.mxu0 %v2791
        %3127 = vmatpush1.bf16.msra.mxu0 %v2790
        %3128 = vmatprep.subr.bf16.mxu0 %v2795
        %3129 = vmatpush1.bf16.msra.mxu0 %v2794
        %3130 = vmatprep.subr.bf16.mxu0 %v2799
        %3131 = vmatpush1.bf16.msra.mxu0 %v2798
        %3132 = vmatprep.subr.bf16.mxu0 %v2803
        %3133 = vmatpush1.bf16.msra.mxu0 %v2802
        %3134 = vmatprep.subr.bf16.mxu0 %v2807
        %3135 = vmatpush1.bf16.msra.mxu0 %v2806
        %3136 = vmatprep.subr.bf16.mxu0 %v2811
        %3137 = vmatpush1.bf16.msra.mxu0 %v2810
        %3138 = vmatprep.subr.bf16.mxu0 %v2815
        %3139 = vmatpush1.bf16.msra.mxu0 %v2814
        %3140 = vmatprep.subr.bf16.mxu0 %v2819
        %3141 = vmatpush1.bf16.msra.mxu0 %v2818
        %3142 = vmatprep.subr.bf16.mxu0 %v2823
        %3143 = vmatpush1.bf16.msra.mxu0 %v2822
        %3144 = vmatprep.subr.bf16.mxu0 %v2827
        %3145 = vmatpush1.bf16.msra.mxu0 %v2826
        %3146 = vmatprep.subr.bf16.mxu0 %v2831
        %3147 = vmatpush1.bf16.msra.mxu0 %v2830
        %3148 = vmatprep.subr.bf16.mxu0 %v2835
        %3149 = vmatpush1.bf16.msra.mxu0 %v2834
        %3150 = vmatprep.subr.bf16.mxu0 %v2839
        %3151 = vmatpush1.bf16.msra.mxu0 %v2838
        %3152 = vmatprep.subr.bf16.mxu0 %v2843
        %3153 = vmatpush1.bf16.msra.mxu0 %v2842
        %3154 = vmatprep.mubr.bf16.mxu0 %v2243
        %3155 = vmatmul.mubr.bf16.gmra.mrb[0].mxu0 %v2242
        %v3156 = vpop.f32.mrb[0].mxu0
        %v3157 = vadd.f32 %v2387, %v3156
        %v3158 = vpop.f32.mrb[0].mxu0
        %v3159 = vadd.f32 %v2391, %v3158
        %v3160 = vpop.f32.mrb[0].mxu0
        %v3161 = vadd.f32 %v2387, %v3160
        %v3162 = vpop.f32.mrb[0].mxu0
        %v3163 = vadd.f32 %v2391, %v3162
        %3164 = vdwg.mxu0
        %3165 = vmatprep.subr.bf16.mxu0 %v2847
        %3166 = vmatpush1.bf16.msra.mxu0 %v2846
        %3167 = vmatprep.subr.bf16.mxu0 %v2851
        %3168 = vmatpush1.bf16.msra.mxu0 %v2850
        %3169 = vmatprep.subr.bf16.mxu0 %v2855
        %3170 = vmatpush1.bf16.msra.mxu0 %v2854
        %3171 = vmatprep.subr.bf16.mxu0 %v2859
        %3172 = vmatpush1.bf16.msra.mxu0 %v2858
        %3173 = vmatprep.subr.bf16.mxu0 %v2863
        %3174 = vmatpush1.bf16.msra.mxu0 %v2862
        %3175 = vmatprep.subr.bf16.mxu0 %v2867
        %3176 = vmatpush1.bf16.msra.mxu0 %v2866
        %3177 = vmatprep.subr.bf16.mxu0 %v2871
        %3178 = vmatpush1.bf16.msra.mxu0 %v2870
        %3179 = vmatprep.subr.bf16.mxu0 %v2875
        %3180 = vmatpush1.bf16.msra.mxu0 %v2874
        %3181 = vmatprep.subr.bf16.mxu0 %v2879
        %3182 = vmatpush1.bf16.msra.mxu0 %v2878
        %3183 = vmatprep.subr.bf16.mxu0 %v2883
        %3184 = vmatpush1.bf16.msra.mxu0 %v2882
        %3185 = vmatprep.subr.bf16.mxu0 %v2887
        %3186 = vmatpush1.bf16.msra.mxu0 %v2886
        %3187 = vmatprep.subr.bf16.mxu0 %v2891
        %3188 = vmatpush1.bf16.msra.mxu0 %v2890
        %3189 = vmatprep.subr.bf16.mxu0 %v2895
        %3190 = vmatpush1.bf16.msra.mxu0 %v2894
        %3191 = vmatprep.subr.bf16.mxu0 %v2899
        %3192 = vmatpush1.bf16.msra.mxu0 %v2898
        %3193 = vmatprep.subr.bf16.mxu0 %v2903
        %3194 = vmatpush1.bf16.msra.mxu0 %v2902
        %3195 = vmatprep.subr.bf16.mxu0 %v2907
        %3196 = vmatpush1.bf16.msra.mxu0 %v2906
        %3197 = vmatprep.mubr.bf16.mxu0 %v2245
        %3198 = vmatmul.mubr.bf16.gmra.mrb[0].mxu0 %v2244
        %v3199 = vpop.f32.mrb[0].mxu0
        %v3200 = vadd.f32 %v3157, %v3199
        %v3201 = vpop.f32.mrb[0].mxu0
        %v3202 = vadd.f32 %v3159, %v3201
        %v3203 = vpop.f32.mrb[0].mxu0
        %v3204 = vadd.f32 %v3161, %v3203
        %v3205 = vpop.f32.mrb[0].mxu0
        %v3206 = vadd.f32 %v3163, %v3205
        %3207 = vdwg.mxu0
        %v3208 = vxor.u32 %v3114, 2147483648
        %v3209 = vxor.u32 %v3116, 2147483648
        %v3210 = vxor.u32 %v3200, 2147483648
        %v3211 = vxor.u32 %v3202, 2147483648
        %v3212 = vxor.u32 %v3118, 2147483648
        %v3213 = vxor.u32 %v3120, 2147483648
        %v3214 = vxor.u32 %v3204, 2147483648
        %v3215 = vxor.u32 %v3206, 2147483648
        %v3216 = vmul.f32 %v3208, 1.442695
        %v3217 = vpow.pop %v3216
        %v3218 = vmul.f32 %v3209, 1.442695
        %v3219 = vpow.pop %v3218
        %v3220 = vmul.f32 %v3210, 1.442695
        %v3221 = vpow.pop %v3220
        %v3222 = vmul.f32 %v3211, 1.442695
        %v3223 = vpow.pop %v3222
        %v3224 = vmul.f32 %v3212, 1.442695
        %v3225 = vpow.pop %v3224
        %v3226 = vmul.f32 %v3213, 1.442695
        %v3227 = vpow.pop %v3226
        %v3228 = vmul.f32 %v3214, 1.442695
        %v3229 = vpow.pop %v3228
        %v3230 = vmul.f32 %v3215, 1.442695
        %v3231 = vpow.pop %v3230
        %v3232 = vadd.f32 %v3217, 1.0
        %v3233 = vadd.f32 %v3219, 1.0
        %v3234 = vadd.f32 %v3221, 1.0
        %v3235 = vadd.f32 %v3223, 1.0
        %v3236 = vadd.f32 %v3225, 1.0
        %v3237 = vadd.f32 %v3227, 1.0
        %v3238 = vadd.f32 %v3229, 1.0
        %v3239 = vadd.f32 %v3231, 1.0
        %v3240 = vrcp.pop %v3232
        %v3241 = vmul.f32 1.0, %v3240
        %v3242 = vrcp.pop %v3233
        %v3243 = vmul.f32 1.0, %v3242
        %v3244 = vrcp.pop %v3234
        %v3245 = vmul.f32 1.0, %v3244
        %v3246 = vrcp.pop %v3235
        %v3247 = vmul.f32 1.0, %v3246
        %v3248 = vrcp.pop %v3236
        %v3249 = vmul.f32 1.0, %v3248
        %v3250 = vrcp.pop %v3237
        %v3251 = vmul.f32 1.0, %v3250
        %v3252 = vrcp.pop %v3238
        %v3253 = vmul.f32 1.0, %v3252
        %v3254 = vrcp.pop %v3239
        %v3255 = vmul.f32 1.0, %v3254
        %v3258 = vlaneseq
        %v3259 = vshrl.u32 %v3258, 7
        %v3260 = vsub.s32 0, %v3259
        %v3261 = vrot.slane %v1291, %v3260
        %v3262 = vlaneseq
        %v3263 = vshrl.u32 %v3262, 7
        %v3264 = vsub.s32 1, %v3263
        %v3265 = vrot.slane %v1291, %v3264
        %v3266 = vlaneseq
        %v3267 = vshrl.u32 %v3266, 7
        %v3268 = vsub.s32 2, %v3267
        %v3269 = vrot.slane %v1291, %v3268
        %v3270 = vlaneseq
        %v3271 = vshrl.u32 %v3270, 7
        %v3272 = vsub.s32 3, %v3271
        %v3273 = vrot.slane %v1291, %v3272
        %v3274 = vlaneseq
        %v3275 = vshrl.u32 %v3274, 7
        %v3276 = vsub.s32 0, %v3275
        %v3277 = vrot.slane %v1292, %v3276
        %v3278 = vlaneseq
        %v3279 = vshrl.u32 %v3278, 7
        %v3280 = vsub.s32 1, %v3279
        %v3281 = vrot.slane %v1292, %v3280
        %v3282 = vlaneseq
        %v3283 = vshrl.u32 %v3282, 7
        %v3284 = vsub.s32 2, %v3283
        %v3285 = vrot.slane %v1292, %v3284
        %v3286 = vlaneseq
        %v3287 = vshrl.u32 %v3286, 7
        %v3288 = vsub.s32 3, %v3287
        %v3289 = vrot.slane %v1292, %v3288
        %v3298 = vmul.f32 %v1293, %v3261
        %v3299 = vmul.f32 %v1294, %v3265
        %v3300 = vmul.f32 %v1295, %v3269
        %v3301 = vmul.f32 %v1296, %v3273
        %v3302 = vmul.f32 %v1297, %v3277
        %v3303 = vmul.f32 %v1298, %v3281
        %v3304 = vmul.f32 %v1299, %v3285
        %v3305 = vmul.f32 %v1300, %v3289
        %v3306 = vadd.f32 %v3298, %v3241
        %v3307 = vadd.f32 %v3299, %v3243
        %v3308 = vadd.f32 %v3300, %v3245
        %v3309 = vadd.f32 %v3301, %v3247
        %v3310 = vadd.f32 %v3302, %v3249
        %v3311 = vadd.f32 %v3303, %v3251
        %v3312 = vadd.f32 %v3304, %v3253
        %v3313 = vadd.f32 %v3305, %v3255
        %v3314 = vadd.f32 %v3306, %v3307
        %v3315 = vadd.f32 %v3314, %v3308
        %v3316 = vadd.f32 %v3315, %v3309
        %3317 = vadd.xlane.f32.xlu0 %v3316
        %v3318 = vpop.xlane.xlu0 %3317
        %v3319 = vadd.f32 %v3310, %v3311
        %v3320 = vadd.f32 %v3319, %v3312
        %v3321 = vadd.f32 %v3320, %v3313
        %3322 = vadd.xlane.f32.xlu0 %v3321
        %v3323 = vpop.xlane.xlu0 %3322
        %v3324 = vrcp.pop 512.0
        %v3325 = vmul.f32 %v3318, %v3324
        %v3326 = vmul.f32 %v3323, %v3324
        %v3327 = vsub.f32 %v3306, %v3325
        %v3328 = vsub.f32 %v3307, %v3325
        %v3329 = vsub.f32 %v3308, %v3325
        %v3330 = vsub.f32 %v3309, %v3325
        %v3331 = vsub.f32 %v3310, %v3326
        %v3332 = vsub.f32 %v3311, %v3326
        %v3333 = vsub.f32 %v3312, %v3326
        %v3334 = vsub.f32 %v3313, %v3326
        %v3335 = vmul.f32 %v3327, %v3327
        %v3336 = vmul.f32 %v3328, %v3328
        %v3337 = vmul.f32 %v3329, %v3329
        %v3338 = vmul.f32 %v3330, %v3330
        %v3339 = vmul.f32 %v3331, %v3331
        %v3340 = vmul.f32 %v3332, %v3332
        %v3341 = vmul.f32 %v3333, %v3333
        %v3342 = vmul.f32 %v3334, %v3334
        %v3343 = vadd.f32 %v3335, %v3336
        %v3344 = vadd.f32 %v3343, %v3337
        %v3345 = vadd.f32 %v3344, %v3338
        %3346 = vadd.xlane.f32.xlu0 %v3345
        %v3347 = vpop.xlane.xlu0 %3346
        %v3348 = vadd.f32 %v3339, %v3340
        %v3349 = vadd.f32 %v3348, %v3341
        %v3350 = vadd.f32 %v3349, %v3342
        %3351 = vadd.xlane.f32.xlu0 %v3350
        %v3352 = vpop.xlane.xlu0 %3351
        %v3353 = vmul.f32 %v3347, %v3324
        %v3354 = vmul.f32 %v3352, %v3324
        %v3355 = vadd.f32 %v3353, 1e-05
        %v3356 = vadd.f32 %v3354, 1e-05
        %v3357 = vrsqrt.pop %v3355
        %v3358 = vrsqrt.pop %v3356
        %v3359 = vmul.f32 %v3327, %v3357
        %v3360 = vmul.f32 %v3328, %v3357
        %v3361 = vmul.f32 %v3329, %v3357
        %v3362 = vmul.f32 %v3330, %v3357
        %v3363 = vmul.f32 %v3331, %v3358
        %v3364 = vmul.f32 %v3332, %v3358
        %v3365 = vmul.f32 %v3333, %v3358
        %v3366 = vmul.f32 %v3334, %v3358
        %v3367 = vld [vmem:[%s1256] sm:$0xf]
        %v3369 = vlaneseq
        %v3370 = vshrl.u32 %v3369, 7
        %v3371 = vsub.s32 0, %v3370
        %v3372 = vrot.slane %v3367, %v3371
        %v3373 = vlaneseq
        %v3374 = vshrl.u32 %v3373, 7
        %v3375 = vsub.s32 1, %v3374
        %v3376 = vrot.slane %v3367, %v3375
        %v3377 = vlaneseq
        %v3378 = vshrl.u32 %v3377, 7
        %v3379 = vsub.s32 2, %v3378
        %v3380 = vrot.slane %v3367, %v3379
        %v3381 = vlaneseq
        %v3382 = vshrl.u32 %v3381, 7
        %v3383 = vsub.s32 3, %v3382
        %v3384 = vrot.slane %v3367, %v3383
        %v3389 = vmul.f32 %v3359, %v3372
        %v3390 = vmul.f32 %v3360, %v3376
        %v3391 = vmul.f32 %v3361, %v3380
        %v3392 = vmul.f32 %v3362, %v3384
        %v3393 = vmul.f32 %v3363, %v3372
        %v3394 = vmul.f32 %v3364, %v3376
        %v3395 = vmul.f32 %v3365, %v3380
        %v3396 = vmul.f32 %v3366, %v3384
        %v3397 = vld [vmem:[%s1260] sm:$0xf]
        %v3399 = vlaneseq
        %v3400 = vshrl.u32 %v3399, 7
        %v3401 = vsub.s32 0, %v3400
        %v3402 = vrot.slane %v3397, %v3401
        %v3403 = vlaneseq
        %v3404 = vshrl.u32 %v3403, 7
        %v3405 = vsub.s32 1, %v3404
        %v3406 = vrot.slane %v3397, %v3405
        %v3407 = vlaneseq
        %v3408 = vshrl.u32 %v3407, 7
        %v3409 = vsub.s32 2, %v3408
        %v3410 = vrot.slane %v3397, %v3409
        %v3411 = vlaneseq
        %v3412 = vshrl.u32 %v3411, 7
        %v3413 = vsub.s32 3, %v3412
        %v3414 = vrot.slane %v3397, %v3413
        %v3419 = vadd.f32 %v3389, %v3402
        %v3420 = vadd.f32 %v3390, %v3406
        %v3421 = vadd.f32 %v3391, %v3410
        %v3422 = vadd.f32 %v3392, %v3414
        %v3423 = vadd.f32 %v3393, %v3402
        %v3424 = vadd.f32 %v3394, %v3406
        %v3425 = vadd.f32 %v3395, %v3410
        %v3426 = vadd.f32 %v3396, %v3414
        %v3427 = vpack.c.bf16 %v3423, %v3419
        %v3428 = vpack.c.bf16 %v3424, %v3420
        %v3429 = vpack.c.bf16 %v3425, %v3421
        %v3430 = vpack.c.bf16 %v3426, %v3422
        %v3431 = vld [vmem:[%s997] sm:$0xff]
        %v3432 = vld [vmem:[%s997 + $0x8] sm:$0xff]
        %v3433 = vld [vmem:[%s997 + $0x10] sm:$0xff]
        %v3434 = vld [vmem:[%s997 + $0x18] sm:$0xff]
        %v3435 = vld [vmem:[%s997 + $0x20] sm:$0xff]
        %v3436 = vld [vmem:[%s997 + $0x28] sm:$0xff]
        %v3437 = vld [vmem:[%s997 + $0x30] sm:$0xff]
        %v3438 = vld [vmem:[%s997 + $0x38] sm:$0xff]
        %v3439 = vld [vmem:[%s997 + $0x40] sm:$0xff]
        %v3440 = vld [vmem:[%s997 + $0x48] sm:$0xff]
        %v3441 = vld [vmem:[%s997 + $0x50] sm:$0xff]
        %v3442 = vld [vmem:[%s997 + $0x58] sm:$0xff]
        %v3443 = vld [vmem:[%s997 + $0x60] sm:$0xff]
        %v3444 = vld [vmem:[%s997 + $0x68] sm:$0xff]
        %v3445 = vld [vmem:[%s997 + $0x70] sm:$0xff]
        %v3446 = vld [vmem:[%s997 + $0x78] sm:$0xff]
        %v3447 = vld [vmem:[%s997 + $0x80] sm:$0xff]
        %v3448 = vld [vmem:[%s997 + $0x88] sm:$0xff]
        %v3449 = vld [vmem:[%s997 + $0x90] sm:$0xff]
        %v3450 = vld [vmem:[%s997 + $0x98] sm:$0xff]
        %v3451 = vld [vmem:[%s997 + $0xa0] sm:$0xff]
        %v3452 = vld [vmem:[%s997 + $0xa8] sm:$0xff]
        %v3453 = vld [vmem:[%s997 + $0xb0] sm:$0xff]
        %v3454 = vld [vmem:[%s997 + $0xb8] sm:$0xff]
        %v3455 = vld [vmem:[%s997 + $0xc0] sm:$0xff]
        %v3456 = vld [vmem:[%s997 + $0xc8] sm:$0xff]
        %v3457 = vld [vmem:[%s997 + $0xd0] sm:$0xff]
        %v3458 = vld [vmem:[%s997 + $0xd8] sm:$0xff]
        %v3459 = vld [vmem:[%s997 + $0xe0] sm:$0xff]
        %v3460 = vld [vmem:[%s997 + $0xe8] sm:$0xff]
        %v3461 = vld [vmem:[%s997 + $0xf0] sm:$0xff]
        %v3462 = vld [vmem:[%s997 + $0xf8] sm:$0xff]
        %v3463 = vld [vmem:[%s997 + $0x100] sm:$0xff]
        %v3464 = vld [vmem:[%s997 + $0x108] sm:$0xff]
        %v3465 = vld [vmem:[%s997 + $0x110] sm:$0xff]
        %v3466 = vld [vmem:[%s997 + $0x118] sm:$0xff]
        %v3467 = vld [vmem:[%s997 + $0x120] sm:$0xff]
        %v3468 = vld [vmem:[%s997 + $0x128] sm:$0xff]
        %v3469 = vld [vmem:[%s997 + $0x130] sm:$0xff]
        %v3470 = vld [vmem:[%s997 + $0x138] sm:$0xff]
        %v3471 = vld [vmem:[%s997 + $0x140] sm:$0xff]
        %v3472 = vld [vmem:[%s997 + $0x148] sm:$0xff]
        %v3473 = vld [vmem:[%s997 + $0x150] sm:$0xff]
        %v3474 = vld [vmem:[%s997 + $0x158] sm:$0xff]
        %v3475 = vld [vmem:[%s997 + $0x160] sm:$0xff]
        %v3476 = vld [vmem:[%s997 + $0x168] sm:$0xff]
        %v3477 = vld [vmem:[%s997 + $0x170] sm:$0xff]
        %v3478 = vld [vmem:[%s997 + $0x178] sm:$0xff]
        %v3479 = vld [vmem:[%s997 + $0x180] sm:$0xff]
        %v3480 = vld [vmem:[%s997 + $0x188] sm:$0xff]
        %v3481 = vld [vmem:[%s997 + $0x190] sm:$0xff]
        %v3482 = vld [vmem:[%s997 + $0x198] sm:$0xff]
        %v3483 = vld [vmem:[%s997 + $0x1a0] sm:$0xff]
        %v3484 = vld [vmem:[%s997 + $0x1a8] sm:$0xff]
        %v3485 = vld [vmem:[%s997 + $0x1b0] sm:$0xff]
        %v3486 = vld [vmem:[%s997 + $0x1b8] sm:$0xff]
        %v3487 = vld [vmem:[%s997 + $0x1c0] sm:$0xff]
        %v3488 = vld [vmem:[%s997 + $0x1c8] sm:$0xff]
        %v3489 = vld [vmem:[%s997 + $0x1d0] sm:$0xff]
        %v3490 = vld [vmem:[%s997 + $0x1d8] sm:$0xff]
        %v3491 = vld [vmem:[%s997 + $0x1e0] sm:$0xff]
        %v3492 = vld [vmem:[%s997 + $0x1e8] sm:$0xff]
        %v3493 = vld [vmem:[%s997 + $0x1f0] sm:$0xff]
        %v3494 = vld [vmem:[%s997 + $0x1f8] sm:$0xff]
        %v3495 = vld [vmem:[%s997 + $0x200] sm:$0xff]
        %v3496 = vld [vmem:[%s997 + $0x208] sm:$0xff]
        %v3497 = vld [vmem:[%s997 + $0x210] sm:$0xff]
        %v3498 = vld [vmem:[%s997 + $0x218] sm:$0xff]
        %v3499 = vld [vmem:[%s997 + $0x220] sm:$0xff]
        %v3500 = vld [vmem:[%s997 + $0x228] sm:$0xff]
        %v3501 = vld [vmem:[%s997 + $0x230] sm:$0xff]
        %v3502 = vld [vmem:[%s997 + $0x238] sm:$0xff]
        %v3503 = vld [vmem:[%s997 + $0x240] sm:$0xff]
        %v3504 = vld [vmem:[%s997 + $0x248] sm:$0xff]
        %v3505 = vld [vmem:[%s997 + $0x250] sm:$0xff]
        %v3506 = vld [vmem:[%s997 + $0x258] sm:$0xff]
        %v3507 = vld [vmem:[%s997 + $0x260] sm:$0xff]
        %v3508 = vld [vmem:[%s997 + $0x268] sm:$0xff]
        %v3509 = vld [vmem:[%s997 + $0x270] sm:$0xff]
        %v3510 = vld [vmem:[%s997 + $0x278] sm:$0xff]
        %v3511 = vld [vmem:[%s997 + $0x280] sm:$0xff]
        %v3512 = vld [vmem:[%s997 + $0x288] sm:$0xff]
        %v3513 = vld [vmem:[%s997 + $0x290] sm:$0xff]
        %v3514 = vld [vmem:[%s997 + $0x298] sm:$0xff]
        %v3515 = vld [vmem:[%s997 + $0x2a0] sm:$0xff]
        %v3516 = vld [vmem:[%s997 + $0x2a8] sm:$0xff]
        %v3517 = vld [vmem:[%s997 + $0x2b0] sm:$0xff]
        %v3518 = vld [vmem:[%s997 + $0x2b8] sm:$0xff]
        %v3519 = vld [vmem:[%s997 + $0x2c0] sm:$0xff]
        %v3520 = vld [vmem:[%s997 + $0x2c8] sm:$0xff]
        %v3521 = vld [vmem:[%s997 + $0x2d0] sm:$0xff]
        %v3522 = vld [vmem:[%s997 + $0x2d8] sm:$0xff]
        %v3523 = vld [vmem:[%s997 + $0x2e0] sm:$0xff]
        %v3524 = vld [vmem:[%s997 + $0x2e8] sm:$0xff]
        %v3525 = vld [vmem:[%s997 + $0x2f0] sm:$0xff]
        %v3526 = vld [vmem:[%s997 + $0x2f8] sm:$0xff]
        %v3527 = vld [vmem:[%s997 + $0x300] sm:$0xff]
        %v3528 = vld [vmem:[%s997 + $0x308] sm:$0xff]
        %v3529 = vld [vmem:[%s997 + $0x310] sm:$0xff]
        %v3530 = vld [vmem:[%s997 + $0x318] sm:$0xff]
        %v3531 = vld [vmem:[%s997 + $0x320] sm:$0xff]
        %v3532 = vld [vmem:[%s997 + $0x328] sm:$0xff]
        %v3533 = vld [vmem:[%s997 + $0x330] sm:$0xff]
        %v3534 = vld [vmem:[%s997 + $0x338] sm:$0xff]
        %v3535 = vld [vmem:[%s997 + $0x340] sm:$0xff]
        %v3536 = vld [vmem:[%s997 + $0x348] sm:$0xff]
        %v3537 = vld [vmem:[%s997 + $0x350] sm:$0xff]
        %v3538 = vld [vmem:[%s997 + $0x358] sm:$0xff]
        %v3539 = vld [vmem:[%s997 + $0x360] sm:$0xff]
        %v3540 = vld [vmem:[%s997 + $0x368] sm:$0xff]
        %v3541 = vld [vmem:[%s997 + $0x370] sm:$0xff]
        %v3542 = vld [vmem:[%s997 + $0x378] sm:$0xff]
        %v3543 = vld [vmem:[%s997 + $0x380] sm:$0xff]
        %v3544 = vld [vmem:[%s997 + $0x388] sm:$0xff]
        %v3545 = vld [vmem:[%s997 + $0x390] sm:$0xff]
        %v3546 = vld [vmem:[%s997 + $0x398] sm:$0xff]
        %v3547 = vld [vmem:[%s997 + $0x3a0] sm:$0xff]
        %v3548 = vld [vmem:[%s997 + $0x3a8] sm:$0xff]
        %v3549 = vld [vmem:[%s997 + $0x3b0] sm:$0xff]
        %v3550 = vld [vmem:[%s997 + $0x3b8] sm:$0xff]
        %v3551 = vld [vmem:[%s997 + $0x3c0] sm:$0xff]
        %v3552 = vld [vmem:[%s997 + $0x3c8] sm:$0xff]
        %v3553 = vld [vmem:[%s997 + $0x3d0] sm:$0xff]
        %v3554 = vld [vmem:[%s997 + $0x3d8] sm:$0xff]
        %v3555 = vld [vmem:[%s997 + $0x3e0] sm:$0xff]
        %v3556 = vld [vmem:[%s997 + $0x3e8] sm:$0xff]
        %v3557 = vld [vmem:[%s997 + $0x3f0] sm:$0xff]
        %v3558 = vld [vmem:[%s997 + $0x3f8] sm:$0xff]
        %v3559 = vld [vmem:[%s1264] sm:$0xf]
        %v3561 = vlaneseq
        %v3562 = vshrl.u32 %v3561, 7
        %v3563 = vsub.s32 0, %v3562
        %v3564 = vrot.slane %v3559, %v3563
        %v3565 = vlaneseq
        %v3566 = vshrl.u32 %v3565, 7
        %v3567 = vsub.s32 1, %v3566
        %v3568 = vrot.slane %v3559, %v3567
        %v3569 = vlaneseq
        %v3570 = vshrl.u32 %v3569, 7
        %v3571 = vsub.s32 2, %v3570
        %v3572 = vrot.slane %v3559, %v3571
        %v3573 = vlaneseq
        %v3574 = vshrl.u32 %v3573, 7
        %v3575 = vsub.s32 3, %v3574
        %v3576 = vrot.slane %v3559, %v3575
        %v3709 = vunpack.c.l.b16 %v3431
        %v3710 = vunpack.c.h.b16 %v3431
        %v3711 = vunpack.c.l.b16 %v3432
        %v3712 = vunpack.c.h.b16 %v3432
        %v3713 = vunpack.c.l.b16 %v3433
        %v3714 = vunpack.c.h.b16 %v3433
        %v3715 = vunpack.c.l.b16 %v3434
        %v3716 = vunpack.c.h.b16 %v3434
        %v3717 = vunpack.c.l.b16 %v3435
        %v3718 = vunpack.c.h.b16 %v3435
        %v3719 = vunpack.c.l.b16 %v3436
        %v3720 = vunpack.c.h.b16 %v3436
        %v3721 = vunpack.c.l.b16 %v3437
        %v3722 = vunpack.c.h.b16 %v3437
        %v3723 = vunpack.c.l.b16 %v3438
        %v3724 = vunpack.c.h.b16 %v3438
        %v3725 = vunpack.c.l.b16 %v3439
        %v3726 = vunpack.c.h.b16 %v3439
        %v3727 = vunpack.c.l.b16 %v3440
        %v3728 = vunpack.c.h.b16 %v3440
        %v3729 = vunpack.c.l.b16 %v3441
        %v3730 = vunpack.c.h.b16 %v3441
        %v3731 = vunpack.c.l.b16 %v3442
        %v3732 = vunpack.c.h.b16 %v3442
        %v3733 = vunpack.c.l.b16 %v3443
        %v3734 = vunpack.c.h.b16 %v3443
        %v3735 = vunpack.c.l.b16 %v3444
        %v3736 = vunpack.c.h.b16 %v3444
        %v3737 = vunpack.c.l.b16 %v3445
        %v3738 = vunpack.c.h.b16 %v3445
        %v3739 = vunpack.c.l.b16 %v3446
        %v3740 = vunpack.c.h.b16 %v3446
        %v3741 = vunpack.c.l.b16 %v3447
        %v3742 = vunpack.c.h.b16 %v3447
        %v3743 = vunpack.c.l.b16 %v3448
        %v3744 = vunpack.c.h.b16 %v3448
        %v3745 = vunpack.c.l.b16 %v3449
        %v3746 = vunpack.c.h.b16 %v3449
        %v3747 = vunpack.c.l.b16 %v3450
        %v3748 = vunpack.c.h.b16 %v3450
        %v3749 = vunpack.c.l.b16 %v3451
        %v3750 = vunpack.c.h.b16 %v3451
        %v3751 = vunpack.c.l.b16 %v3452
        %v3752 = vunpack.c.h.b16 %v3452
        %v3753 = vunpack.c.l.b16 %v3453
        %v3754 = vunpack.c.h.b16 %v3453
        %v3755 = vunpack.c.l.b16 %v3454
        %v3756 = vunpack.c.h.b16 %v3454
        %v3757 = vunpack.c.l.b16 %v3455
        %v3758 = vunpack.c.h.b16 %v3455
        %v3759 = vunpack.c.l.b16 %v3456
        %v3760 = vunpack.c.h.b16 %v3456
        %v3761 = vunpack.c.l.b16 %v3457
        %v3762 = vunpack.c.h.b16 %v3457
        %v3763 = vunpack.c.l.b16 %v3458
        %v3764 = vunpack.c.h.b16 %v3458
        %v3765 = vunpack.c.l.b16 %v3459
        %v3766 = vunpack.c.h.b16 %v3459
        %v3767 = vunpack.c.l.b16 %v3460
        %v3768 = vunpack.c.h.b16 %v3460
        %v3769 = vunpack.c.l.b16 %v3461
        %v3770 = vunpack.c.h.b16 %v3461
        %v3771 = vunpack.c.l.b16 %v3462
        %v3772 = vunpack.c.h.b16 %v3462
        %v3773 = vunpack.c.l.b16 %v3463
        %v3774 = vunpack.c.h.b16 %v3463
        %v3775 = vunpack.c.l.b16 %v3464
        %v3776 = vunpack.c.h.b16 %v3464
        %v3777 = vunpack.c.l.b16 %v3465
        %v3778 = vunpack.c.h.b16 %v3465
        %v3779 = vunpack.c.l.b16 %v3466
        %v3780 = vunpack.c.h.b16 %v3466
        %v3781 = vunpack.c.l.b16 %v3467
        %v3782 = vunpack.c.h.b16 %v3467
        %v3783 = vunpack.c.l.b16 %v3468
        %v3784 = vunpack.c.h.b16 %v3468
        %v3785 = vunpack.c.l.b16 %v3469
        %v3786 = vunpack.c.h.b16 %v3469
        %v3787 = vunpack.c.l.b16 %v3470
        %v3788 = vunpack.c.h.b16 %v3470
        %v3789 = vunpack.c.l.b16 %v3471
        %v3790 = vunpack.c.h.b16 %v3471
        %v3791 = vunpack.c.l.b16 %v3472
        %v3792 = vunpack.c.h.b16 %v3472
        %v3793 = vunpack.c.l.b16 %v3473
        %v3794 = vunpack.c.h.b16 %v3473
        %v3795 = vunpack.c.l.b16 %v3474
        %v3796 = vunpack.c.h.b16 %v3474
        %v3797 = vunpack.c.l.b16 %v3475
        %v3798 = vunpack.c.h.b16 %v3475
        %v3799 = vunpack.c.l.b16 %v3476
        %v3800 = vunpack.c.h.b16 %v3476
        %v3801 = vunpack.c.l.b16 %v3477
        %v3802 = vunpack.c.h.b16 %v3477
        %v3803 = vunpack.c.l.b16 %v3478
        %v3804 = vunpack.c.h.b16 %v3478
        %v3805 = vunpack.c.l.b16 %v3479
        %v3806 = vunpack.c.h.b16 %v3479
        %v3807 = vunpack.c.l.b16 %v3480
        %v3808 = vunpack.c.h.b16 %v3480
        %v3809 = vunpack.c.l.b16 %v3481
        %v3810 = vunpack.c.h.b16 %v3481
        %v3811 = vunpack.c.l.b16 %v3482
        %v3812 = vunpack.c.h.b16 %v3482
        %v3813 = vunpack.c.l.b16 %v3483
        %v3814 = vunpack.c.h.b16 %v3483
        %v3815 = vunpack.c.l.b16 %v3484
        %v3816 = vunpack.c.h.b16 %v3484
        %v3817 = vunpack.c.l.b16 %v3485
        %v3818 = vunpack.c.h.b16 %v3485
        %v3819 = vunpack.c.l.b16 %v3486
        %v3820 = vunpack.c.h.b16 %v3486
        %v3821 = vunpack.c.l.b16 %v3487
        %v3822 = vunpack.c.h.b16 %v3487
        %v3823 = vunpack.c.l.b16 %v3488
        %v3824 = vunpack.c.h.b16 %v3488
        %v3825 = vunpack.c.l.b16 %v3489
        %v3826 = vunpack.c.h.b16 %v3489
        %v3827 = vunpack.c.l.b16 %v3490
        %v3828 = vunpack.c.h.b16 %v3490
        %v3829 = vunpack.c.l.b16 %v3491
        %v3830 = vunpack.c.h.b16 %v3491
        %v3831 = vunpack.c.l.b16 %v3492
        %v3832 = vunpack.c.h.b16 %v3492
        %v3833 = vunpack.c.l.b16 %v3493
        %v3834 = vunpack.c.h.b16 %v3493
        %v3835 = vunpack.c.l.b16 %v3494
        %v3836 = vunpack.c.h.b16 %v3494
        %v3837 = vunpack.c.l.b16 %v3495
        %v3838 = vunpack.c.h.b16 %v3495
        %v3839 = vunpack.c.l.b16 %v3496
        %v3840 = vunpack.c.h.b16 %v3496
        %v3841 = vunpack.c.l.b16 %v3497
        %v3842 = vunpack.c.h.b16 %v3497
        %v3843 = vunpack.c.l.b16 %v3498
        %v3844 = vunpack.c.h.b16 %v3498
        %v3845 = vunpack.c.l.b16 %v3499
        %v3846 = vunpack.c.h.b16 %v3499
        %v3847 = vunpack.c.l.b16 %v3500
        %v3848 = vunpack.c.h.b16 %v3500
        %v3849 = vunpack.c.l.b16 %v3501
        %v3850 = vunpack.c.h.b16 %v3501
        %v3851 = vunpack.c.l.b16 %v3502
        %v3852 = vunpack.c.h.b16 %v3502
        %v3853 = vunpack.c.l.b16 %v3503
        %v3854 = vunpack.c.h.b16 %v3503
        %v3855 = vunpack.c.l.b16 %v3504
        %v3856 = vunpack.c.h.b16 %v3504
        %v3857 = vunpack.c.l.b16 %v3505
        %v3858 = vunpack.c.h.b16 %v3505
        %v3859 = vunpack.c.l.b16 %v3506
        %v3860 = vunpack.c.h.b16 %v3506
        %v3861 = vunpack.c.l.b16 %v3507
        %v3862 = vunpack.c.h.b16 %v3507
        %v3863 = vunpack.c.l.b16 %v3508
        %v3864 = vunpack.c.h.b16 %v3508
        %v3865 = vunpack.c.l.b16 %v3509
        %v3866 = vunpack.c.h.b16 %v3509
        %v3867 = vunpack.c.l.b16 %v3510
        %v3868 = vunpack.c.h.b16 %v3510
        %v3869 = vunpack.c.l.b16 %v3511
        %v3870 = vunpack.c.h.b16 %v3511
        %v3871 = vunpack.c.l.b16 %v3512
        %v3872 = vunpack.c.h.b16 %v3512
        %v3873 = vunpack.c.l.b16 %v3513
        %v3874 = vunpack.c.h.b16 %v3513
        %v3875 = vunpack.c.l.b16 %v3514
        %v3876 = vunpack.c.h.b16 %v3514
        %v3877 = vunpack.c.l.b16 %v3515
        %v3878 = vunpack.c.h.b16 %v3515
        %v3879 = vunpack.c.l.b16 %v3516
        %v3880 = vunpack.c.h.b16 %v3516
        %v3881 = vunpack.c.l.b16 %v3517
        %v3882 = vunpack.c.h.b16 %v3517
        %v3883 = vunpack.c.l.b16 %v3518
        %v3884 = vunpack.c.h.b16 %v3518
        %v3885 = vunpack.c.l.b16 %v3519
        %v3886 = vunpack.c.h.b16 %v3519
        %v3887 = vunpack.c.l.b16 %v3520
        %v3888 = vunpack.c.h.b16 %v3520
        %v3889 = vunpack.c.l.b16 %v3521
        %v3890 = vunpack.c.h.b16 %v3521
        %v3891 = vunpack.c.l.b16 %v3522
        %v3892 = vunpack.c.h.b16 %v3522
        %v3893 = vunpack.c.l.b16 %v3523
        %v3894 = vunpack.c.h.b16 %v3523
        %v3895 = vunpack.c.l.b16 %v3524
        %v3896 = vunpack.c.h.b16 %v3524
        %v3897 = vunpack.c.l.b16 %v3525
        %v3898 = vunpack.c.h.b16 %v3525
        %v3899 = vunpack.c.l.b16 %v3526
        %v3900 = vunpack.c.h.b16 %v3526
        %v3901 = vunpack.c.l.b16 %v3527
        %v3902 = vunpack.c.h.b16 %v3527
        %v3903 = vunpack.c.l.b16 %v3528
        %v3904 = vunpack.c.h.b16 %v3528
        %v3905 = vunpack.c.l.b16 %v3529
        %v3906 = vunpack.c.h.b16 %v3529
        %v3907 = vunpack.c.l.b16 %v3530
        %v3908 = vunpack.c.h.b16 %v3530
        %v3909 = vunpack.c.l.b16 %v3531
        %v3910 = vunpack.c.h.b16 %v3531
        %v3911 = vunpack.c.l.b16 %v3532
        %v3912 = vunpack.c.h.b16 %v3532
        %v3913 = vunpack.c.l.b16 %v3533
        %v3914 = vunpack.c.h.b16 %v3533
        %v3915 = vunpack.c.l.b16 %v3534
        %v3916 = vunpack.c.h.b16 %v3534
        %v3917 = vunpack.c.l.b16 %v3535
        %v3918 = vunpack.c.h.b16 %v3535
        %v3919 = vunpack.c.l.b16 %v3536
        %v3920 = vunpack.c.h.b16 %v3536
        %v3921 = vunpack.c.l.b16 %v3537
        %v3922 = vunpack.c.h.b16 %v3537
        %v3923 = vunpack.c.l.b16 %v3538
        %v3924 = vunpack.c.h.b16 %v3538
        %v3925 = vunpack.c.l.b16 %v3539
        %v3926 = vunpack.c.h.b16 %v3539
        %v3927 = vunpack.c.l.b16 %v3540
        %v3928 = vunpack.c.h.b16 %v3540
        %v3929 = vunpack.c.l.b16 %v3541
        %v3930 = vunpack.c.h.b16 %v3541
        %v3931 = vunpack.c.l.b16 %v3542
        %v3932 = vunpack.c.h.b16 %v3542
        %v3933 = vunpack.c.l.b16 %v3543
        %v3934 = vunpack.c.h.b16 %v3543
        %v3935 = vunpack.c.l.b16 %v3544
        %v3936 = vunpack.c.h.b16 %v3544
        %v3937 = vunpack.c.l.b16 %v3545
        %v3938 = vunpack.c.h.b16 %v3545
        %v3939 = vunpack.c.l.b16 %v3546
        %v3940 = vunpack.c.h.b16 %v3546
        %v3941 = vunpack.c.l.b16 %v3547
        %v3942 = vunpack.c.h.b16 %v3547
        %v3943 = vunpack.c.l.b16 %v3548
        %v3944 = vunpack.c.h.b16 %v3548
        %v3945 = vunpack.c.l.b16 %v3549
        %v3946 = vunpack.c.h.b16 %v3549
        %v3947 = vunpack.c.l.b16 %v3550
        %v3948 = vunpack.c.h.b16 %v3550
        %v3949 = vunpack.c.l.b16 %v3551
        %v3950 = vunpack.c.h.b16 %v3551
        %v3951 = vunpack.c.l.b16 %v3552
        %v3952 = vunpack.c.h.b16 %v3552
        %v3953 = vunpack.c.l.b16 %v3553
        %v3954 = vunpack.c.h.b16 %v3553
        %v3955 = vunpack.c.l.b16 %v3554
        %v3956 = vunpack.c.h.b16 %v3554
        %v3957 = vunpack.c.l.b16 %v3555
        %v3958 = vunpack.c.h.b16 %v3555
        %v3959 = vunpack.c.l.b16 %v3556
        %v3960 = vunpack.c.h.b16 %v3556
        %v3961 = vunpack.c.l.b16 %v3557
        %v3962 = vunpack.c.h.b16 %v3557
        %v3963 = vunpack.c.l.b16 %v3558
        %v3964 = vunpack.c.h.b16 %v3558
        %v3965 = vpack.c.b16 %v3713, %v3709
        %v3966 = vpack.c.b16 %v3714, %v3710
        %v3967 = vpack.c.b16 %v3715, %v3711
        %v3968 = vpack.c.b16 %v3716, %v3712
        %v3969 = vpack.c.b16 %v3721, %v3717
        %v3970 = vpack.c.b16 %v3722, %v3718
        %v3971 = vpack.c.b16 %v3723, %v3719
        %v3972 = vpack.c.b16 %v3724, %v3720
        %v3973 = vpack.c.b16 %v3729, %v3725
        %v3974 = vpack.c.b16 %v3730, %v3726
        %v3975 = vpack.c.b16 %v3731, %v3727
        %v3976 = vpack.c.b16 %v3732, %v3728
        %v3977 = vpack.c.b16 %v3737, %v3733
        %v3978 = vpack.c.b16 %v3738, %v3734
        %v3979 = vpack.c.b16 %v3739, %v3735
        %v3980 = vpack.c.b16 %v3740, %v3736
        %v3981 = vpack.c.b16 %v3745, %v3741
        %v3982 = vpack.c.b16 %v3746, %v3742
        %v3983 = vpack.c.b16 %v3747, %v3743
        %v3984 = vpack.c.b16 %v3748, %v3744
        %v3985 = vpack.c.b16 %v3753, %v3749
        %v3986 = vpack.c.b16 %v3754, %v3750
        %v3987 = vpack.c.b16 %v3755, %v3751
        %v3988 = vpack.c.b16 %v3756, %v3752
        %v3989 = vpack.c.b16 %v3761, %v3757
        %v3990 = vpack.c.b16 %v3762, %v3758
        %v3991 = vpack.c.b16 %v3763, %v3759
        %v3992 = vpack.c.b16 %v3764, %v3760
        %v3993 = vpack.c.b16 %v3769, %v3765
        %v3994 = vpack.c.b16 %v3770, %v3766
        %v3995 = vpack.c.b16 %v3771, %v3767
        %v3996 = vpack.c.b16 %v3772, %v3768
        %v3997 = vpack.c.b16 %v3777, %v3773
        %v3998 = vpack.c.b16 %v3778, %v3774
        %v3999 = vpack.c.b16 %v3779, %v3775
        %v4000 = vpack.c.b16 %v3780, %v3776
        %v4001 = vpack.c.b16 %v3785, %v3781
        %v4002 = vpack.c.b16 %v3786, %v3782
        %v4003 = vpack.c.b16 %v3787, %v3783
        %v4004 = vpack.c.b16 %v3788, %v3784
        %v4005 = vpack.c.b16 %v3793, %v3789
        %v4006 = vpack.c.b16 %v3794, %v3790
        %v4007 = vpack.c.b16 %v3795, %v3791
        %v4008 = vpack.c.b16 %v3796, %v3792
        %v4009 = vpack.c.b16 %v3801, %v3797
        %v4010 = vpack.c.b16 %v3802, %v3798
        %v4011 = vpack.c.b16 %v3803, %v3799
        %v4012 = vpack.c.b16 %v3804, %v3800
        %v4013 = vpack.c.b16 %v3809, %v3805
        %v4014 = vpack.c.b16 %v3810, %v3806
        %v4015 = vpack.c.b16 %v3811, %v3807
        %v4016 = vpack.c.b16 %v3812, %v3808
        %v4017 = vpack.c.b16 %v3817, %v3813
        %v4018 = vpack.c.b16 %v3818, %v3814
        %v4019 = vpack.c.b16 %v3819, %v3815
        %v4020 = vpack.c.b16 %v3820, %v3816
        %v4021 = vpack.c.b16 %v3825, %v3821
        %v4022 = vpack.c.b16 %v3826, %v3822
        %v4023 = vpack.c.b16 %v3827, %v3823
        %v4024 = vpack.c.b16 %v3828, %v3824
        %v4025 = vpack.c.b16 %v3833, %v3829
        %v4026 = vpack.c.b16 %v3834, %v3830
        %v4027 = vpack.c.b16 %v3835, %v3831
        %v4028 = vpack.c.b16 %v3836, %v3832
        %v4029 = vpack.c.b16 %v3841, %v3837
        %v4030 = vpack.c.b16 %v3842, %v3838
        %v4031 = vpack.c.b16 %v3843, %v3839
        %v4032 = vpack.c.b16 %v3844, %v3840
        %v4033 = vpack.c.b16 %v3849, %v3845
        %v4034 = vpack.c.b16 %v3850, %v3846
        %v4035 = vpack.c.b16 %v3851, %v3847
        %v4036 = vpack.c.b16 %v3852, %v3848
        %v4037 = vpack.c.b16 %v3857, %v3853
        %v4038 = vpack.c.b16 %v3858, %v3854
        %v4039 = vpack.c.b16 %v3859, %v3855
        %v4040 = vpack.c.b16 %v3860, %v3856
        %v4041 = vpack.c.b16 %v3865, %v3861
        %v4042 = vpack.c.b16 %v3866, %v3862
        %v4043 = vpack.c.b16 %v3867, %v3863
        %v4044 = vpack.c.b16 %v3868, %v3864
        %v4045 = vpack.c.b16 %v3873, %v3869
        %v4046 = vpack.c.b16 %v3874, %v3870
        %v4047 = vpack.c.b16 %v3875, %v3871
        %v4048 = vpack.c.b16 %v3876, %v3872
        %v4049 = vpack.c.b16 %v3881, %v3877
        %v4050 = vpack.c.b16 %v3882, %v3878
        %v4051 = vpack.c.b16 %v3883, %v3879
        %v4052 = vpack.c.b16 %v3884, %v3880
        %v4053 = vpack.c.b16 %v3889, %v3885
        %v4054 = vpack.c.b16 %v3890, %v3886
        %v4055 = vpack.c.b16 %v3891, %v3887
        %v4056 = vpack.c.b16 %v3892, %v3888
        %v4057 = vpack.c.b16 %v3897, %v3893
        %v4058 = vpack.c.b16 %v3898, %v3894
        %v4059 = vpack.c.b16 %v3899, %v3895
        %v4060 = vpack.c.b16 %v3900, %v3896
        %v4061 = vpack.c.b16 %v3905, %v3901
        %v4062 = vpack.c.b16 %v3906, %v3902
        %v4063 = vpack.c.b16 %v3907, %v3903
        %v4064 = vpack.c.b16 %v3908, %v3904
        %v4065 = vpack.c.b16 %v3913, %v3909
        %v4066 = vpack.c.b16 %v3914, %v3910
        %v4067 = vpack.c.b16 %v3915, %v3911
        %v4068 = vpack.c.b16 %v3916, %v3912
        %v4069 = vpack.c.b16 %v3921, %v3917
        %v4070 = vpack.c.b16 %v3922, %v3918
        %v4071 = vpack.c.b16 %v3923, %v3919
        %v4072 = vpack.c.b16 %v3924, %v3920
        %v4073 = vpack.c.b16 %v3929, %v3925
        %v4074 = vpack.c.b16 %v3930, %v3926
        %v4075 = vpack.c.b16 %v3931, %v3927
        %v4076 = vpack.c.b16 %v3932, %v3928
        %v4077 = vpack.c.b16 %v3937, %v3933
        %v4078 = vpack.c.b16 %v3938, %v3934
        %v4079 = vpack.c.b16 %v3939, %v3935
        %v4080 = vpack.c.b16 %v3940, %v3936
        %v4081 = vpack.c.b16 %v3945, %v3941
        %v4082 = vpack.c.b16 %v3946, %v3942
        %v4083 = vpack.c.b16 %v3947, %v3943
        %v4084 = vpack.c.b16 %v3948, %v3944
        %v4085 = vpack.c.b16 %v3953, %v3949
        %v4086 = vpack.c.b16 %v3954, %v3950
        %v4087 = vpack.c.b16 %v3955, %v3951
        %v4088 = vpack.c.b16 %v3956, %v3952
        %v4089 = vpack.c.b16 %v3961, %v3957
        %v4090 = vpack.c.b16 %v3962, %v3958
        %v4091 = vpack.c.b16 %v3963, %v3959
        %v4092 = vpack.c.b16 %v3964, %v3960
        %4221 = vmatprep.subr.bf16.mxu0 %v3966
        %4222 = vmatpush1.bf16.msra.mxu0 %v3965
        %4223 = vmatprep.subr.bf16.mxu0 %v3970
        %4224 = vmatpush1.bf16.msra.mxu0 %v3969
        %4225 = vmatprep.subr.bf16.mxu0 %v3974
        %4226 = vmatpush1.bf16.msra.mxu0 %v3973
        %4227 = vmatprep.subr.bf16.mxu0 %v3978
        %4228 = vmatpush1.bf16.msra.mxu0 %v3977
        %4229 = vmatprep.subr.bf16.mxu0 %v3982
        %4230 = vmatpush1.bf16.msra.mxu0 %v3981
        %4231 = vmatprep.subr.bf16.mxu0 %v3986
        %4232 = vmatpush1.bf16.msra.mxu0 %v3985
        %4233 = vmatprep.subr.bf16.mxu0 %v3990
        %4234 = vmatpush1.bf16.msra.mxu0 %v3989
        %4235 = vmatprep.subr.bf16.mxu0 %v3994
        %4236 = vmatpush1.bf16.msra.mxu0 %v3993
        %4237 = vmatprep.subr.bf16.mxu0 %v3998
        %4238 = vmatpush1.bf16.msra.mxu0 %v3997
        %4239 = vmatprep.subr.bf16.mxu0 %v4002
        %4240 = vmatpush1.bf16.msra.mxu0 %v4001
        %4241 = vmatprep.subr.bf16.mxu0 %v4006
        %4242 = vmatpush1.bf16.msra.mxu0 %v4005
        %4243 = vmatprep.subr.bf16.mxu0 %v4010
        %4244 = vmatpush1.bf16.msra.mxu0 %v4009
        %4245 = vmatprep.subr.bf16.mxu0 %v4014
        %4246 = vmatpush1.bf16.msra.mxu0 %v4013
        %4247 = vmatprep.subr.bf16.mxu0 %v4018
        %4248 = vmatpush1.bf16.msra.mxu0 %v4017
        %4249 = vmatprep.subr.bf16.mxu0 %v4022
        %4250 = vmatpush1.bf16.msra.mxu0 %v4021
        %4251 = vmatprep.subr.bf16.mxu0 %v4026
        %4252 = vmatpush1.bf16.msra.mxu0 %v4025
        %4253 = vmatprep.mubr.bf16.mxu0 %v3428
        %4254 = vmatmul.mubr.bf16.gmra.mrb[0].mxu0 %v3427
        %v4255 = vpop.f32.mrb[0].mxu0
        %v4256 = vadd.f32 %v3564, %v4255
        %v4257 = vpop.f32.mrb[0].mxu0
        %v4258 = vadd.f32 %v3568, %v4257
        %v4259 = vpop.f32.mrb[0].mxu0
        %v4260 = vadd.f32 %v3564, %v4259
        %v4261 = vpop.f32.mrb[0].mxu0
        %v4262 = vadd.f32 %v3568, %v4261
        %4263 = vdwg.mxu0
        %4264 = vmatprep.subr.bf16.mxu0 %v4030
        %4265 = vmatpush1.bf16.msra.mxu0 %v4029
        %4266 = vmatprep.subr.bf16.mxu0 %v4034
        %4267 = vmatpush1.bf16.msra.mxu0 %v4033
        %4268 = vmatprep.subr.bf16.mxu0 %v4038
        %4269 = vmatpush1.bf16.msra.mxu0 %v4037
        %4270 = vmatprep.subr.bf16.mxu0 %v4042
        %4271 = vmatpush1.bf16.msra.mxu0 %v4041
        %4272 = vmatprep.subr.bf16.mxu0 %v4046
        %4273 = vmatpush1.bf16.msra.mxu0 %v4045
        %4274 = vmatprep.subr.bf16.mxu0 %v4050
        %4275 = vmatpush1.bf16.msra.mxu0 %v4049
        %4276 = vmatprep.subr.bf16.mxu0 %v4054
        %4277 = vmatpush1.bf16.msra.mxu0 %v4053
        %4278 = vmatprep.subr.bf16.mxu0 %v4058
        %4279 = vmatpush1.bf16.msra.mxu0 %v4057
        %4280 = vmatprep.subr.bf16.mxu0 %v4062
        %4281 = vmatpush1.bf16.msra.mxu0 %v4061
        %4282 = vmatprep.subr.bf16.mxu0 %v4066
        %4283 = vmatpush1.bf16.msra.mxu0 %v4065
        %4284 = vmatprep.subr.bf16.mxu0 %v4070
        %4285 = vmatpush1.bf16.msra.mxu0 %v4069
        %4286 = vmatprep.subr.bf16.mxu0 %v4074
        %4287 = vmatpush1.bf16.msra.mxu0 %v4073
        %4288 = vmatprep.subr.bf16.mxu0 %v4078
        %4289 = vmatpush1.bf16.msra.mxu0 %v4077
        %4290 = vmatprep.subr.bf16.mxu0 %v4082
        %4291 = vmatpush1.bf16.msra.mxu0 %v4081
        %4292 = vmatprep.subr.bf16.mxu0 %v4086
        %4293 = vmatpush1.bf16.msra.mxu0 %v4085
        %4294 = vmatprep.subr.bf16.mxu0 %v4090
        %4295 = vmatpush1.bf16.msra.mxu0 %v4089
        %4296 = vmatprep.mubr.bf16.mxu0 %v3430
        %4297 = vmatmul.mubr.bf16.gmra.mrb[0].mxu0 %v3429
        %v4298 = vpop.f32.mrb[0].mxu0
        %v4299 = vadd.f32 %v4256, %v4298
        %v4300 = vpop.f32.mrb[0].mxu0
        %v4301 = vadd.f32 %v4258, %v4300
        %v4302 = vpop.f32.mrb[0].mxu0
        %v4303 = vadd.f32 %v4260, %v4302
        %v4304 = vpop.f32.mrb[0].mxu0
        %v4305 = vadd.f32 %v4262, %v4304
        %4306 = vdwg.mxu0
        %4307 = vmatprep.subr.bf16.mxu0 %v3968
        %4308 = vmatpush1.bf16.msra.mxu0 %v3967
        %4309 = vmatprep.subr.bf16.mxu0 %v3972
        %4310 = vmatpush1.bf16.msra.mxu0 %v3971
        %4311 = vmatprep.subr.bf16.mxu0 %v3976
        %4312 = vmatpush1.bf16.msra.mxu0 %v3975
        %4313 = vmatprep.subr.bf16.mxu0 %v3980
        %4314 = vmatpush1.bf16.msra.mxu0 %v3979
        %4315 = vmatprep.subr.bf16.mxu0 %v3984
        %4316 = vmatpush1.bf16.msra.mxu0 %v3983
        %4317 = vmatprep.subr.bf16.mxu0 %v3988
        %4318 = vmatpush1.bf16.msra.mxu0 %v3987
        %4319 = vmatprep.subr.bf16.mxu0 %v3992
        %4320 = vmatpush1.bf16.msra.mxu0 %v3991
        %4321 = vmatprep.subr.bf16.mxu0 %v3996
        %4322 = vmatpush1.bf16.msra.mxu0 %v3995
        %4323 = vmatprep.subr.bf16.mxu0 %v4000
        %4324 = vmatpush1.bf16.msra.mxu0 %v3999
        %4325 = vmatprep.subr.bf16.mxu0 %v4004
        %4326 = vmatpush1.bf16.msra.mxu0 %v4003
        %4327 = vmatprep.subr.bf16.mxu0 %v4008
        %4328 = vmatpush1.bf16.msra.mxu0 %v4007
        %4329 = vmatprep.subr.bf16.mxu0 %v4012
        %4330 = vmatpush1.bf16.msra.mxu0 %v4011
        %4331 = vmatprep.subr.bf16.mxu0 %v4016
        %4332 = vmatpush1.bf16.msra.mxu0 %v4015
        %4333 = vmatprep.subr.bf16.mxu0 %v4020
        %4334 = vmatpush1.bf16.msra.mxu0 %v4019
        %4335 = vmatprep.subr.bf16.mxu0 %v4024
        %4336 = vmatpush1.bf16.msra.mxu0 %v4023
        %4337 = vmatprep.subr.bf16.mxu0 %v4028
        %4338 = vmatpush1.bf16.msra.mxu0 %v4027
        %4339 = vmatprep.mubr.bf16.mxu0 %v3428
        %4340 = vmatmul.mubr.bf16.gmra.mrb[0].mxu0 %v3427
        %v4341 = vpop.f32.mrb[0].mxu0
        %v4342 = vadd.f32 %v3572, %v4341
        %v4343 = vpop.f32.mrb[0].mxu0
        %v4344 = vadd.f32 %v3576, %v4343
        %v4345 = vpop.f32.mrb[0].mxu0
        %v4346 = vadd.f32 %v3572, %v4345
        %v4347 = vpop.f32.mrb[0].mxu0
        %v4348 = vadd.f32 %v3576, %v4347
        %4349 = vdwg.mxu0
        %4350 = vmatprep.subr.bf16.mxu0 %v4032
        %4351 = vmatpush1.bf16.msra.mxu0 %v4031
        %4352 = vmatprep.subr.bf16.mxu0 %v4036
        %4353 = vmatpush1.bf16.msra.mxu0 %v4035
        %4354 = vmatprep.subr.bf16.mxu0 %v4040
        %4355 = vmatpush1.bf16.msra.mxu0 %v4039
        %4356 = vmatprep.subr.bf16.mxu0 %v4044
        %4357 = vmatpush1.bf16.msra.mxu0 %v4043
        %4358 = vmatprep.subr.bf16.mxu0 %v4048
        %4359 = vmatpush1.bf16.msra.mxu0 %v4047
        %4360 = vmatprep.subr.bf16.mxu0 %v4052
        %4361 = vmatpush1.bf16.msra.mxu0 %v4051
        %4362 = vmatprep.subr.bf16.mxu0 %v4056
        %4363 = vmatpush1.bf16.msra.mxu0 %v4055
        %4364 = vmatprep.subr.bf16.mxu0 %v4060
        %4365 = vmatpush1.bf16.msra.mxu0 %v4059
        %4366 = vmatprep.subr.bf16.mxu0 %v4064
        %4367 = vmatpush1.bf16.msra.mxu0 %v4063
        %4368 = vmatprep.subr.bf16.mxu0 %v4068
        %4369 = vmatpush1.bf16.msra.mxu0 %v4067
        %4370 = vmatprep.subr.bf16.mxu0 %v4072
        %4371 = vmatpush1.bf16.msra.mxu0 %v4071
        %4372 = vmatprep.subr.bf16.mxu0 %v4076
        %4373 = vmatpush1.bf16.msra.mxu0 %v4075
        %4374 = vmatprep.subr.bf16.mxu0 %v4080
        %4375 = vmatpush1.bf16.msra.mxu0 %v4079
        %4376 = vmatprep.subr.bf16.mxu0 %v4084
        %4377 = vmatpush1.bf16.msra.mxu0 %v4083
        %4378 = vmatprep.subr.bf16.mxu0 %v4088
        %4379 = vmatpush1.bf16.msra.mxu0 %v4087
        %4380 = vmatprep.subr.bf16.mxu0 %v4092
        %4381 = vmatpush1.bf16.msra.mxu0 %v4091
        %4382 = vmatprep.mubr.bf16.mxu0 %v3430
        %4383 = vmatmul.mubr.bf16.gmra.mrb[0].mxu0 %v3429
        %v4384 = vpop.f32.mrb[0].mxu0
        %v4385 = vadd.f32 %v4342, %v4384
        %v4386 = vpop.f32.mrb[0].mxu0
        %v4387 = vadd.f32 %v4344, %v4386
        %v4388 = vpop.f32.mrb[0].mxu0
        %v4389 = vadd.f32 %v4346, %v4388
        %v4390 = vpop.f32.mrb[0].mxu0
        %v4391 = vadd.f32 %v4348, %v4390
        %4392 = vdwg.mxu0
        %v4393 = vpack.c.bf16 %v4303, %v4299
        %v4394 = vpack.c.bf16 %v4305, %v4301
        %v4395 = vpack.c.bf16 %v4389, %v4385
        %v4396 = vpack.c.bf16 %v4391, %v4387
        %v4397 = vld [vmem:[%s1006] sm:$0xff]
        %v4398 = vld [vmem:[%s1006 + $0x8] sm:$0xff]
        %v4399 = vld [vmem:[%s1006 + $0x10] sm:$0xff]
        %v4400 = vld [vmem:[%s1006 + $0x18] sm:$0xff]
        %v4401 = vld [vmem:[%s1006 + $0x20] sm:$0xff]
        %v4402 = vld [vmem:[%s1006 + $0x28] sm:$0xff]
        %v4403 = vld [vmem:[%s1006 + $0x30] sm:$0xff]
        %v4404 = vld [vmem:[%s1006 + $0x38] sm:$0xff]
        %v4405 = vld [vmem:[%s1006 + $0x40] sm:$0xff]
        %v4406 = vld [vmem:[%s1006 + $0x48] sm:$0xff]
        %v4407 = vld [vmem:[%s1006 + $0x50] sm:$0xff]
        %v4408 = vld [vmem:[%s1006 + $0x58] sm:$0xff]
        %v4409 = vld [vmem:[%s1006 + $0x60] sm:$0xff]
        %v4410 = vld [vmem:[%s1006 + $0x68] sm:$0xff]
        %v4411 = vld [vmem:[%s1006 + $0x70] sm:$0xff]
        %v4412 = vld [vmem:[%s1006 + $0x78] sm:$0xff]
        %v4413 = vld [vmem:[%s1006 + $0x80] sm:$0xff]
        %v4414 = vld [vmem:[%s1006 + $0x88] sm:$0xff]
        %v4415 = vld [vmem:[%s1006 + $0x90] sm:$0xff]
        %v4416 = vld [vmem:[%s1006 + $0x98] sm:$0xff]
        %v4417 = vld [vmem:[%s1006 + $0xa0] sm:$0xff]
        %v4418 = vld [vmem:[%s1006 + $0xa8] sm:$0xff]
        %v4419 = vld [vmem:[%s1006 + $0xb0] sm:$0xff]
        %v4420 = vld [vmem:[%s1006 + $0xb8] sm:$0xff]
        %v4421 = vld [vmem:[%s1006 + $0xc0] sm:$0xff]
        %v4422 = vld [vmem:[%s1006 + $0xc8] sm:$0xff]
        %v4423 = vld [vmem:[%s1006 + $0xd0] sm:$0xff]
        %v4424 = vld [vmem:[%s1006 + $0xd8] sm:$0xff]
        %v4425 = vld [vmem:[%s1006 + $0xe0] sm:$0xff]
        %v4426 = vld [vmem:[%s1006 + $0xe8] sm:$0xff]
        %v4427 = vld [vmem:[%s1006 + $0xf0] sm:$0xff]
        %v4428 = vld [vmem:[%s1006 + $0xf8] sm:$0xff]
        %v4429 = vld [vmem:[%s1006 + $0x100] sm:$0xff]
        %v4430 = vld [vmem:[%s1006 + $0x108] sm:$0xff]
        %v4431 = vld [vmem:[%s1006 + $0x110] sm:$0xff]
        %v4432 = vld [vmem:[%s1006 + $0x118] sm:$0xff]
        %v4433 = vld [vmem:[%s1006 + $0x120] sm:$0xff]
        %v4434 = vld [vmem:[%s1006 + $0x128] sm:$0xff]
        %v4435 = vld [vmem:[%s1006 + $0x130] sm:$0xff]
        %v4436 = vld [vmem:[%s1006 + $0x138] sm:$0xff]
        %v4437 = vld [vmem:[%s1006 + $0x140] sm:$0xff]
        %v4438 = vld [vmem:[%s1006 + $0x148] sm:$0xff]
        %v4439 = vld [vmem:[%s1006 + $0x150] sm:$0xff]
        %v4440 = vld [vmem:[%s1006 + $0x158] sm:$0xff]
        %v4441 = vld [vmem:[%s1006 + $0x160] sm:$0xff]
        %v4442 = vld [vmem:[%s1006 + $0x168] sm:$0xff]
        %v4443 = vld [vmem:[%s1006 + $0x170] sm:$0xff]
        %v4444 = vld [vmem:[%s1006 + $0x178] sm:$0xff]
        %v4445 = vld [vmem:[%s1006 + $0x180] sm:$0xff]
        %v4446 = vld [vmem:[%s1006 + $0x188] sm:$0xff]
        %v4447 = vld [vmem:[%s1006 + $0x190] sm:$0xff]
        %v4448 = vld [vmem:[%s1006 + $0x198] sm:$0xff]
        %v4449 = vld [vmem:[%s1006 + $0x1a0] sm:$0xff]
        %v4450 = vld [vmem:[%s1006 + $0x1a8] sm:$0xff]
        %v4451 = vld [vmem:[%s1006 + $0x1b0] sm:$0xff]
        %v4452 = vld [vmem:[%s1006 + $0x1b8] sm:$0xff]
        %v4453 = vld [vmem:[%s1006 + $0x1c0] sm:$0xff]
        %v4454 = vld [vmem:[%s1006 + $0x1c8] sm:$0xff]
        %v4455 = vld [vmem:[%s1006 + $0x1d0] sm:$0xff]
        %v4456 = vld [vmem:[%s1006 + $0x1d8] sm:$0xff]
        %v4457 = vld [vmem:[%s1006 + $0x1e0] sm:$0xff]
        %v4458 = vld [vmem:[%s1006 + $0x1e8] sm:$0xff]
        %v4459 = vld [vmem:[%s1006 + $0x1f0] sm:$0xff]
        %v4460 = vld [vmem:[%s1006 + $0x1f8] sm:$0xff]
        %v4461 = vld [vmem:[%s1268] sm:$0x3]
        %v4463 = vlaneseq
        %v4464 = vshrl.u32 %v4463, 7
        %v4465 = vsub.s32 0, %v4464
        %v4466 = vrot.slane %v4461, %v4465
        %v4467 = vlaneseq
        %v4468 = vshrl.u32 %v4467, 7
        %v4469 = vsub.s32 1, %v4468
        %v4470 = vrot.slane %v4461, %v4469
        %v4537 = vunpack.c.l.b16 %v4397
        %v4538 = vunpack.c.h.b16 %v4397
        %v4539 = vunpack.c.l.b16 %v4398
        %v4540 = vunpack.c.h.b16 %v4398
        %v4541 = vunpack.c.l.b16 %v4399
        %v4542 = vunpack.c.h.b16 %v4399
        %v4543 = vunpack.c.l.b16 %v4400
        %v4544 = vunpack.c.h.b16 %v4400
        %v4545 = vunpack.c.l.b16 %v4401
        %v4546 = vunpack.c.h.b16 %v4401
        %v4547 = vunpack.c.l.b16 %v4402
        %v4548 = vunpack.c.h.b16 %v4402
        %v4549 = vunpack.c.l.b16 %v4403
        %v4550 = vunpack.c.h.b16 %v4403
        %v4551 = vunpack.c.l.b16 %v4404
        %v4552 = vunpack.c.h.b16 %v4404
        %v4553 = vunpack.c.l.b16 %v4405
        %v4554 = vunpack.c.h.b16 %v4405
        %v4555 = vunpack.c.l.b16 %v4406
        %v4556 = vunpack.c.h.b16 %v4406
        %v4557 = vunpack.c.l.b16 %v4407
        %v4558 = vunpack.c.h.b16 %v4407
        %v4559 = vunpack.c.l.b16 %v4408
        %v4560 = vunpack.c.h.b16 %v4408
        %v4561 = vunpack.c.l.b16 %v4409
        %v4562 = vunpack.c.h.b16 %v4409
        %v4563 = vunpack.c.l.b16 %v4410
        %v4564 = vunpack.c.h.b16 %v4410
        %v4565 = vunpack.c.l.b16 %v4411
        %v4566 = vunpack.c.h.b16 %v4411
        %v4567 = vunpack.c.l.b16 %v4412
        %v4568 = vunpack.c.h.b16 %v4412
        %v4569 = vunpack.c.l.b16 %v4413
        %v4570 = vunpack.c.h.b16 %v4413
        %v4571 = vunpack.c.l.b16 %v4414
        %v4572 = vunpack.c.h.b16 %v4414
        %v4573 = vunpack.c.l.b16 %v4415
        %v4574 = vunpack.c.h.b16 %v4415
        %v4575 = vunpack.c.l.b16 %v4416
        %v4576 = vunpack.c.h.b16 %v4416
        %v4577 = vunpack.c.l.b16 %v4417
        %v4578 = vunpack.c.h.b16 %v4417
        %v4579 = vunpack.c.l.b16 %v4418
        %v4580 = vunpack.c.h.b16 %v4418
        %v4581 = vunpack.c.l.b16 %v4419
        %v4582 = vunpack.c.h.b16 %v4419
        %v4583 = vunpack.c.l.b16 %v4420
        %v4584 = vunpack.c.h.b16 %v4420
        %v4585 = vunpack.c.l.b16 %v4421
        %v4586 = vunpack.c.h.b16 %v4421
        %v4587 = vunpack.c.l.b16 %v4422
        %v4588 = vunpack.c.h.b16 %v4422
        %v4589 = vunpack.c.l.b16 %v4423
        %v4590 = vunpack.c.h.b16 %v4423
        %v4591 = vunpack.c.l.b16 %v4424
        %v4592 = vunpack.c.h.b16 %v4424
        %v4593 = vunpack.c.l.b16 %v4425
        %v4594 = vunpack.c.h.b16 %v4425
        %v4595 = vunpack.c.l.b16 %v4426
        %v4596 = vunpack.c.h.b16 %v4426
        %v4597 = vunpack.c.l.b16 %v4427
        %v4598 = vunpack.c.h.b16 %v4427
        %v4599 = vunpack.c.l.b16 %v4428
        %v4600 = vunpack.c.h.b16 %v4428
        %v4601 = vunpack.c.l.b16 %v4429
        %v4602 = vunpack.c.h.b16 %v4429
        %v4603 = vunpack.c.l.b16 %v4430
        %v4604 = vunpack.c.h.b16 %v4430
        %v4605 = vunpack.c.l.b16 %v4431
        %v4606 = vunpack.c.h.b16 %v4431
        %v4607 = vunpack.c.l.b16 %v4432
        %v4608 = vunpack.c.h.b16 %v4432
        %v4609 = vunpack.c.l.b16 %v4433
        %v4610 = vunpack.c.h.b16 %v4433
        %v4611 = vunpack.c.l.b16 %v4434
        %v4612 = vunpack.c.h.b16 %v4434
        %v4613 = vunpack.c.l.b16 %v4435
        %v4614 = vunpack.c.h.b16 %v4435
        %v4615 = vunpack.c.l.b16 %v4436
        %v4616 = vunpack.c.h.b16 %v4436
        %v4617 = vunpack.c.l.b16 %v4437
        %v4618 = vunpack.c.h.b16 %v4437
        %v4619 = vunpack.c.l.b16 %v4438
        %v4620 = vunpack.c.h.b16 %v4438
        %v4621 = vunpack.c.l.b16 %v4439
        %v4622 = vunpack.c.h.b16 %v4439
        %v4623 = vunpack.c.l.b16 %v4440
        %v4624 = vunpack.c.h.b16 %v4440
        %v4625 = vunpack.c.l.b16 %v4441
        %v4626 = vunpack.c.h.b16 %v4441
        %v4627 = vunpack.c.l.b16 %v4442
        %v4628 = vunpack.c.h.b16 %v4442
        %v4629 = vunpack.c.l.b16 %v4443
        %v4630 = vunpack.c.h.b16 %v4443
        %v4631 = vunpack.c.l.b16 %v4444
        %v4632 = vunpack.c.h.b16 %v4444
        %v4633 = vunpack.c.l.b16 %v4445
        %v4634 = vunpack.c.h.b16 %v4445
        %v4635 = vunpack.c.l.b16 %v4446
        %v4636 = vunpack.c.h.b16 %v4446
        %v4637 = vunpack.c.l.b16 %v4447
        %v4638 = vunpack.c.h.b16 %v4447
        %v4639 = vunpack.c.l.b16 %v4448
        %v4640 = vunpack.c.h.b16 %v4448
        %v4641 = vunpack.c.l.b16 %v4449
        %v4642 = vunpack.c.h.b16 %v4449
        %v4643 = vunpack.c.l.b16 %v4450
        %v4644 = vunpack.c.h.b16 %v4450
        %v4645 = vunpack.c.l.b16 %v4451
        %v4646 = vunpack.c.h.b16 %v4451
        %v4647 = vunpack.c.l.b16 %v4452
        %v4648 = vunpack.c.h.b16 %v4452
        %v4649 = vunpack.c.l.b16 %v4453
        %v4650 = vunpack.c.h.b16 %v4453
        %v4651 = vunpack.c.l.b16 %v4454
        %v4652 = vunpack.c.h.b16 %v4454
        %v4653 = vunpack.c.l.b16 %v4455
        %v4654 = vunpack.c.h.b16 %v4455
        %v4655 = vunpack.c.l.b16 %v4456
        %v4656 = vunpack.c.h.b16 %v4456
        %v4657 = vunpack.c.l.b16 %v4457
        %v4658 = vunpack.c.h.b16 %v4457
        %v4659 = vunpack.c.l.b16 %v4458
        %v4660 = vunpack.c.h.b16 %v4458
        %v4661 = vunpack.c.l.b16 %v4459
        %v4662 = vunpack.c.h.b16 %v4459
        %v4663 = vunpack.c.l.b16 %v4460
        %v4664 = vunpack.c.h.b16 %v4460
        %v4665 = vpack.c.b16 %v4539, %v4537
        %v4666 = vpack.c.b16 %v4540, %v4538
        %v4667 = vpack.c.b16 %v4543, %v4541
        %v4668 = vpack.c.b16 %v4544, %v4542
        %v4669 = vpack.c.b16 %v4547, %v4545
        %v4670 = vpack.c.b16 %v4548, %v4546
        %v4671 = vpack.c.b16 %v4551, %v4549
        %v4672 = vpack.c.b16 %v4552, %v4550
        %v4673 = vpack.c.b16 %v4555, %v4553
        %v4674 = vpack.c.b16 %v4556, %v4554
        %v4675 = vpack.c.b16 %v4559, %v4557
        %v4676 = vpack.c.b16 %v4560, %v4558
        %v4677 = vpack.c.b16 %v4563, %v4561
        %v4678 = vpack.c.b16 %v4564, %v4562
        %v4679 = vpack.c.b16 %v4567, %v4565
        %v4680 = vpack.c.b16 %v4568, %v4566
        %v4681 = vpack.c.b16 %v4571, %v4569
        %v4682 = vpack.c.b16 %v4572, %v4570
        %v4683 = vpack.c.b16 %v4575, %v4573
        %v4684 = vpack.c.b16 %v4576, %v4574
        %v4685 = vpack.c.b16 %v4579, %v4577
        %v4686 = vpack.c.b16 %v4580, %v4578
        %v4687 = vpack.c.b16 %v4583, %v4581
        %v4688 = vpack.c.b16 %v4584, %v4582
        %v4689 = vpack.c.b16 %v4587, %v4585
        %v4690 = vpack.c.b16 %v4588, %v4586
        %v4691 = vpack.c.b16 %v4591, %v4589
        %v4692 = vpack.c.b16 %v4592, %v4590
        %v4693 = vpack.c.b16 %v4595, %v4593
        %v4694 = vpack.c.b16 %v4596, %v4594
        %v4695 = vpack.c.b16 %v4599, %v4597
        %v4696 = vpack.c.b16 %v4600, %v4598
        %v4697 = vpack.c.b16 %v4603, %v4601
        %v4698 = vpack.c.b16 %v4604, %v4602
        %v4699 = vpack.c.b16 %v4607, %v4605
        %v4700 = vpack.c.b16 %v4608, %v4606
        %v4701 = vpack.c.b16 %v4611, %v4609
        %v4702 = vpack.c.b16 %v4612, %v4610
        %v4703 = vpack.c.b16 %v4615, %v4613
        %v4704 = vpack.c.b16 %v4616, %v4614
        %v4705 = vpack.c.b16 %v4619, %v4617
        %v4706 = vpack.c.b16 %v4620, %v4618
        %v4707 = vpack.c.b16 %v4623, %v4621
        %v4708 = vpack.c.b16 %v4624, %v4622
        %v4709 = vpack.c.b16 %v4627, %v4625
        %v4710 = vpack.c.b16 %v4628, %v4626
        %v4711 = vpack.c.b16 %v4631, %v4629
        %v4712 = vpack.c.b16 %v4632, %v4630
        %v4713 = vpack.c.b16 %v4635, %v4633
        %v4714 = vpack.c.b16 %v4636, %v4634
        %v4715 = vpack.c.b16 %v4639, %v4637
        %v4716 = vpack.c.b16 %v4640, %v4638
        %v4717 = vpack.c.b16 %v4643, %v4641
        %v4718 = vpack.c.b16 %v4644, %v4642
        %v4719 = vpack.c.b16 %v4647, %v4645
        %v4720 = vpack.c.b16 %v4648, %v4646
        %v4721 = vpack.c.b16 %v4651, %v4649
        %v4722 = vpack.c.b16 %v4652, %v4650
        %v4723 = vpack.c.b16 %v4655, %v4653
        %v4724 = vpack.c.b16 %v4656, %v4654
        %v4725 = vpack.c.b16 %v4659, %v4657
        %v4726 = vpack.c.b16 %v4660, %v4658
        %v4727 = vpack.c.b16 %v4663, %v4661
        %v4728 = vpack.c.b16 %v4664, %v4662
        %4793 = vmatprep.subr.bf16.mxu0 %v4666
        %4794 = vmatpush1.bf16.msra.mxu0 %v4665
        %4795 = vmatprep.subr.bf16.mxu0 %v4668
        %4796 = vmatpush1.bf16.msra.mxu0 %v4667
        %4797 = vmatprep.subr.bf16.mxu0 %v4670
        %4798 = vmatpush1.bf16.msra.mxu0 %v4669
        %4799 = vmatprep.subr.bf16.mxu0 %v4672
        %4800 = vmatpush1.bf16.msra.mxu0 %v4671
        %4801 = vmatprep.subr.bf16.mxu0 %v4674
        %4802 = vmatpush1.bf16.msra.mxu0 %v4673
        %4803 = vmatprep.subr.bf16.mxu0 %v4676
        %4804 = vmatpush1.bf16.msra.mxu0 %v4675
        %4805 = vmatprep.subr.bf16.mxu0 %v4678
        %4806 = vmatpush1.bf16.msra.mxu0 %v4677
        %4807 = vmatprep.subr.bf16.mxu0 %v4680
        %4808 = vmatpush1.bf16.msra.mxu0 %v4679
        %4809 = vmatprep.subr.bf16.mxu0 %v4682
        %4810 = vmatpush1.bf16.msra.mxu0 %v4681
        %4811 = vmatprep.subr.bf16.mxu0 %v4684
        %4812 = vmatpush1.bf16.msra.mxu0 %v4683
        %4813 = vmatprep.subr.bf16.mxu0 %v4686
        %4814 = vmatpush1.bf16.msra.mxu0 %v4685
        %4815 = vmatprep.subr.bf16.mxu0 %v4688
        %4816 = vmatpush1.bf16.msra.mxu0 %v4687
        %4817 = vmatprep.subr.bf16.mxu0 %v4690
        %4818 = vmatpush1.bf16.msra.mxu0 %v4689
        %4819 = vmatprep.subr.bf16.mxu0 %v4692
        %4820 = vmatpush1.bf16.msra.mxu0 %v4691
        %4821 = vmatprep.subr.bf16.mxu0 %v4694
        %4822 = vmatpush1.bf16.msra.mxu0 %v4693
        %4823 = vmatprep.subr.bf16.mxu0 %v4696
        %4824 = vmatpush1.bf16.msra.mxu0 %v4695
        %4825 = vmatprep.mubr.bf16.mxu0 %v4394
        %4826 = vmatmul.mubr.bf16.gmra.mrb[0].mxu0 %v4393
        %v4827 = vpop.f32.mrb[0].mxu0
        %v4828 = vadd.f32 %v4466, %v4827
        %v4829 = vpop.f32.mrb[0].mxu0
        %v4830 = vadd.f32 %v4470, %v4829
        %v4831 = vpop.f32.mrb[0].mxu0
        %v4832 = vadd.f32 %v4466, %v4831
        %v4833 = vpop.f32.mrb[0].mxu0
        %v4834 = vadd.f32 %v4470, %v4833
        %4835 = vdwg.mxu0
        %4836 = vmatprep.subr.bf16.mxu0 %v4698
        %4837 = vmatpush1.bf16.msra.mxu0 %v4697
        %4838 = vmatprep.subr.bf16.mxu0 %v4700
        %4839 = vmatpush1.bf16.msra.mxu0 %v4699
        %4840 = vmatprep.subr.bf16.mxu0 %v4702
        %4841 = vmatpush1.bf16.msra.mxu0 %v4701
        %4842 = vmatprep.subr.bf16.mxu0 %v4704
        %4843 = vmatpush1.bf16.msra.mxu0 %v4703
        %4844 = vmatprep.subr.bf16.mxu0 %v4706
        %4845 = vmatpush1.bf16.msra.mxu0 %v4705
        %4846 = vmatprep.subr.bf16.mxu0 %v4708
        %4847 = vmatpush1.bf16.msra.mxu0 %v4707
        %4848 = vmatprep.subr.bf16.mxu0 %v4710
        %4849 = vmatpush1.bf16.msra.mxu0 %v4709
        %4850 = vmatprep.subr.bf16.mxu0 %v4712
        %4851 = vmatpush1.bf16.msra.mxu0 %v4711
        %4852 = vmatprep.subr.bf16.mxu0 %v4714
        %4853 = vmatpush1.bf16.msra.mxu0 %v4713
        %4854 = vmatprep.subr.bf16.mxu0 %v4716
        %4855 = vmatpush1.bf16.msra.mxu0 %v4715
        %4856 = vmatprep.subr.bf16.mxu0 %v4718
        %4857 = vmatpush1.bf16.msra.mxu0 %v4717
        %4858 = vmatprep.subr.bf16.mxu0 %v4720
        %4859 = vmatpush1.bf16.msra.mxu0 %v4719
        %4860 = vmatprep.subr.bf16.mxu0 %v4722
        %4861 = vmatpush1.bf16.msra.mxu0 %v4721
        %4862 = vmatprep.subr.bf16.mxu0 %v4724
        %4863 = vmatpush1.bf16.msra.mxu0 %v4723
        %4864 = vmatprep.subr.bf16.mxu0 %v4726
        %4865 = vmatpush1.bf16.msra.mxu0 %v4725
        %4866 = vmatprep.subr.bf16.mxu0 %v4728
        %4867 = vmatpush1.bf16.msra.mxu0 %v4727
        %4868 = vmatprep.mubr.bf16.mxu0 %v4396
        %4869 = vmatmul.mubr.bf16.gmra.mrb[0].mxu0 %v4395
        %v4870 = vpop.f32.mrb[0].mxu0
        %v4871 = vadd.f32 %v4828, %v4870
        %v4872 = vpop.f32.mrb[0].mxu0
        %v4873 = vadd.f32 %v4830, %v4872
        %v4874 = vpop.f32.mrb[0].mxu0
        %v4875 = vadd.f32 %v4832, %v4874
        %v4876 = vpop.f32.mrb[0].mxu0
        %v4877 = vadd.f32 %v4834, %v4876
        %4878 = vdwg.mxu0
        %v4879 = vmax.f32 %v4871, 0.0
        %v4880 = vmax.f32 %v4873, 0.0
        %v4881 = vmax.f32 %v4875, 0.0
        %v4882 = vmax.f32 %v4877, 0.0
        %v4883 = vpack.c.bf16 %v4881, %v4879
        %v4884 = vpack.c.bf16 %v4882, %v4880
        %v4885 = vld [vmem:[%s1015] sm:$0xff]
        %v4886 = vld [vmem:[%s1015 + $0x8] sm:$0xff]
        %v4887 = vld [vmem:[%s1015 + $0x10] sm:$0xff]
        %v4888 = vld [vmem:[%s1015 + $0x18] sm:$0xff]
        %v4889 = vld [vmem:[%s1015 + $0x20] sm:$0xff]
        %v4890 = vld [vmem:[%s1015 + $0x28] sm:$0xff]
        %v4891 = vld [vmem:[%s1015 + $0x30] sm:$0xff]
        %v4892 = vld [vmem:[%s1015 + $0x38] sm:$0xff]
        %v4893 = vld [vmem:[%s1015 + $0x40] sm:$0xff]
        %v4894 = vld [vmem:[%s1015 + $0x48] sm:$0xff]
        %v4895 = vld [vmem:[%s1015 + $0x50] sm:$0xff]
        %v4896 = vld [vmem:[%s1015 + $0x58] sm:$0xff]
        %v4897 = vld [vmem:[%s1015 + $0x60] sm:$0xff]
        %v4898 = vld [vmem:[%s1015 + $0x68] sm:$0xff]
        %v4899 = vld [vmem:[%s1015 + $0x70] sm:$0xff]
        %v4900 = vld [vmem:[%s1015 + $0x78] sm:$0xff]
        %v4901 = vld [vmem:[%s1015 + $0x80] sm:$0xff]
        %v4902 = vld [vmem:[%s1015 + $0x88] sm:$0xff]
        %v4903 = vld [vmem:[%s1015 + $0x90] sm:$0xff]
        %v4904 = vld [vmem:[%s1015 + $0x98] sm:$0xff]
        %v4905 = vld [vmem:[%s1015 + $0xa0] sm:$0xff]
        %v4906 = vld [vmem:[%s1015 + $0xa8] sm:$0xff]
        %v4907 = vld [vmem:[%s1015 + $0xb0] sm:$0xff]
        %v4908 = vld [vmem:[%s1015 + $0xb8] sm:$0xff]
        %v4909 = vld [vmem:[%s1015 + $0xc0] sm:$0xff]
        %v4910 = vld [vmem:[%s1015 + $0xc8] sm:$0xff]
        %v4911 = vld [vmem:[%s1015 + $0xd0] sm:$0xff]
        %v4912 = vld [vmem:[%s1015 + $0xd8] sm:$0xff]
        %v4913 = vld [vmem:[%s1015 + $0xe0] sm:$0xff]
        %v4914 = vld [vmem:[%s1015 + $0xe8] sm:$0xff]
        %v4915 = vld [vmem:[%s1015 + $0xf0] sm:$0xff]
        %v4916 = vld [vmem:[%s1015 + $0xf8] sm:$0xff]
        %v4917 = vld [vmem:[%s1272] sm:$0x3]
        %v4919 = vlaneseq
        %v4920 = vshrl.u32 %v4919, 7
        %v4921 = vsub.s32 0, %v4920
        %v4922 = vrot.slane %v4917, %v4921
        %v4923 = vlaneseq
        %v4924 = vshrl.u32 %v4923, 7
        %v4925 = vsub.s32 1, %v4924
        %v4926 = vrot.slane %v4917, %v4925
        %v4961 = vunpack.c.l.b16 %v4885
        %v4962 = vunpack.c.h.b16 %v4885
        %v4963 = vunpack.c.l.b16 %v4886
        %v4964 = vunpack.c.h.b16 %v4886
        %v4965 = vunpack.c.l.b16 %v4887
        %v4966 = vunpack.c.h.b16 %v4887
        %v4967 = vunpack.c.l.b16 %v4888
        %v4968 = vunpack.c.h.b16 %v4888
        %v4969 = vunpack.c.l.b16 %v4889
        %v4970 = vunpack.c.h.b16 %v4889
        %v4971 = vunpack.c.l.b16 %v4890
        %v4972 = vunpack.c.h.b16 %v4890
        %v4973 = vunpack.c.l.b16 %v4891
        %v4974 = vunpack.c.h.b16 %v4891
        %v4975 = vunpack.c.l.b16 %v4892
        %v4976 = vunpack.c.h.b16 %v4892
        %v4977 = vunpack.c.l.b16 %v4893
        %v4978 = vunpack.c.h.b16 %v4893
        %v4979 = vunpack.c.l.b16 %v4894
        %v4980 = vunpack.c.h.b16 %v4894
        %v4981 = vunpack.c.l.b16 %v4895
        %v4982 = vunpack.c.h.b16 %v4895
        %v4983 = vunpack.c.l.b16 %v4896
        %v4984 = vunpack.c.h.b16 %v4896
        %v4985 = vunpack.c.l.b16 %v4897
        %v4986 = vunpack.c.h.b16 %v4897
        %v4987 = vunpack.c.l.b16 %v4898
        %v4988 = vunpack.c.h.b16 %v4898
        %v4989 = vunpack.c.l.b16 %v4899
        %v4990 = vunpack.c.h.b16 %v4899
        %v4991 = vunpack.c.l.b16 %v4900
        %v4992 = vunpack.c.h.b16 %v4900
        %v4993 = vunpack.c.l.b16 %v4901
        %v4994 = vunpack.c.h.b16 %v4901
        %v4995 = vunpack.c.l.b16 %v4902
        %v4996 = vunpack.c.h.b16 %v4902
        %v4997 = vunpack.c.l.b16 %v4903
        %v4998 = vunpack.c.h.b16 %v4903
        %v4999 = vunpack.c.l.b16 %v4904
        %v5000 = vunpack.c.h.b16 %v4904
        %v5001 = vunpack.c.l.b16 %v4905
        %v5002 = vunpack.c.h.b16 %v4905
        %v5003 = vunpack.c.l.b16 %v4906
        %v5004 = vunpack.c.h.b16 %v4906
        %v5005 = vunpack.c.l.b16 %v4907
        %v5006 = vunpack.c.h.b16 %v4907
        %v5007 = vunpack.c.l.b16 %v4908
        %v5008 = vunpack.c.h.b16 %v4908
        %v5009 = vunpack.c.l.b16 %v4909
        %v5010 = vunpack.c.h.b16 %v4909
        %v5011 = vunpack.c.l.b16 %v4910
        %v5012 = vunpack.c.h.b16 %v4910
        %v5013 = vunpack.c.l.b16 %v4911
        %v5014 = vunpack.c.h.b16 %v4911
        %v5015 = vunpack.c.l.b16 %v4912
        %v5016 = vunpack.c.h.b16 %v4912
        %v5017 = vunpack.c.l.b16 %v4913
        %v5018 = vunpack.c.h.b16 %v4913
        %v5019 = vunpack.c.l.b16 %v4914
        %v5020 = vunpack.c.h.b16 %v4914
        %v5021 = vunpack.c.l.b16 %v4915
        %v5022 = vunpack.c.h.b16 %v4915
        %v5023 = vunpack.c.l.b16 %v4916
        %v5024 = vunpack.c.h.b16 %v4916
        %v5025 = vpack.c.b16 %v4963, %v4961
        %v5026 = vpack.c.b16 %v4964, %v4962
        %v5027 = vpack.c.b16 %v4967, %v4965
        %v5028 = vpack.c.b16 %v4968, %v4966
        %v5029 = vpack.c.b16 %v4971, %v4969
        %v5030 = vpack.c.b16 %v4972, %v4970
        %v5031 = vpack.c.b16 %v4975, %v4973
        %v5032 = vpack.c.b16 %v4976, %v4974
        %v5033 = vpack.c.b16 %v4979, %v4977
        %v5034 = vpack.c.b16 %v4980, %v4978
        %v5035 = vpack.c.b16 %v4983, %v4981
        %v5036 = vpack.c.b16 %v4984, %v4982
        %v5037 = vpack.c.b16 %v4987, %v4985
        %v5038 = vpack.c.b16 %v4988, %v4986
        %v5039 = vpack.c.b16 %v4991, %v4989
        %v5040 = vpack.c.b16 %v4992, %v4990
        %v5041 = vpack.c.b16 %v4995, %v4993
        %v5042 = vpack.c.b16 %v4996, %v4994
        %v5043 = vpack.c.b16 %v4999, %v4997
        %v5044 = vpack.c.b16 %v5000, %v4998
        %v5045 = vpack.c.b16 %v5003, %v5001
        %v5046 = vpack.c.b16 %v5004, %v5002
        %v5047 = vpack.c.b16 %v5007, %v5005
        %v5048 = vpack.c.b16 %v5008, %v5006
        %v5049 = vpack.c.b16 %v5011, %v5009
        %v5050 = vpack.c.b16 %v5012, %v5010
        %v5051 = vpack.c.b16 %v5015, %v5013
        %v5052 = vpack.c.b16 %v5016, %v5014
        %v5053 = vpack.c.b16 %v5019, %v5017
        %v5054 = vpack.c.b16 %v5020, %v5018
        %v5055 = vpack.c.b16 %v5023, %v5021
        %v5056 = vpack.c.b16 %v5024, %v5022
        %5089 = vmatprep.subr.bf16.mxu0 %v5026
        %5090 = vmatpush1.bf16.msra.mxu0 %v5025
        %5091 = vmatprep.subr.bf16.mxu0 %v5028
        %5092 = vmatpush1.bf16.msra.mxu0 %v5027
        %5093 = vmatprep.subr.bf16.mxu0 %v5030
        %5094 = vmatpush1.bf16.msra.mxu0 %v5029
        %5095 = vmatprep.subr.bf16.mxu0 %v5032
        %5096 = vmatpush1.bf16.msra.mxu0 %v5031
        %5097 = vmatprep.subr.bf16.mxu0 %v5034
        %5098 = vmatpush1.bf16.msra.mxu0 %v5033
        %5099 = vmatprep.subr.bf16.mxu0 %v5036
        %5100 = vmatpush1.bf16.msra.mxu0 %v5035
        %5101 = vmatprep.subr.bf16.mxu0 %v5038
        %5102 = vmatpush1.bf16.msra.mxu0 %v5037
        %5103 = vmatprep.subr.bf16.mxu0 %v5040
        %5104 = vmatpush1.bf16.msra.mxu0 %v5039
        %5105 = vmatprep.subr.bf16.mxu0 %v5042
        %5106 = vmatpush1.bf16.msra.mxu0 %v5041
        %5107 = vmatprep.subr.bf16.mxu0 %v5044
        %5108 = vmatpush1.bf16.msra.mxu0 %v5043
        %5109 = vmatprep.subr.bf16.mxu0 %v5046
        %5110 = vmatpush1.bf16.msra.mxu0 %v5045
        %5111 = vmatprep.subr.bf16.mxu0 %v5048
        %5112 = vmatpush1.bf16.msra.mxu0 %v5047
        %5113 = vmatprep.subr.bf16.mxu0 %v5050
        %5114 = vmatpush1.bf16.msra.mxu0 %v5049
        %5115 = vmatprep.subr.bf16.mxu0 %v5052
        %5116 = vmatpush1.bf16.msra.mxu0 %v5051
        %5117 = vmatprep.subr.bf16.mxu0 %v5054
        %5118 = vmatpush1.bf16.msra.mxu0 %v5053
        %5119 = vmatprep.subr.bf16.mxu0 %v5056
        %5120 = vmatpush1.bf16.msra.mxu0 %v5055
        %5121 = vmatprep.mubr.bf16.mxu0 %v4884
        %5122 = vmatmul.mubr.bf16.gmra.mrb[0].mxu0 %v4883
        %v5123 = vpop.f32.mrb[0].mxu0
        %v5124 = vadd.f32 %v4922, %v5123
        %v5125 = vpop.f32.mrb[0].mxu0
        %v5126 = vadd.f32 %v4926, %v5125
        %v5127 = vpop.f32.mrb[0].mxu0
        %v5128 = vadd.f32 %v4922, %v5127
        %v5129 = vpop.f32.mrb[0].mxu0
        %v5130 = vadd.f32 %v4926, %v5129
        %5131 = vdwg.mxu0
        %v5132 = vmax.f32 %v5124, 0.0
        %v5133 = vmax.f32 %v5126, 0.0
        %v5134 = vmax.f32 %v5128, 0.0
        %v5135 = vmax.f32 %v5130, 0.0
        %v5136 = vpack.c.bf16 %v5134, %v5132
        %v5137 = vpack.c.bf16 %v5135, %v5133
        %v5138 = vld [vmem:[%s1024] sm:$0xff]
        %v5139 = vld [vmem:[%s1024 + $0x8] sm:$0xff]
        %v5140 = vld [vmem:[%s1024 + $0x10] sm:$0xff]
        %v5141 = vld [vmem:[%s1024 + $0x18] sm:$0xff]
        %v5142 = vld [vmem:[%s1024 + $0x20] sm:$0xff]
        %v5143 = vld [vmem:[%s1024 + $0x28] sm:$0xff]
        %v5144 = vld [vmem:[%s1024 + $0x30] sm:$0xff]
        %v5145 = vld [vmem:[%s1024 + $0x38] sm:$0xff]
        %v5146 = vld [vmem:[%s1024 + $0x40] sm:$0xff]
        %v5147 = vld [vmem:[%s1024 + $0x48] sm:$0xff]
        %v5148 = vld [vmem:[%s1024 + $0x50] sm:$0xff]
        %v5149 = vld [vmem:[%s1024 + $0x58] sm:$0xff]
        %v5150 = vld [vmem:[%s1024 + $0x60] sm:$0xff]
        %v5151 = vld [vmem:[%s1024 + $0x68] sm:$0xff]
        %v5152 = vld [vmem:[%s1024 + $0x70] sm:$0xff]
        %v5153 = vld [vmem:[%s1024 + $0x78] sm:$0xff]
        %v5154 = vld [vmem:[%s1024 + $0x80] sm:$0xff]
        %v5155 = vld [vmem:[%s1024 + $0x88] sm:$0xff]
        %v5156 = vld [vmem:[%s1024 + $0x90] sm:$0xff]
        %v5157 = vld [vmem:[%s1024 + $0x98] sm:$0xff]
        %v5158 = vld [vmem:[%s1024 + $0xa0] sm:$0xff]
        %v5159 = vld [vmem:[%s1024 + $0xa8] sm:$0xff]
        %v5160 = vld [vmem:[%s1024 + $0xb0] sm:$0xff]
        %v5161 = vld [vmem:[%s1024 + $0xb8] sm:$0xff]
        %v5162 = vld [vmem:[%s1024 + $0xc0] sm:$0xff]
        %v5163 = vld [vmem:[%s1024 + $0xc8] sm:$0xff]
        %v5164 = vld [vmem:[%s1024 + $0xd0] sm:$0xff]
        %v5165 = vld [vmem:[%s1024 + $0xd8] sm:$0xff]
        %v5166 = vld [vmem:[%s1024 + $0xe0] sm:$0xff]
        %v5167 = vld [vmem:[%s1024 + $0xe8] sm:$0xff]
        %v5168 = vld [vmem:[%s1024 + $0xf0] sm:$0xff]
        %v5169 = vld [vmem:[%s1024 + $0xf8] sm:$0xff]
        %v5170 = vld [vmem:[%s1024 + $0x100] sm:$0xff]
        %v5171 = vld [vmem:[%s1024 + $0x108] sm:$0xff]
        %v5172 = vld [vmem:[%s1024 + $0x110] sm:$0xff]
        %v5173 = vld [vmem:[%s1024 + $0x118] sm:$0xff]
        %v5174 = vld [vmem:[%s1024 + $0x120] sm:$0xff]
        %v5175 = vld [vmem:[%s1024 + $0x128] sm:$0xff]
        %v5176 = vld [vmem:[%s1024 + $0x130] sm:$0xff]
        %v5177 = vld [vmem:[%s1024 + $0x138] sm:$0xff]
        %v5178 = vld [vmem:[%s1024 + $0x140] sm:$0xff]
        %v5179 = vld [vmem:[%s1024 + $0x148] sm:$0xff]
        %v5180 = vld [vmem:[%s1024 + $0x150] sm:$0xff]
        %v5181 = vld [vmem:[%s1024 + $0x158] sm:$0xff]
        %v5182 = vld [vmem:[%s1024 + $0x160] sm:$0xff]
        %v5183 = vld [vmem:[%s1024 + $0x168] sm:$0xff]
        %v5184 = vld [vmem:[%s1024 + $0x170] sm:$0xff]
        %v5185 = vld [vmem:[%s1024 + $0x178] sm:$0xff]
        %v5186 = vld [vmem:[%s1024 + $0x180] sm:$0xff]
        %v5187 = vld [vmem:[%s1024 + $0x188] sm:$0xff]
        %v5188 = vld [vmem:[%s1024 + $0x190] sm:$0xff]
        %v5189 = vld [vmem:[%s1024 + $0x198] sm:$0xff]
        %v5190 = vld [vmem:[%s1024 + $0x1a0] sm:$0xff]
        %v5191 = vld [vmem:[%s1024 + $0x1a8] sm:$0xff]
        %v5192 = vld [vmem:[%s1024 + $0x1b0] sm:$0xff]
        %v5193 = vld [vmem:[%s1024 + $0x1b8] sm:$0xff]
        %v5194 = vld [vmem:[%s1024 + $0x1c0] sm:$0xff]
        %v5195 = vld [vmem:[%s1024 + $0x1c8] sm:$0xff]
        %v5196 = vld [vmem:[%s1024 + $0x1d0] sm:$0xff]
        %v5197 = vld [vmem:[%s1024 + $0x1d8] sm:$0xff]
        %v5198 = vld [vmem:[%s1024 + $0x1e0] sm:$0xff]
        %v5199 = vld [vmem:[%s1024 + $0x1e8] sm:$0xff]
        %v5200 = vld [vmem:[%s1024 + $0x1f0] sm:$0xff]
        %v5201 = vld [vmem:[%s1024 + $0x1f8] sm:$0xff]
        %v5202 = vld [vmem:[%s1276] sm:$0xf]
        %v5204 = vlaneseq
        %v5205 = vshrl.u32 %v5204, 7
        %v5206 = vsub.s32 0, %v5205
        %v5207 = vrot.slane %v5202, %v5206
        %v5208 = vlaneseq
        %v5209 = vshrl.u32 %v5208, 7
        %v5210 = vsub.s32 1, %v5209
        %v5211 = vrot.slane %v5202, %v5210
        %v5212 = vlaneseq
        %v5213 = vshrl.u32 %v5212, 7
        %v5214 = vsub.s32 2, %v5213
        %v5215 = vrot.slane %v5202, %v5214
        %v5216 = vlaneseq
        %v5217 = vshrl.u32 %v5216, 7
        %v5218 = vsub.s32 3, %v5217
        %v5219 = vrot.slane %v5202, %v5218
        %v5288 = vunpack.c.l.b16 %v5138
        %v5289 = vunpack.c.h.b16 %v5138
        %v5290 = vunpack.c.l.b16 %v5139
        %v5291 = vunpack.c.h.b16 %v5139
        %v5292 = vunpack.c.l.b16 %v5140
        %v5293 = vunpack.c.h.b16 %v5140
        %v5294 = vunpack.c.l.b16 %v5141
        %v5295 = vunpack.c.h.b16 %v5141
        %v5296 = vunpack.c.l.b16 %v5142
        %v5297 = vunpack.c.h.b16 %v5142
        %v5298 = vunpack.c.l.b16 %v5143
        %v5299 = vunpack.c.h.b16 %v5143
        %v5300 = vunpack.c.l.b16 %v5144
        %v5301 = vunpack.c.h.b16 %v5144
        %v5302 = vunpack.c.l.b16 %v5145
        %v5303 = vunpack.c.h.b16 %v5145
        %v5304 = vunpack.c.l.b16 %v5146
        %v5305 = vunpack.c.h.b16 %v5146
        %v5306 = vunpack.c.l.b16 %v5147
        %v5307 = vunpack.c.h.b16 %v5147
        %v5308 = vunpack.c.l.b16 %v5148
        %v5309 = vunpack.c.h.b16 %v5148
        %v5310 = vunpack.c.l.b16 %v5149
        %v5311 = vunpack.c.h.b16 %v5149
        %v5312 = vunpack.c.l.b16 %v5150
        %v5313 = vunpack.c.h.b16 %v5150
        %v5314 = vunpack.c.l.b16 %v5151
        %v5315 = vunpack.c.h.b16 %v5151
        %v5316 = vunpack.c.l.b16 %v5152
        %v5317 = vunpack.c.h.b16 %v5152
        %v5318 = vunpack.c.l.b16 %v5153
        %v5319 = vunpack.c.h.b16 %v5153
        %v5320 = vunpack.c.l.b16 %v5154
        %v5321 = vunpack.c.h.b16 %v5154
        %v5322 = vunpack.c.l.b16 %v5155
        %v5323 = vunpack.c.h.b16 %v5155
        %v5324 = vunpack.c.l.b16 %v5156
        %v5325 = vunpack.c.h.b16 %v5156
        %v5326 = vunpack.c.l.b16 %v5157
        %v5327 = vunpack.c.h.b16 %v5157
        %v5328 = vunpack.c.l.b16 %v5158
        %v5329 = vunpack.c.h.b16 %v5158
        %v5330 = vunpack.c.l.b16 %v5159
        %v5331 = vunpack.c.h.b16 %v5159
        %v5332 = vunpack.c.l.b16 %v5160
        %v5333 = vunpack.c.h.b16 %v5160
        %v5334 = vunpack.c.l.b16 %v5161
        %v5335 = vunpack.c.h.b16 %v5161
        %v5336 = vunpack.c.l.b16 %v5162
        %v5337 = vunpack.c.h.b16 %v5162
        %v5338 = vunpack.c.l.b16 %v5163
        %v5339 = vunpack.c.h.b16 %v5163
        %v5340 = vunpack.c.l.b16 %v5164
        %v5341 = vunpack.c.h.b16 %v5164
        %v5342 = vunpack.c.l.b16 %v5165
        %v5343 = vunpack.c.h.b16 %v5165
        %v5344 = vunpack.c.l.b16 %v5166
        %v5345 = vunpack.c.h.b16 %v5166
        %v5346 = vunpack.c.l.b16 %v5167
        %v5347 = vunpack.c.h.b16 %v5167
        %v5348 = vunpack.c.l.b16 %v5168
        %v5349 = vunpack.c.h.b16 %v5168
        %v5350 = vunpack.c.l.b16 %v5169
        %v5351 = vunpack.c.h.b16 %v5169
        %v5352 = vunpack.c.l.b16 %v5170
        %v5353 = vunpack.c.h.b16 %v5170
        %v5354 = vunpack.c.l.b16 %v5171
        %v5355 = vunpack.c.h.b16 %v5171
        %v5356 = vunpack.c.l.b16 %v5172
        %v5357 = vunpack.c.h.b16 %v5172
        %v5358 = vunpack.c.l.b16 %v5173
        %v5359 = vunpack.c.h.b16 %v5173
        %v5360 = vunpack.c.l.b16 %v5174
        %v5361 = vunpack.c.h.b16 %v5174
        %v5362 = vunpack.c.l.b16 %v5175
        %v5363 = vunpack.c.h.b16 %v5175
        %v5364 = vunpack.c.l.b16 %v5176
        %v5365 = vunpack.c.h.b16 %v5176
        %v5366 = vunpack.c.l.b16 %v5177
        %v5367 = vunpack.c.h.b16 %v5177
        %v5368 = vunpack.c.l.b16 %v5178
        %v5369 = vunpack.c.h.b16 %v5178
        %v5370 = vunpack.c.l.b16 %v5179
        %v5371 = vunpack.c.h.b16 %v5179
        %v5372 = vunpack.c.l.b16 %v5180
        %v5373 = vunpack.c.h.b16 %v5180
        %v5374 = vunpack.c.l.b16 %v5181
        %v5375 = vunpack.c.h.b16 %v5181
        %v5376 = vunpack.c.l.b16 %v5182
        %v5377 = vunpack.c.h.b16 %v5182
        %v5378 = vunpack.c.l.b16 %v5183
        %v5379 = vunpack.c.h.b16 %v5183
        %v5380 = vunpack.c.l.b16 %v5184
        %v5381 = vunpack.c.h.b16 %v5184
        %v5382 = vunpack.c.l.b16 %v5185
        %v5383 = vunpack.c.h.b16 %v5185
        %v5384 = vunpack.c.l.b16 %v5186
        %v5385 = vunpack.c.h.b16 %v5186
        %v5386 = vunpack.c.l.b16 %v5187
        %v5387 = vunpack.c.h.b16 %v5187
        %v5388 = vunpack.c.l.b16 %v5188
        %v5389 = vunpack.c.h.b16 %v5188
        %v5390 = vunpack.c.l.b16 %v5189
        %v5391 = vunpack.c.h.b16 %v5189
        %v5392 = vunpack.c.l.b16 %v5190
        %v5393 = vunpack.c.h.b16 %v5190
        %v5394 = vunpack.c.l.b16 %v5191
        %v5395 = vunpack.c.h.b16 %v5191
        %v5396 = vunpack.c.l.b16 %v5192
        %v5397 = vunpack.c.h.b16 %v5192
        %v5398 = vunpack.c.l.b16 %v5193
        %v5399 = vunpack.c.h.b16 %v5193
        %v5400 = vunpack.c.l.b16 %v5194
        %v5401 = vunpack.c.h.b16 %v5194
        %v5402 = vunpack.c.l.b16 %v5195
        %v5403 = vunpack.c.h.b16 %v5195
        %v5404 = vunpack.c.l.b16 %v5196
        %v5405 = vunpack.c.h.b16 %v5196
        %v5406 = vunpack.c.l.b16 %v5197
        %v5407 = vunpack.c.h.b16 %v5197
        %v5408 = vunpack.c.l.b16 %v5198
        %v5409 = vunpack.c.h.b16 %v5198
        %v5410 = vunpack.c.l.b16 %v5199
        %v5411 = vunpack.c.h.b16 %v5199
        %v5412 = vunpack.c.l.b16 %v5200
        %v5413 = vunpack.c.h.b16 %v5200
        %v5414 = vunpack.c.l.b16 %v5201
        %v5415 = vunpack.c.h.b16 %v5201
        %v5416 = vpack.c.b16 %v5292, %v5288
        %v5417 = vpack.c.b16 %v5293, %v5289
        %v5418 = vpack.c.b16 %v5294, %v5290
        %v5419 = vpack.c.b16 %v5295, %v5291
        %v5420 = vpack.c.b16 %v5300, %v5296
        %v5421 = vpack.c.b16 %v5301, %v5297
        %v5422 = vpack.c.b16 %v5302, %v5298
        %v5423 = vpack.c.b16 %v5303, %v5299
        %v5424 = vpack.c.b16 %v5308, %v5304
        %v5425 = vpack.c.b16 %v5309, %v5305
        %v5426 = vpack.c.b16 %v5310, %v5306
        %v5427 = vpack.c.b16 %v5311, %v5307
        %v5428 = vpack.c.b16 %v5316, %v5312
        %v5429 = vpack.c.b16 %v5317, %v5313
        %v5430 = vpack.c.b16 %v5318, %v5314
        %v5431 = vpack.c.b16 %v5319, %v5315
        %v5432 = vpack.c.b16 %v5324, %v5320
        %v5433 = vpack.c.b16 %v5325, %v5321
        %v5434 = vpack.c.b16 %v5326, %v5322
        %v5435 = vpack.c.b16 %v5327, %v5323
        %v5436 = vpack.c.b16 %v5332, %v5328
        %v5437 = vpack.c.b16 %v5333, %v5329
        %v5438 = vpack.c.b16 %v5334, %v5330
        %v5439 = vpack.c.b16 %v5335, %v5331
        %v5440 = vpack.c.b16 %v5340, %v5336
        %v5441 = vpack.c.b16 %v5341, %v5337
        %v5442 = vpack.c.b16 %v5342, %v5338
        %v5443 = vpack.c.b16 %v5343, %v5339
        %v5444 = vpack.c.b16 %v5348, %v5344
        %v5445 = vpack.c.b16 %v5349, %v5345
        %v5446 = vpack.c.b16 %v5350, %v5346
        %v5447 = vpack.c.b16 %v5351, %v5347
        %v5448 = vpack.c.b16 %v5356, %v5352
        %v5449 = vpack.c.b16 %v5357, %v5353
        %v5450 = vpack.c.b16 %v5358, %v5354
        %v5451 = vpack.c.b16 %v5359, %v5355
        %v5452 = vpack.c.b16 %v5364, %v5360
        %v5453 = vpack.c.b16 %v5365, %v5361
        %v5454 = vpack.c.b16 %v5366, %v5362
        %v5455 = vpack.c.b16 %v5367, %v5363
        %v5456 = vpack.c.b16 %v5372, %v5368
        %v5457 = vpack.c.b16 %v5373, %v5369
        %v5458 = vpack.c.b16 %v5374, %v5370
        %v5459 = vpack.c.b16 %v5375, %v5371
        %v5460 = vpack.c.b16 %v5380, %v5376
        %v5461 = vpack.c.b16 %v5381, %v5377
        %v5462 = vpack.c.b16 %v5382, %v5378
        %v5463 = vpack.c.b16 %v5383, %v5379
        %v5464 = vpack.c.b16 %v5388, %v5384
        %v5465 = vpack.c.b16 %v5389, %v5385
        %v5466 = vpack.c.b16 %v5390, %v5386
        %v5467 = vpack.c.b16 %v5391, %v5387
        %v5468 = vpack.c.b16 %v5396, %v5392
        %v5469 = vpack.c.b16 %v5397, %v5393
        %v5470 = vpack.c.b16 %v5398, %v5394
        %v5471 = vpack.c.b16 %v5399, %v5395
        %v5472 = vpack.c.b16 %v5404, %v5400
        %v5473 = vpack.c.b16 %v5405, %v5401
        %v5474 = vpack.c.b16 %v5406, %v5402
        %v5475 = vpack.c.b16 %v5407, %v5403
        %v5476 = vpack.c.b16 %v5412, %v5408
        %v5477 = vpack.c.b16 %v5413, %v5409
        %v5478 = vpack.c.b16 %v5414, %v5410
        %v5479 = vpack.c.b16 %v5415, %v5411
        %5544 = vmatprep.subr.bf16.mxu0 %v5417
        %5545 = vmatpush1.bf16.msra.mxu0 %v5416
        %5546 = vmatprep.subr.bf16.mxu0 %v5421
        %5547 = vmatpush1.bf16.msra.mxu0 %v5420
        %5548 = vmatprep.subr.bf16.mxu0 %v5425
        %5549 = vmatpush1.bf16.msra.mxu0 %v5424
        %5550 = vmatprep.subr.bf16.mxu0 %v5429
        %5551 = vmatpush1.bf16.msra.mxu0 %v5428
        %5552 = vmatprep.subr.bf16.mxu0 %v5433
        %5553 = vmatpush1.bf16.msra.mxu0 %v5432
        %5554 = vmatprep.subr.bf16.mxu0 %v5437
        %5555 = vmatpush1.bf16.msra.mxu0 %v5436
        %5556 = vmatprep.subr.bf16.mxu0 %v5441
        %5557 = vmatpush1.bf16.msra.mxu0 %v5440
        %5558 = vmatprep.subr.bf16.mxu0 %v5445
        %5559 = vmatpush1.bf16.msra.mxu0 %v5444
        %5560 = vmatprep.subr.bf16.mxu0 %v5449
        %5561 = vmatpush1.bf16.msra.mxu0 %v5448
        %5562 = vmatprep.subr.bf16.mxu0 %v5453
        %5563 = vmatpush1.bf16.msra.mxu0 %v5452
        %5564 = vmatprep.subr.bf16.mxu0 %v5457
        %5565 = vmatpush1.bf16.msra.mxu0 %v5456
        %5566 = vmatprep.subr.bf16.mxu0 %v5461
        %5567 = vmatpush1.bf16.msra.mxu0 %v5460
        %5568 = vmatprep.subr.bf16.mxu0 %v5465
        %5569 = vmatpush1.bf16.msra.mxu0 %v5464
        %5570 = vmatprep.subr.bf16.mxu0 %v5469
        %5571 = vmatpush1.bf16.msra.mxu0 %v5468
        %5572 = vmatprep.subr.bf16.mxu0 %v5473
        %5573 = vmatpush1.bf16.msra.mxu0 %v5472
        %5574 = vmatprep.subr.bf16.mxu0 %v5477
        %5575 = vmatpush1.bf16.msra.mxu0 %v5476
        %5576 = vmatprep.mubr.bf16.mxu0 %v5137
        %5577 = vmatmul.mubr.bf16.gmra.mrb[0].mxu0 %v5136
        %v5578 = vpop.f32.mrb[0].mxu0
        %v5579 = vadd.f32 %v5207, %v5578
        %v5580 = vpop.f32.mrb[0].mxu0
        %v5581 = vadd.f32 %v5211, %v5580
        %v5582 = vpop.f32.mrb[0].mxu0
        %v5583 = vadd.f32 %v5207, %v5582
        %v5584 = vpop.f32.mrb[0].mxu0
        %v5585 = vadd.f32 %v5211, %v5584
        %5586 = vdwg.mxu0
        %5587 = vmatprep.subr.bf16.mxu0 %v5419
        %5588 = vmatpush1.bf16.msra.mxu0 %v5418
        %5589 = vmatprep.subr.bf16.mxu0 %v5423
        %5590 = vmatpush1.bf16.msra.mxu0 %v5422
        %5591 = vmatprep.subr.bf16.mxu0 %v5427
        %5592 = vmatpush1.bf16.msra.mxu0 %v5426
        %5593 = vmatprep.subr.bf16.mxu0 %v5431
        %5594 = vmatpush1.bf16.msra.mxu0 %v5430
        %5595 = vmatprep.subr.bf16.mxu0 %v5435
        %5596 = vmatpush1.bf16.msra.mxu0 %v5434
        %5597 = vmatprep.subr.bf16.mxu0 %v5439
        %5598 = vmatpush1.bf16.msra.mxu0 %v5438
        %5599 = vmatprep.subr.bf16.mxu0 %v5443
        %5600 = vmatpush1.bf16.msra.mxu0 %v5442
        %5601 = vmatprep.subr.bf16.mxu0 %v5447
        %5602 = vmatpush1.bf16.msra.mxu0 %v5446
        %5603 = vmatprep.subr.bf16.mxu0 %v5451
        %5604 = vmatpush1.bf16.msra.mxu0 %v5450
        %5605 = vmatprep.subr.bf16.mxu0 %v5455
        %5606 = vmatpush1.bf16.msra.mxu0 %v5454
        %5607 = vmatprep.subr.bf16.mxu0 %v5459
        %5608 = vmatpush1.bf16.msra.mxu0 %v5458
        %5609 = vmatprep.subr.bf16.mxu0 %v5463
        %5610 = vmatpush1.bf16.msra.mxu0 %v5462
        %5611 = vmatprep.subr.bf16.mxu0 %v5467
        %5612 = vmatpush1.bf16.msra.mxu0 %v5466
        %5613 = vmatprep.subr.bf16.mxu0 %v5471
        %5614 = vmatpush1.bf16.msra.mxu0 %v5470
        %5615 = vmatprep.subr.bf16.mxu0 %v5475
        %5616 = vmatpush1.bf16.msra.mxu0 %v5474
        %5617 = vmatprep.subr.bf16.mxu0 %v5479
        %5618 = vmatpush1.bf16.msra.mxu0 %v5478
        %5619 = vmatprep.mubr.bf16.mxu0 %v5137
        %5620 = vmatmul.mubr.bf16.gmra.mrb[0].mxu0 %v5136
        %v5621 = vpop.f32.mrb[0].mxu0
        %v5622 = vadd.f32 %v5215, %v5621
        %v5623 = vpop.f32.mrb[0].mxu0
        %v5624 = vadd.f32 %v5219, %v5623
        %v5625 = vpop.f32.mrb[0].mxu0
        %v5626 = vadd.f32 %v5215, %v5625
        %v5627 = vpop.f32.mrb[0].mxu0
        %v5628 = vadd.f32 %v5219, %v5627
        %5629 = vdwg.mxu0
        %v5630 = vld [vmem:[%s1033] sm:$0xf]
        %v5631 = vld [vmem:[%s1033 + $0x4] sm:$0xf]
        %v5632 = vld [vmem:[%s1033 + $0x8] sm:$0xf]
        %v5633 = vld [vmem:[%s1033 + $0xc] sm:$0xf]
        %v5634 = vld [vmem:[%s1033 + $0x10] sm:$0xf]
        %v5635 = vld [vmem:[%s1033 + $0x14] sm:$0xf]
        %v5636 = vld [vmem:[%s1033 + $0x18] sm:$0xf]
        %v5637 = vld [vmem:[%s1033 + $0x1c] sm:$0xf]
        %v5638 = vld [vmem:[%s1033 + $0x20] sm:$0xf]
        %v5639 = vld [vmem:[%s1033 + $0x24] sm:$0xf]
        %v5640 = vld [vmem:[%s1033 + $0x28] sm:$0xf]
        %v5641 = vld [vmem:[%s1033 + $0x2c] sm:$0xf]
        %v5642 = vld [vmem:[%s1033 + $0x30] sm:$0xf]
        %v5643 = vld [vmem:[%s1033 + $0x34] sm:$0xf]
        %v5644 = vld [vmem:[%s1033 + $0x38] sm:$0xf]
        %v5645 = vld [vmem:[%s1033 + $0x3c] sm:$0xf]
        %v5646 = vld [vmem:[%s1033 + $0x40] sm:$0xf]
        %v5647 = vld [vmem:[%s1033 + $0x44] sm:$0xf]
        %v5648 = vld [vmem:[%s1033 + $0x48] sm:$0xf]
        %v5649 = vld [vmem:[%s1033 + $0x4c] sm:$0xf]
        %v5650 = vld [vmem:[%s1033 + $0x50] sm:$0xf]
        %v5651 = vld [vmem:[%s1033 + $0x54] sm:$0xf]
        %v5652 = vld [vmem:[%s1033 + $0x58] sm:$0xf]
        %v5653 = vld [vmem:[%s1033 + $0x5c] sm:$0xf]
        %v5654 = vld [vmem:[%s1033 + $0x60] sm:$0xf]
        %v5655 = vld [vmem:[%s1033 + $0x64] sm:$0xf]
        %v5656 = vld [vmem:[%s1033 + $0x68] sm:$0xf]
        %v5657 = vld [vmem:[%s1033 + $0x6c] sm:$0xf]
        %v5658 = vld [vmem:[%s1033 + $0x70] sm:$0xf]
        %v5659 = vld [vmem:[%s1033 + $0x74] sm:$0xf]
        %v5660 = vld [vmem:[%s1033 + $0x78] sm:$0xf]
        %v5661 = vld [vmem:[%s1033 + $0x7c] sm:$0xf]
        %v5662 = vld [vmem:[%s1033 + $0x80] sm:$0xf]
        %v5663 = vld [vmem:[%s1033 + $0x84] sm:$0xf]
        %v5664 = vld [vmem:[%s1033 + $0x88] sm:$0xf]
        %v5665 = vld [vmem:[%s1033 + $0x8c] sm:$0xf]
        %v5666 = vld [vmem:[%s1033 + $0x90] sm:$0xf]
        %v5667 = vld [vmem:[%s1033 + $0x94] sm:$0xf]
        %v5668 = vld [vmem:[%s1033 + $0x98] sm:$0xf]
        %v5669 = vld [vmem:[%s1033 + $0x9c] sm:$0xf]
        %v5670 = vld [vmem:[%s1033 + $0xa0] sm:$0xf]
        %v5671 = vld [vmem:[%s1033 + $0xa4] sm:$0xf]
        %v5672 = vld [vmem:[%s1033 + $0xa8] sm:$0xf]
        %v5673 = vld [vmem:[%s1033 + $0xac] sm:$0xf]
        %v5674 = vld [vmem:[%s1033 + $0xb0] sm:$0xf]
        %v5675 = vld [vmem:[%s1033 + $0xb4] sm:$0xf]
        %v5676 = vld [vmem:[%s1033 + $0xb8] sm:$0xf]
        %v5677 = vld [vmem:[%s1033 + $0xbc] sm:$0xf]
        %v5678 = vld [vmem:[%s1033 + $0xc0] sm:$0xf]
        %v5679 = vld [vmem:[%s1033 + $0xc4] sm:$0xf]
        %v5680 = vld [vmem:[%s1033 + $0xc8] sm:$0xf]
        %v5681 = vld [vmem:[%s1033 + $0xcc] sm:$0xf]
        %v5682 = vld [vmem:[%s1033 + $0xd0] sm:$0xf]
        %v5683 = vld [vmem:[%s1033 + $0xd4] sm:$0xf]
        %v5684 = vld [vmem:[%s1033 + $0xd8] sm:$0xf]
        %v5685 = vld [vmem:[%s1033 + $0xdc] sm:$0xf]
        %v5686 = vld [vmem:[%s1033 + $0xe0] sm:$0xf]
        %v5687 = vld [vmem:[%s1033 + $0xe4] sm:$0xf]
        %v5688 = vld [vmem:[%s1033 + $0xe8] sm:$0xf]
        %v5689 = vld [vmem:[%s1033 + $0xec] sm:$0xf]
        %v5690 = vld [vmem:[%s1033 + $0xf0] sm:$0xf]
        %v5691 = vld [vmem:[%s1033 + $0xf4] sm:$0xf]
        %v5692 = vld [vmem:[%s1033 + $0xf8] sm:$0xf]
        %v5693 = vld [vmem:[%s1033 + $0xfc] sm:$0xf]
        %v5694 = vld [vmem:[%s1279] sm:$0x1]
        %v5696 = vlaneseq
        %v5697 = vshrl.u32 %v5696, 7
        %v5698 = vsub.s32 0, %v5697
        %v5699 = vrot.slane %v5694, %v5698
        %v5765 = vunpack.c.l.b16 %v5630
        %v5766 = vunpack.c.l.b16 %v5631
        %v5767 = vunpack.c.l.b16 %v5632
        %v5768 = vunpack.c.l.b16 %v5633
        %v5769 = vunpack.c.l.b16 %v5634
        %v5770 = vunpack.c.l.b16 %v5635
        %v5771 = vunpack.c.l.b16 %v5636
        %v5772 = vunpack.c.l.b16 %v5637
        %v5773 = vunpack.c.l.b16 %v5638
        %v5774 = vunpack.c.l.b16 %v5639
        %v5775 = vunpack.c.l.b16 %v5640
        %v5776 = vunpack.c.l.b16 %v5641
        %v5777 = vunpack.c.l.b16 %v5642
        %v5778 = vunpack.c.l.b16 %v5643
        %v5779 = vunpack.c.l.b16 %v5644
        %v5780 = vunpack.c.l.b16 %v5645
        %v5781 = vunpack.c.l.b16 %v5646
        %v5782 = vunpack.c.l.b16 %v5647
        %v5783 = vunpack.c.l.b16 %v5648
        %v5784 = vunpack.c.l.b16 %v5649
        %v5785 = vunpack.c.l.b16 %v5650
        %v5786 = vunpack.c.l.b16 %v5651
        %v5787 = vunpack.c.l.b16 %v5652
        %v5788 = vunpack.c.l.b16 %v5653
        %v5789 = vunpack.c.l.b16 %v5654
        %v5790 = vunpack.c.l.b16 %v5655
        %v5791 = vunpack.c.l.b16 %v5656
        %v5792 = vunpack.c.l.b16 %v5657
        %v5793 = vunpack.c.l.b16 %v5658
        %v5794 = vunpack.c.l.b16 %v5659
        %v5795 = vunpack.c.l.b16 %v5660
        %v5796 = vunpack.c.l.b16 %v5661
        %v5797 = vunpack.c.l.b16 %v5662
        %v5798 = vunpack.c.l.b16 %v5663
        %v5799 = vunpack.c.l.b16 %v5664
        %v5800 = vunpack.c.l.b16 %v5665
        %v5801 = vunpack.c.l.b16 %v5666
        %v5802 = vunpack.c.l.b16 %v5667
        %v5803 = vunpack.c.l.b16 %v5668
        %v5804 = vunpack.c.l.b16 %v5669
        %v5805 = vunpack.c.l.b16 %v5670
        %v5806 = vunpack.c.l.b16 %v5671
        %v5807 = vunpack.c.l.b16 %v5672
        %v5808 = vunpack.c.l.b16 %v5673
        %v5809 = vunpack.c.l.b16 %v5674
        %v5810 = vunpack.c.l.b16 %v5675
        %v5811 = vunpack.c.l.b16 %v5676
        %v5812 = vunpack.c.l.b16 %v5677
        %v5813 = vunpack.c.l.b16 %v5678
        %v5814 = vunpack.c.l.b16 %v5679
        %v5815 = vunpack.c.l.b16 %v5680
        %v5816 = vunpack.c.l.b16 %v5681
        %v5817 = vunpack.c.l.b16 %v5682
        %v5818 = vunpack.c.l.b16 %v5683
        %v5819 = vunpack.c.l.b16 %v5684
        %v5820 = vunpack.c.l.b16 %v5685
        %v5821 = vunpack.c.l.b16 %v5686
        %v5822 = vunpack.c.l.b16 %v5687
        %v5823 = vunpack.c.l.b16 %v5688
        %v5824 = vunpack.c.l.b16 %v5689
        %v5825 = vunpack.c.l.b16 %v5690
        %v5826 = vunpack.c.l.b16 %v5691
        %v5827 = vunpack.c.l.b16 %v5692
        %v5828 = vunpack.c.l.b16 %v5693
        %v5829 = vpack.c.b16 %v5766, %v5765
        %v5830 = vpack.c.b16 %v5768, %v5767
        %v5831 = vpack.c.b16 %v5770, %v5769
        %v5832 = vpack.c.b16 %v5772, %v5771
        %v5833 = vpack.c.b16 %v5774, %v5773
        %v5834 = vpack.c.b16 %v5776, %v5775
        %v5835 = vpack.c.b16 %v5778, %v5777
        %v5836 = vpack.c.b16 %v5780, %v5779
        %v5837 = vpack.c.b16 %v5782, %v5781
        %v5838 = vpack.c.b16 %v5784, %v5783
        %v5839 = vpack.c.b16 %v5786, %v5785
        %v5840 = vpack.c.b16 %v5788, %v5787
        %v5841 = vpack.c.b16 %v5790, %v5789
        %v5842 = vpack.c.b16 %v5792, %v5791
        %v5843 = vpack.c.b16 %v5794, %v5793
        %v5844 = vpack.c.b16 %v5796, %v5795
        %v5845 = vpack.c.b16 %v5798, %v5797
        %v5846 = vpack.c.b16 %v5800, %v5799
        %v5847 = vpack.c.b16 %v5802, %v5801
        %v5848 = vpack.c.b16 %v5804, %v5803
        %v5849 = vpack.c.b16 %v5806, %v5805
        %v5850 = vpack.c.b16 %v5808, %v5807
        %v5851 = vpack.c.b16 %v5810, %v5809
        %v5852 = vpack.c.b16 %v5812, %v5811
        %v5853 = vpack.c.b16 %v5814, %v5813
        %v5854 = vpack.c.b16 %v5816, %v5815
        %v5855 = vpack.c.b16 %v5818, %v5817
        %v5856 = vpack.c.b16 %v5820, %v5819
        %v5857 = vpack.c.b16 %v5822, %v5821
        %v5858 = vpack.c.b16 %v5824, %v5823
        %v5859 = vpack.c.b16 %v5826, %v5825
        %v5860 = vpack.c.b16 %v5828, %v5827
        %5893 = vmatprep.subr.bf16.mxu0 0
        %5894 = vmatpush1.bf16.msra.mxu0 %v5829
        %5895 = vmatprep.subr.bf16.mxu0 0
        %5896 = vmatpush1.bf16.msra.mxu0 %v5830
        %5897 = vmatprep.subr.bf16.mxu0 0
        %5898 = vmatpush1.bf16.msra.mxu0 %v5831
        %5899 = vmatprep.subr.bf16.mxu0 0
        %5900 = vmatpush1.bf16.msra.mxu0 %v5832
        %5901 = vmatprep.subr.bf16.mxu0 0
        %5902 = vmatpush1.bf16.msra.mxu0 %v5833
        %5903 = vmatprep.subr.bf16.mxu0 0
        %5904 = vmatpush1.bf16.msra.mxu0 %v5834
        %5905 = vmatprep.subr.bf16.mxu0 0
        %5906 = vmatpush1.bf16.msra.mxu0 %v5835
        %5907 = vmatprep.subr.bf16.mxu0 0
        %5908 = vmatpush1.bf16.msra.mxu0 %v5836
        %5909 = vmatprep.subr.bf16.mxu0 0
        %5910 = vmatpush1.bf16.msra.mxu0 %v5837
        %5911 = vmatprep.subr.bf16.mxu0 0
        %5912 = vmatpush1.bf16.msra.mxu0 %v5838
        %5913 = vmatprep.subr.bf16.mxu0 0
        %5914 = vmatpush1.bf16.msra.mxu0 %v5839
        %5915 = vmatprep.subr.bf16.mxu0 0
        %5916 = vmatpush1.bf16.msra.mxu0 %v5840
        %5917 = vmatprep.subr.bf16.mxu0 0
        %5918 = vmatpush1.bf16.msra.mxu0 %v5841
        %5919 = vmatprep.subr.bf16.mxu0 0
        %5920 = vmatpush1.bf16.msra.mxu0 %v5842
        %5921 = vmatprep.subr.bf16.mxu0 0
        %5922 = vmatpush1.bf16.msra.mxu0 %v5843
        %5923 = vmatprep.subr.bf16.mxu0 0
        %5924 = vmatpush1.bf16.msra.mxu0 %v5844
        %5925 = vmatprep.mubr.bf16.mxu0 %v4394
        %5926 = vmatmul.mubr.bf16.gmra.mrb[0].mxu0 %v4393
        %v5927 = vpop.f32.mrb[0].mxu0
        %v5928 = vadd.f32 %v5699, %v5927
        %v5929 = vpop.f32.mrb[0].mxu0
        %v5930 = vpop.f32.mrb[0].mxu0
        %v5931 = vadd.f32 %v5699, %v5930
        %v5932 = vpop.f32.mrb[0].mxu0
        %5933 = vdwg.mxu0
        %5934 = vmatprep.subr.bf16.mxu0 0
        %5935 = vmatpush1.bf16.msra.mxu0 %v5845
        %5936 = vmatprep.subr.bf16.mxu0 0
        %5937 = vmatpush1.bf16.msra.mxu0 %v5846
        %5938 = vmatprep.subr.bf16.mxu0 0
        %5939 = vmatpush1.bf16.msra.mxu0 %v5847
        %5940 = vmatprep.subr.bf16.mxu0 0
        %5941 = vmatpush1.bf16.msra.mxu0 %v5848
        %5942 = vmatprep.subr.bf16.mxu0 0
        %5943 = vmatpush1.bf16.msra.mxu0 %v5849
        %5944 = vmatprep.subr.bf16.mxu0 0
        %5945 = vmatpush1.bf16.msra.mxu0 %v5850
        %5946 = vmatprep.subr.bf16.mxu0 0
        %5947 = vmatpush1.bf16.msra.mxu0 %v5851
        %5948 = vmatprep.subr.bf16.mxu0 0
        %5949 = vmatpush1.bf16.msra.mxu0 %v5852
        %5950 = vmatprep.subr.bf16.mxu0 0
        %5951 = vmatpush1.bf16.msra.mxu0 %v5853
        %5952 = vmatprep.subr.bf16.mxu0 0
        %5953 = vmatpush1.bf16.msra.mxu0 %v5854
        %5954 = vmatprep.subr.bf16.mxu0 0
        %5955 = vmatpush1.bf16.msra.mxu0 %v5855
        %5956 = vmatprep.subr.bf16.mxu0 0
        %5957 = vmatpush1.bf16.msra.mxu0 %v5856
        %5958 = vmatprep.subr.bf16.mxu0 0
        %5959 = vmatpush1.bf16.msra.mxu0 %v5857
        %5960 = vmatprep.subr.bf16.mxu0 0
        %5961 = vmatpush1.bf16.msra.mxu0 %v5858
        %5962 = vmatprep.subr.bf16.mxu0 0
        %5963 = vmatpush1.bf16.msra.mxu0 %v5859
        %5964 = vmatprep.subr.bf16.mxu0 0
        %5965 = vmatpush1.bf16.msra.mxu0 %v5860
        %5966 = vmatprep.mubr.bf16.mxu0 %v4396
        %5967 = vmatmul.mubr.bf16.gmra.mrb[0].mxu0 %v4395
        %v5968 = vpop.f32.mrb[0].mxu0
        %v5969 = vadd.f32 %v5928, %v5968
        %v5970 = vpop.f32.mrb[0].mxu0
        %v5971 = vpop.f32.mrb[0].mxu0
        %v5972 = vadd.f32 %v5931, %v5971
        %v5973 = vpop.f32.mrb[0].mxu0
        %5974 = vdwg.mxu0
        %v5975 = vmax.f32 %v5969, 0.0
        %v5976 = vmax.f32 %v5972, 0.0
        %v5977 = vpack.c.bf16 %v5976, %v5975
        %v5978 = vld [vmem:[%s1042] sm:$0xff]
        %v5979 = vld [vmem:[%s1042 + $0x8] sm:$0xff]
        %v5980 = vld [vmem:[%s1042 + $0x10] sm:$0xff]
        %v5981 = vld [vmem:[%s1042 + $0x18] sm:$0xff]
        %v5982 = vld [vmem:[%s1042 + $0x20] sm:$0xff]
        %v5983 = vld [vmem:[%s1042 + $0x28] sm:$0xff]
        %v5984 = vld [vmem:[%s1042 + $0x30] sm:$0xff]
        %v5985 = vld [vmem:[%s1042 + $0x38] sm:$0xff]
        %v5986 = vld [vmem:[%s1042 + $0x40] sm:$0xff]
        %v5987 = vld [vmem:[%s1042 + $0x48] sm:$0xff]
        %v5988 = vld [vmem:[%s1042 + $0x50] sm:$0xff]
        %v5989 = vld [vmem:[%s1042 + $0x58] sm:$0xff]
        %v5990 = vld [vmem:[%s1042 + $0x60] sm:$0xff]
        %v5991 = vld [vmem:[%s1042 + $0x68] sm:$0xff]
        %v5992 = vld [vmem:[%s1042 + $0x70] sm:$0xff]
        %v5993 = vld [vmem:[%s1042 + $0x78] sm:$0xff]
        %v5994 = vld [vmem:[%s1042 + $0x80] sm:$0xff]
        %v5995 = vld [vmem:[%s1042 + $0x88] sm:$0xff]
        %v5996 = vld [vmem:[%s1042 + $0x90] sm:$0xff]
        %v5997 = vld [vmem:[%s1042 + $0x98] sm:$0xff]
        %v5998 = vld [vmem:[%s1042 + $0xa0] sm:$0xff]
        %v5999 = vld [vmem:[%s1042 + $0xa8] sm:$0xff]
        %v6000 = vld [vmem:[%s1042 + $0xb0] sm:$0xff]
        %v6001 = vld [vmem:[%s1042 + $0xb8] sm:$0xff]
        %v6002 = vld [vmem:[%s1042 + $0xc0] sm:$0xff]
        %v6003 = vld [vmem:[%s1042 + $0xc8] sm:$0xff]
        %v6004 = vld [vmem:[%s1042 + $0xd0] sm:$0xff]
        %v6005 = vld [vmem:[%s1042 + $0xd8] sm:$0xff]
        %v6006 = vld [vmem:[%s1042 + $0xe0] sm:$0xff]
        %v6007 = vld [vmem:[%s1042 + $0xe8] sm:$0xff]
        %v6008 = vld [vmem:[%s1042 + $0xf0] sm:$0xff]
        %v6009 = vld [vmem:[%s1042 + $0xf8] sm:$0xff]
        %v6010 = vld [vmem:[%s1283] sm:$0xf]
        %v6012 = vlaneseq
        %v6013 = vshrl.u32 %v6012, 7
        %v6014 = vsub.s32 0, %v6013
        %v6015 = vrot.slane %v6010, %v6014
        %v6016 = vlaneseq
        %v6017 = vshrl.u32 %v6016, 7
        %v6018 = vsub.s32 1, %v6017
        %v6019 = vrot.slane %v6010, %v6018
        %v6020 = vlaneseq
        %v6021 = vshrl.u32 %v6020, 7
        %v6022 = vsub.s32 2, %v6021
        %v6023 = vrot.slane %v6010, %v6022
        %v6024 = vlaneseq
        %v6025 = vshrl.u32 %v6024, 7
        %v6026 = vsub.s32 3, %v6025
        %v6027 = vrot.slane %v6010, %v6026
        %v6064 = vunpack.c.l.b16 %v5978
        %v6065 = vunpack.c.h.b16 %v5978
        %v6066 = vunpack.c.l.b16 %v5979
        %v6067 = vunpack.c.h.b16 %v5979
        %v6068 = vunpack.c.l.b16 %v5980
        %v6069 = vunpack.c.h.b16 %v5980
        %v6070 = vunpack.c.l.b16 %v5981
        %v6071 = vunpack.c.h.b16 %v5981
        %v6072 = vunpack.c.l.b16 %v5982
        %v6073 = vunpack.c.h.b16 %v5982
        %v6074 = vunpack.c.l.b16 %v5983
        %v6075 = vunpack.c.h.b16 %v5983
        %v6076 = vunpack.c.l.b16 %v5984
        %v6077 = vunpack.c.h.b16 %v5984
        %v6078 = vunpack.c.l.b16 %v5985
        %v6079 = vunpack.c.h.b16 %v5985
        %v6080 = vunpack.c.l.b16 %v5986
        %v6081 = vunpack.c.h.b16 %v5986
        %v6082 = vunpack.c.l.b16 %v5987
        %v6083 = vunpack.c.h.b16 %v5987
        %v6084 = vunpack.c.l.b16 %v5988
        %v6085 = vunpack.c.h.b16 %v5988
        %v6086 = vunpack.c.l.b16 %v5989
        %v6087 = vunpack.c.h.b16 %v5989
        %v6088 = vunpack.c.l.b16 %v5990
        %v6089 = vunpack.c.h.b16 %v5990
        %v6090 = vunpack.c.l.b16 %v5991
        %v6091 = vunpack.c.h.b16 %v5991
        %v6092 = vunpack.c.l.b16 %v5992
        %v6093 = vunpack.c.h.b16 %v5992
        %v6094 = vunpack.c.l.b16 %v5993
        %v6095 = vunpack.c.h.b16 %v5993
        %v6096 = vunpack.c.l.b16 %v5994
        %v6097 = vunpack.c.h.b16 %v5994
        %v6098 = vunpack.c.l.b16 %v5995
        %v6099 = vunpack.c.h.b16 %v5995
        %v6100 = vunpack.c.l.b16 %v5996
        %v6101 = vunpack.c.h.b16 %v5996
        %v6102 = vunpack.c.l.b16 %v5997
        %v6103 = vunpack.c.h.b16 %v5997
        %v6104 = vunpack.c.l.b16 %v5998
        %v6105 = vunpack.c.h.b16 %v5998
        %v6106 = vunpack.c.l.b16 %v5999
        %v6107 = vunpack.c.h.b16 %v5999
        %v6108 = vunpack.c.l.b16 %v6000
        %v6109 = vunpack.c.h.b16 %v6000
        %v6110 = vunpack.c.l.b16 %v6001
        %v6111 = vunpack.c.h.b16 %v6001
        %v6112 = vunpack.c.l.b16 %v6002
        %v6113 = vunpack.c.h.b16 %v6002
        %v6114 = vunpack.c.l.b16 %v6003
        %v6115 = vunpack.c.h.b16 %v6003
        %v6116 = vunpack.c.l.b16 %v6004
        %v6117 = vunpack.c.h.b16 %v6004
        %v6118 = vunpack.c.l.b16 %v6005
        %v6119 = vunpack.c.h.b16 %v6005
        %v6120 = vunpack.c.l.b16 %v6006
        %v6121 = vunpack.c.h.b16 %v6006
        %v6122 = vunpack.c.l.b16 %v6007
        %v6123 = vunpack.c.h.b16 %v6007
        %v6124 = vunpack.c.l.b16 %v6008
        %v6125 = vunpack.c.h.b16 %v6008
        %v6126 = vunpack.c.l.b16 %v6009
        %v6127 = vunpack.c.h.b16 %v6009
        %v6128 = vpack.c.b16 %v6068, %v6064
        %v6129 = vpack.c.b16 %v6069, %v6065
        %v6130 = vpack.c.b16 %v6070, %v6066
        %v6131 = vpack.c.b16 %v6071, %v6067
        %v6132 = vpack.c.b16 %v6076, %v6072
        %v6133 = vpack.c.b16 %v6077, %v6073
        %v6134 = vpack.c.b16 %v6078, %v6074
        %v6135 = vpack.c.b16 %v6079, %v6075
        %v6136 = vpack.c.b16 %v6084, %v6080
        %v6137 = vpack.c.b16 %v6085, %v6081
        %v6138 = vpack.c.b16 %v6086, %v6082
        %v6139 = vpack.c.b16 %v6087, %v6083
        %v6140 = vpack.c.b16 %v6092, %v6088
        %v6141 = vpack.c.b16 %v6093, %v6089
        %v6142 = vpack.c.b16 %v6094, %v6090
        %v6143 = vpack.c.b16 %v6095, %v6091
        %v6144 = vpack.c.b16 %v6100, %v6096
        %v6145 = vpack.c.b16 %v6101, %v6097
        %v6146 = vpack.c.b16 %v6102, %v6098
        %v6147 = vpack.c.b16 %v6103, %v6099
        %v6148 = vpack.c.b16 %v6108, %v6104
        %v6149 = vpack.c.b16 %v6109, %v6105
        %v6150 = vpack.c.b16 %v6110, %v6106
        %v6151 = vpack.c.b16 %v6111, %v6107
        %v6152 = vpack.c.b16 %v6116, %v6112
        %v6153 = vpack.c.b16 %v6117, %v6113
        %v6154 = vpack.c.b16 %v6118, %v6114
        %v6155 = vpack.c.b16 %v6119, %v6115
        %v6156 = vpack.c.b16 %v6124, %v6120
        %v6157 = vpack.c.b16 %v6125, %v6121
        %v6158 = vpack.c.b16 %v6126, %v6122
        %v6159 = vpack.c.b16 %v6127, %v6123
        %6192 = vmatprep.subr.bf16.mxu0 %v6129
        %6193 = vmatpush1.bf16.msra.mxu0 %v6128
        %6194 = vmatprep.subr.bf16.mxu0 %v6133
        %6195 = vmatpush1.bf16.msra.mxu0 %v6132
        %6196 = vmatprep.subr.bf16.mxu0 %v6137
        %6197 = vmatpush1.bf16.msra.mxu0 %v6136
        %6198 = vmatprep.subr.bf16.mxu0 %v6141
        %6199 = vmatpush1.bf16.msra.mxu0 %v6140
        %6200 = vmatprep.subr.bf16.mxu0 %v6145
        %6201 = vmatpush1.bf16.msra.mxu0 %v6144
        %6202 = vmatprep.subr.bf16.mxu0 %v6149
        %6203 = vmatpush1.bf16.msra.mxu0 %v6148
        %6204 = vmatprep.subr.bf16.mxu0 %v6153
        %6205 = vmatpush1.bf16.msra.mxu0 %v6152
        %6206 = vmatprep.subr.bf16.mxu0 %v6157
        %6207 = vmatpush1.bf16.msra.mxu0 %v6156
        %6208 = vmatprep.subr.bf16.mxu0 0
        %6209 = vmatpush1.bf16.msra.mxu0 0
        %6210 = vmatprep.subr.bf16.mxu0 0
        %6211 = vmatpush1.bf16.msra.mxu0 0
        %6212 = vmatprep.subr.bf16.mxu0 0
        %6213 = vmatpush1.bf16.msra.mxu0 0
        %6214 = vmatprep.subr.bf16.mxu0 0
        %6215 = vmatpush1.bf16.msra.mxu0 0
        %6216 = vmatprep.subr.bf16.mxu0 0
        %6217 = vmatpush1.bf16.msra.mxu0 0
        %6218 = vmatprep.subr.bf16.mxu0 0
        %6219 = vmatpush1.bf16.msra.mxu0 0
        %6220 = vmatprep.subr.bf16.mxu0 0
        %6221 = vmatpush1.bf16.msra.mxu0 0
        %6222 = vmatprep.subr.bf16.mxu0 0
        %6223 = vmatpush1.bf16.msra.mxu0 0
        %6224 = vmatprep.mubr.bf16.mxu0 0
        %6225 = vmatmul.mubr.bf16.gmra.mrb[0].mxu0 %v5977
        %v6226 = vpop.f32.mrb[0].mxu0
        %v6227 = vadd.f32 %v6015, %v6226
        %v6228 = vpop.f32.mrb[0].mxu0
        %v6229 = vadd.f32 %v6019, %v6228
        %v6230 = vpop.f32.mrb[0].mxu0
        %v6231 = vadd.f32 %v6015, %v6230
        %v6232 = vpop.f32.mrb[0].mxu0
        %v6233 = vadd.f32 %v6019, %v6232
        %6234 = vdwg.mxu0
        %6235 = vmatprep.subr.bf16.mxu0 %v6131
        %6236 = vmatpush1.bf16.msra.mxu0 %v6130
        %6237 = vmatprep.subr.bf16.mxu0 %v6135
        %6238 = vmatpush1.bf16.msra.mxu0 %v6134
        %6239 = vmatprep.subr.bf16.mxu0 %v6139
        %6240 = vmatpush1.bf16.msra.mxu0 %v6138
        %6241 = vmatprep.subr.bf16.mxu0 %v6143
        %6242 = vmatpush1.bf16.msra.mxu0 %v6142
        %6243 = vmatprep.subr.bf16.mxu0 %v6147
        %6244 = vmatpush1.bf16.msra.mxu0 %v6146
        %6245 = vmatprep.subr.bf16.mxu0 %v6151
        %6246 = vmatpush1.bf16.msra.mxu0 %v6150
        %6247 = vmatprep.subr.bf16.mxu0 %v6155
        %6248 = vmatpush1.bf16.msra.mxu0 %v6154
        %6249 = vmatprep.subr.bf16.mxu0 %v6159
        %6250 = vmatpush1.bf16.msra.mxu0 %v6158
        %6251 = vmatprep.subr.bf16.mxu0 0
        %6252 = vmatpush1.bf16.msra.mxu0 0
        %6253 = vmatprep.subr.bf16.mxu0 0
        %6254 = vmatpush1.bf16.msra.mxu0 0
        %6255 = vmatprep.subr.bf16.mxu0 0
        %6256 = vmatpush1.bf16.msra.mxu0 0
        %6257 = vmatprep.subr.bf16.mxu0 0
        %6258 = vmatpush1.bf16.msra.mxu0 0
        %6259 = vmatprep.subr.bf16.mxu0 0
        %6260 = vmatpush1.bf16.msra.mxu0 0
        %6261 = vmatprep.subr.bf16.mxu0 0
        %6262 = vmatpush1.bf16.msra.mxu0 0
        %6263 = vmatprep.subr.bf16.mxu0 0
        %6264 = vmatpush1.bf16.msra.mxu0 0
        %6265 = vmatprep.subr.bf16.mxu0 0
        %6266 = vmatpush1.bf16.msra.mxu0 0
        %6267 = vmatprep.mubr.bf16.mxu0 0
        %6268 = vmatmul.mubr.bf16.gmra.mrb[0].mxu0 %v5977
        %v6269 = vpop.f32.mrb[0].mxu0
        %v6270 = vadd.f32 %v6023, %v6269
        %v6271 = vpop.f32.mrb[0].mxu0
        %v6272 = vadd.f32 %v6027, %v6271
        %v6273 = vpop.f32.mrb[0].mxu0
        %v6274 = vadd.f32 %v6023, %v6273
        %v6275 = vpop.f32.mrb[0].mxu0
        %v6276 = vadd.f32 %v6027, %v6275
        %6277 = vdwg.mxu0
        %v6278 = vmax.f32 %v6227, 0.0
        %v6279 = vmax.f32 %v6229, 0.0
        %v6280 = vmax.f32 %v6270, 0.0
        %v6281 = vmax.f32 %v6272, 0.0
        %v6282 = vmax.f32 %v6231, 0.0
        %v6283 = vmax.f32 %v6233, 0.0
        %v6284 = vmax.f32 %v6274, 0.0
        %v6285 = vmax.f32 %v6276, 0.0
        %v6286 = vand.u32 2147483647, %v6227
        %v6287 = vand.u32 2147483647, %v6229
        %v6288 = vand.u32 2147483647, %v6270
        %v6289 = vand.u32 2147483647, %v6272
        %v6290 = vand.u32 2147483647, %v6231
        %v6291 = vand.u32 2147483647, %v6233
        %v6292 = vand.u32 2147483647, %v6274
        %v6293 = vand.u32 2147483647, %v6276
        %v6294 = vsub.f32 0.0, %v6286
        %v6295 = vsub.f32 0.0, %v6287
        %v6296 = vsub.f32 0.0, %v6288
        %v6297 = vsub.f32 0.0, %v6289
        %v6298 = vsub.f32 0.0, %v6290
        %v6299 = vsub.f32 0.0, %v6291
        %v6300 = vsub.f32 0.0, %v6292
        %v6301 = vsub.f32 0.0, %v6293
        %v6302 = vmul.f32 %v6294, 1.442695
        %v6303 = vpow.pop %v6302
        %v6304 = vmul.f32 %v6295, 1.442695
        %v6305 = vpow.pop %v6304
        %v6306 = vmul.f32 %v6296, 1.442695
        %v6307 = vpow.pop %v6306
        %v6308 = vmul.f32 %v6297, 1.442695
        %v6309 = vpow.pop %v6308
        %v6310 = vmul.f32 %v6298, 1.442695
        %v6311 = vpow.pop %v6310
        %v6312 = vmul.f32 %v6299, 1.442695
        %v6313 = vpow.pop %v6312
        %v6314 = vmul.f32 %v6300, 1.442695
        %v6315 = vpow.pop %v6314
        %v6316 = vmul.f32 %v6301, 1.442695
        %v6317 = vpow.pop %v6316
        %v6318 = vadd.f32 %v6303, 1.0
        %v6319 = vlog2.pop %v6318
        %v6320 = vmul.f32 %v6319, 0.6931472
        %v6321 = vmul.f32 -0.5, %v6303
        %v6322 = vadd.f32 %v6321, 1.0
        %v6323 = vmul.f32 %v6322, %v6303
        %v6324 = vand.u32 2147483647, %v6303
        %vm6325 = vcmp.lt.f32.partialorder %v6324, 0.0004427343
        %v6326 = vsel %vm6325, %v6323, %v6320
        %v6327 = vadd.f32 %v6305, 1.0
        %v6328 = vlog2.pop %v6327
        %v6329 = vmul.f32 %v6328, 0.6931472
        %v6330 = vmul.f32 -0.5, %v6305
        %v6331 = vadd.f32 %v6330, 1.0
        %v6332 = vmul.f32 %v6331, %v6305
        %v6333 = vand.u32 2147483647, %v6305
        %vm6334 = vcmp.lt.f32.partialorder %v6333, 0.0004427343
        %v6335 = vsel %vm6334, %v6332, %v6329
        %v6336 = vadd.f32 %v6307, 1.0
        %v6337 = vlog2.pop %v6336
        %v6338 = vmul.f32 %v6337, 0.6931472
        %v6339 = vmul.f32 -0.5, %v6307
        %v6340 = vadd.f32 %v6339, 1.0
        %v6341 = vmul.f32 %v6340, %v6307
        %v6342 = vand.u32 2147483647, %v6307
        %vm6343 = vcmp.lt.f32.partialorder %v6342, 0.0004427343
        %v6344 = vsel %vm6343, %v6341, %v6338
        %v6345 = vadd.f32 %v6309, 1.0
        %v6346 = vlog2.pop %v6345
        %v6347 = vmul.f32 %v6346, 0.6931472
        %v6348 = vmul.f32 -0.5, %v6309
        %v6349 = vadd.f32 %v6348, 1.0
        %v6350 = vmul.f32 %v6349, %v6309
        %v6351 = vand.u32 2147483647, %v6309
        %vm6352 = vcmp.lt.f32.partialorder %v6351, 0.0004427343
        %v6353 = vsel %vm6352, %v6350, %v6347
        %v6354 = vadd.f32 %v6311, 1.0
        %v6355 = vlog2.pop %v6354
        %v6356 = vmul.f32 %v6355, 0.6931472
        %v6357 = vmul.f32 -0.5, %v6311
        %v6358 = vadd.f32 %v6357, 1.0
        %v6359 = vmul.f32 %v6358, %v6311
        %v6360 = vand.u32 2147483647, %v6311
        %vm6361 = vcmp.lt.f32.partialorder %v6360, 0.0004427343
        %v6362 = vsel %vm6361, %v6359, %v6356
        %v6363 = vadd.f32 %v6313, 1.0
        %v6364 = vlog2.pop %v6363
        %v6365 = vmul.f32 %v6364, 0.6931472
        %v6366 = vmul.f32 -0.5, %v6313
        %v6367 = vadd.f32 %v6366, 1.0
        %v6368 = vmul.f32 %v6367, %v6313
        %v6369 = vand.u32 2147483647, %v6313
        %vm6370 = vcmp.lt.f32.partialorder %v6369, 0.0004427343
        %v6371 = vsel %vm6370, %v6368, %v6365
        %v6372 = vadd.f32 %v6315, 1.0
        %v6373 = vlog2.pop %v6372
        %v6374 = vmul.f32 %v6373, 0.6931472
        %v6375 = vmul.f32 -0.5, %v6315
        %v6376 = vadd.f32 %v6375, 1.0
        %v6377 = vmul.f32 %v6376, %v6315
        %v6378 = vand.u32 2147483647, %v6315
        %vm6379 = vcmp.lt.f32.partialorder %v6378, 0.0004427343
        %v6380 = vsel %vm6379, %v6377, %v6374
        %v6381 = vadd.f32 %v6317, 1.0
        %v6382 = vlog2.pop %v6381
        %v6383 = vmul.f32 %v6382, 0.6931472
        %v6384 = vmul.f32 -0.5, %v6317
        %v6385 = vadd.f32 %v6384, 1.0
        %v6386 = vmul.f32 %v6385, %v6317
        %v6387 = vand.u32 2147483647, %v6317
        %vm6388 = vcmp.lt.f32.partialorder %v6387, 0.0004427343
        %v6389 = vsel %vm6388, %v6386, %v6383
        %v6390 = vadd.f32 %v6278, %v6326
        %v6391 = vadd.f32 %v6279, %v6335
        %v6392 = vadd.f32 %v6280, %v6344
        %v6393 = vadd.f32 %v6281, %v6353
        %v6394 = vadd.f32 %v6282, %v6362
        %v6395 = vadd.f32 %v6283, %v6371
        %v6396 = vadd.f32 %v6284, %v6380
        %v6397 = vadd.f32 %v6285, %v6389
        %v6398 = vmax.f32 %v6390, 1e-10
        %v6399 = vmax.f32 %v6391, 1e-10
        %v6400 = vmax.f32 %v6392, 1e-10
        %v6401 = vmax.f32 %v6393, 1e-10
        %v6402 = vmax.f32 %v6394, 1e-10
        %v6403 = vmax.f32 %v6395, 1e-10
        %v6404 = vmax.f32 %v6396, 1e-10
        %v6405 = vmax.f32 %v6397, 1e-10
        %v6406 = vrcp.pop %v6398
        %v6407 = vmul.f32 %v5579, %v6406
        %v6408 = vrcp.pop %v6399
        %v6409 = vmul.f32 %v5581, %v6408
        %v6410 = vrcp.pop %v6400
        %v6411 = vmul.f32 %v5622, %v6410
        %v6412 = vrcp.pop %v6401
        %v6413 = vmul.f32 %v5624, %v6412
        %v6414 = vrcp.pop %v6402
        %v6415 = vmul.f32 %v5583, %v6414
        %v6416 = vrcp.pop %v6403
        %v6417 = vmul.f32 %v5585, %v6416
        %v6418 = vrcp.pop %v6404
        %v6419 = vmul.f32 %v5626, %v6418
        %v6420 = vrcp.pop %v6405
        %v6421 = vmul.f32 %v5628, %v6420
        %6422 = vst [vmem:[%s1204] sm:$0xff] %v6407
        %6423 = vst [vmem:[%s1204 + $0x8] sm:$0xff] %v6409
        %6424 = vst [vmem:[%s1204 + $0x10] sm:$0xff] %v6411
        %6425 = vst [vmem:[%s1204 + $0x18] sm:$0xff] %v6413
        %6426 = vst [vmem:[%s1204 + $0x20] sm:$0xff] %v6415
        %6427 = vst [vmem:[%s1204 + $0x28] sm:$0xff] %v6417
        %6428 = vst [vmem:[%s1204 + $0x30] sm:$0xff] %v6419
        %6429 = vst [vmem:[%s1204 + $0x38] sm:$0xff] %v6421
        %6430 = vst [vmem:[%s1211] sm:$0xff] %v6390
        %6431 = vst [vmem:[%s1211 + $0x8] sm:$0xff] %v6391
        %6432 = vst [vmem:[%s1211 + $0x10] sm:$0xff] %v6392
        %6433 = vst [vmem:[%s1211 + $0x18] sm:$0xff] %v6393
        %6434 = vst [vmem:[%s1211 + $0x20] sm:$0xff] %v6394
        %6435 = vst [vmem:[%s1211 + $0x28] sm:$0xff] %v6395
        %6436 = vst [vmem:[%s1211 + $0x30] sm:$0xff] %v6396
        %6437 = vst [vmem:[%s1211 + $0x38] sm:$0xff] %v6397
        %s6438 = sand.u32 %s629, 1
        %s6439 = scalar_lea.sflag [#allocation4], %s6438
        %s6440 = sand.u32 %s629, 1
        %s6441 = smul.addr %s6440, 64
        %s6442 = scalar_lea.vmem [#allocation16], %s6441
        %s6443 = sand.u32 %s657, 1
        %s6444 = scalar_lea.sflag [#allocation18], %s6443
        %s6445 = sand.u32 %s657, 1
        %s6446 = smul.addr %s6445, 64
        %s6447 = scalar_lea.vmem [#allocation17], %s6446
        // Predicated region
        $region137: #{tpu_custom_call.1} parent=103 // pred_check
          %p6448 = pneg %p639
        $region138: #{tpu_custom_call.1} parent=103 // pred_check_branch
          %6450 = sbr.rel (%p6448) target = $region140
        $region139: #{tpu_custom_call.1} parent=103 // pred_region
          %s6451 = smul.u32 2, %s60
          %s6453 = ssub.s32 1024, 1024
          %6454 = vsyncadd %s6439, %s6453
          %s6455 = smul.addr %s6451, 4
          %s6456 = smul.addr %s59, 8
          %s6457 = sadd.s32 %s6455, %s6456
          %s6458 = smul.addr %s6457, 128
          %s6459 = scalar_lea.hbm %s21, %s6458
          %s6460 = sshll.u32 %s6442, 4
          %s6461 = int_to_ptr.vmem [resolvable:$true] %s6460
          %6466 = dma.vmem_to_hbm [thread:$0]  %s6461, 1024, %s6459, %s6439, 512, 512, 32
        $region140: #{tpu_custom_call.1} parent=103 // pred_fallthru
          _
        // Predicated region
        $region141: #{tpu_custom_call.1} parent=103 // pred_check
          %p6467 = pneg %p667
        $region142: #{tpu_custom_call.1} parent=103 // pred_check_branch
          %6469 = sbr.rel (%p6467) target = $region144
        $region143: #{tpu_custom_call.1} parent=103 // pred_region
          %s6470 = smul.u32 2, %s60
          %s6472 = ssub.s32 1024, 1024
          %6473 = vsyncadd %s6444, %s6472
          %s6474 = smul.addr %s6470, 4
          %s6475 = smul.addr %s59, 8
          %s6476 = sadd.s32 %s6474, %s6475
          %s6477 = smul.addr %s6476, 128
          %s6478 = scalar_lea.hbm %s22, %s6477
          %s6479 = sshll.u32 %s6447, 4
          %s6480 = int_to_ptr.vmem [resolvable:$true] %s6479
          %6485 = dma.vmem_to_hbm [thread:$0]  %s6480, 1024, %s6478, %s6444, 512, 512, 32
        $region144: #{tpu_custom_call.1} parent=103 // pred_fallthru
          _
      $region104: #{tpu_custom_call.1} parent=5 // pred_fallthru
        _
      %p6486 = scmp.le.s32.totalorder 2, %s50
      // Predicated region
      $region145: #{tpu_custom_call.1} parent=5 // pred_check
        %p6487 = pneg %p6486
      $region146: #{tpu_custom_call.1} parent=5 // pred_check_branch
        %6489 = sbr.rel (%p6487) target = $region148
      $region147: #{tpu_custom_call.1} parent=5 // pred_region
        %s6490 = ssub.s32 %s50, 2
        // Predicated region
        $region149: #{tpu_custom_call.1} parent=147 // pred_check
          %p6491 = pneg %p645
        $region150: #{tpu_custom_call.1} parent=147 // pred_check_branch
          %6493 = sbr.rel (%p6491) target = $region152
        $region151: #{tpu_custom_call.1} parent=147 // pred_region
          %s6494 = sand.u32 %s630, 1
          %s6495 = scalar_lea.sflag [#allocation4], %s6494
          %s6496 = sand.u32 %s630, 1
          %s6497 = smul.addr %s6496, 64
          %s6498 = scalar_lea.vmem [#allocation16], %s6497
          %6499 = dma.done %s6495, 1024
        $region152: #{tpu_custom_call.1} parent=147 // pred_fallthru
          _
        // Predicated region
        $region153: #{tpu_custom_call.1} parent=147 // pred_check
          %p6500 = pneg %p673
        $region154: #{tpu_custom_call.1} parent=147 // pred_check_branch
          %6502 = sbr.rel (%p6500) target = $region156
        $region155: #{tpu_custom_call.1} parent=147 // pred_region
          %s6503 = sand.u32 %s658, 1
          %s6504 = scalar_lea.sflag [#allocation18], %s6503
          %s6505 = sand.u32 %s658, 1
          %s6506 = smul.addr %s6505, 64
          %s6507 = scalar_lea.vmem [#allocation17], %s6506
          %6508 = dma.done %s6504, 1024
        $region156: #{tpu_custom_call.1} parent=147 // pred_fallthru
          _
      $region148: #{tpu_custom_call.1} parent=5 // pred_fallthru
        _
    $region6: #{tpu_custom_call.1} parent=1 // loop_footer
      %s54 = sadd.s32 1, %s50
    $region7: #{tpu_custom_call.1} parent=1 // loop_footer_branch
      %49 = sbr.rel target = $region3
    $region8: #{tpu_custom_call.1} parent=1 // loop_exit
      _
    %6509 = vsyncpa [#allocation3], 1
    %s6510 = scalar_lea.sflag [#allocation3], 1
    %6511 = vsyncpa %s6510, 1
    %6512 = vsyncpa [#allocation6], 1
    %s6513 = scalar_lea.sflag [#allocation6], 1
    %6514 = vsyncpa %s6513, 1
    %6515 = vsyncpa [#allocation9], 1
    %s6516 = scalar_lea.sflag [#allocation9], 1
    %6517 = vsyncpa %s6516, 1
    %6518 = vsyncpa [#allocation12], 1
    %s6519 = scalar_lea.sflag [#allocation12], 1
    %6520 = vsyncpa %s6519, 1
    %6521 = vsyncpa [#allocation15], 1
    %s6522 = scalar_lea.sflag [#allocation15], 1
    %6523 = vsyncpa %s6522, 1
    %6524 = vsyncpa [#allocation4], 1
    %s6525 = scalar_lea.sflag [#allocation4], 1
    %6526 = vsyncpa %s6525, 1
    %6527 = vsyncpa [#allocation18], 1
    %s6528 = scalar_lea.sflag [#allocation18], 1
    %6529 = vsyncpa %s6528, 1

</llo_original>
